<compile_context>
chip_gen: v6e
topology: v6e:2x2x1
jax: 0.10.0
libtpu: 0.0.40
codegen_flags: <defaults>
</compile_context>

<pallas_src>
import functools

import jax
import jax.numpy as jnp
from jax import lax
from jax.experimental import pallas as pl
from jax.experimental.pallas import tpu as pltpu

KS = 7          # kernel size (3 or 7); 7 -> padding 3
PAD = KS // 2


def _spatial_attention_kernel(w_ref, x_ref, o_ref,
                              sum_ref, max_ref, pad_a_ref, pad_m_ref,
                              *, h, w, inv_c):
    # w_ref   : SMEM (2*KS*KS,) f32            -- conv weight flattened (c, kh, kw)
    # x_ref   : VMEM (B, Ct, L) native dtype   -- lane-dense block, L = H*W
    # o_ref   : VMEM (B, 1, L) native dtype    -- lane-dense output block
    # sum_ref : VMEM (B, L) f32                -- running channel sum (across C axis)
    # max_ref : VMEM (B, L) f32                -- running channel max
    # pad_a/m : VMEM (B, H+2P, W+2P) f32       -- zero-padded pooled maps
    B, Ct, L = x_ref.shape
    Hp, Wp = h + 2 * PAD, w + 2 * PAD

    c = pl.program_id(1)
    last_c = pl.num_programs(1) - 1

    @pl.when(c == 0)
    def _init():
        sum_ref[...] = jnp.zeros_like(sum_ref)
        max_ref[...] = jnp.full_like(max_ref, -jnp.inf)

    # Strip-mined channel pooling: static <=8-channel chunks (fully unrolled,
    # equivalent to lax.fori_loop(..., unroll=True)) so the live values stay
    # bounded instead of materializing the whole (B, Ct, L) block at once.
    s = sum_ref[...]
    m = max_ref[...]
    ck = min(Ct, 8)
    start = 0
    while start < Ct:
        size = min(ck, Ct - start)
        xs = x_ref[:, start:start + size, :]                 # (B, size, L) native
        s = s + jnp.sum(xs, axis=1, dtype=jnp.float32)
        m = jnp.maximum(m, jnp.max(xs, axis=1).astype(jnp.float32))
        start += size

    # Only carry the accumulators if another channel step follows.
    @pl.when(c != last_c)
    def _carry():
        sum_ref[...] = s
        max_ref[...] = m

    @pl.when(c == last_c)
    def _finalize():
        avg = s * inv_c                                      # (B, L) f32
        mx = m                                               # (B, L) f32

        # Zero only the PAD-wide border strips; the interior is overwritten
        # right below (scratch persists across grid steps, so re-zero each time).
        zrow = jnp.zeros((B, PAD, Wp), jnp.float32)
        zcol = jnp.zeros((B, h, PAD), jnp.float32)
        for pref in (pad_a_ref, pad_m_ref):
            pref[:, 0:PAD, :] = zrow
            pref[:, PAD + h:Hp, :] = zrow
            pref[:, PAD:PAD + h, 0:PAD] = zcol
            pref[:, PAD:PAD + h, PAD + w:Wp] = zcol

        # Relayout the tiny pooled maps (B, L) -> (B, H, W) inside the padded
        # scratch with row-wise static-slice copies (avoids a full reshape).
        for hh in range(h):
            pad_a_ref[:, PAD + hh, PAD:PAD + w] = avg[:, hh * w:(hh + 1) * w]
            pad_m_ref[:, PAD + hh, PAD:PAD + w] = mx[:, hh * w:(hh + 1) * w]

        # 7x7 cross-correlation over the two pooled channels: every tap is a
        # plain offset slice of the padded maps (no masks, no slab scratch).
        acc = jnp.zeros((B, h, w), jnp.float32)
        for kh in range(KS):
            for kw in range(KS):
                w_avg = w_ref[0 * KS * KS + kh * KS + kw]    # scalar (SMEM)
                w_max = w_ref[1 * KS * KS + kh * KS + kw]
                acc = (acc
                       + w_avg * pad_a_ref[:, kh:kh + h, kw:kw + w]
                       + w_max * pad_m_ref[:, kh:kh + h, kw:kw + w])

        out = jax.nn.sigmoid(acc)                            # (B, H, W) f32
        # Write back row-wise into the lane-dense output block.
        for hh in range(h):
            o_ref[:, 0, hh * w:(hh + 1) * w] = out[:, hh, :].astype(o_ref.dtype)


def _rup(x, m):
    return (x + m - 1) // m * m


def _divisors_desc(n):
    return [d for d in range(n, 0, -1) if n % d == 0]


def _choose_tiling(N, C, L, Hp, Wp, itemsize):
    """Pick (batch_block, channel_block, vmem_limit_bytes), generation-aware."""
    try:
        vmem_cap = int(pltpu.get_tpu_info().vmem_capacity_bytes)
    except Exception:  # unknown / emulated target: assume the smallest (v7x)
        vmem_cap = 64 << 20
    if vmem_cap >= (100 << 20):          # v5e / v6e: 128 MiB physical VMEM
        budget, x_target = 96 << 20, 12 << 20
    else:                                # v7x: 64 MiB physical VMEM
        budget, x_target = 44 << 20, 6 << 20

    sub = max(8, 32 // itemsize)         # sublane tile multiple for this dtype
    Lp = _rup(L, 128)

    def x_bytes(b, ct):                  # one copy of the x block, (8,128)-padded
        return b * _rup(ct, sub) * Lp * itemsize

    def fixed_bytes(b):                  # everything except the x double-buffer
        out_blk = b * sub * Lp * itemsize                    # (B, 1, L) block
        accs = 2 * _rup(b, 8) * Lp * 4                       # sum + max scratch
        pads = 2 * b * _rup(Hp, 8) * _rup(Wp, 128) * 4       # padded pooled maps
        return 2 * out_blk + accs + pads

    min_steps = 2 if N >= 2 else 1       # >=2 'parallel' steps feeds both v7x cores
    # Channel-block candidates that keep the (8,128) BlockSpec rule satisfied.
    ct_cands = [d for d in _divisors_desc(C) if d == C or d % sub == 0] or [C]

    best = None                          # (key, ct, b)
    for relax in (False, True):          # second pass ignores the per-block target
        for b in _divisors_desc(N):
            if N // b < min_steps:
                continue
            for ct in ct_cands:
                xb = x_bytes(b, ct)
                if not relax and xb > x_target:
                    continue
                if fixed_bytes(b) + 2 * xb > budget:
                    continue
                key = (b * ct * L * itemsize, ct)   # useful bytes/step, prefer big Ct
                if best is None or key > best[0]:
                    best = (key, ct, b)
        if best is not None:
            break
    if best is None:                     # extreme shapes: smallest legal tiles
        b, ct = (1 if N >= 2 else N), ct_cands[-1]
    else:
        _, ct, b = best

    total = fixed_bytes(b) + 2 * x_bytes(b, ct)
    vmem_limit = int(min(vmem_cap, max(total + (4 << 20), 32 << 20)))
    return b, ct, vmem_limit


def spatial_attention(x, weight):
    """x: (N, C, H, W); weight: (1, 2, KS, KS) (PyTorch OIHW conv weight)."""
    N, C, H, W = x.shape
    assert weight.shape == (1, 2, KS, KS)
    L = H * W
    Hp, Wp = H + 2 * PAD, W + 2 * PAD

    # Lane-dense bulk I/O: free metadata reshapes for contiguous NCHW arrays.
    x_flat = x.reshape(N, C, L)
    w_flat = weight.reshape(-1).astype(jnp.float32)          # (2*KS*KS,)

    itemsize = jnp.dtype(x.dtype).itemsize
    B, Ct, vmem_limit = _choose_tiling(N, C, L, Hp, Wp, itemsize)
    nb, nc = N // B, C // Ct

    kernel = functools.partial(_spatial_attention_kernel, h=H, w=W, inv_c=1.0 / C)

    out_flat = pl.pallas_call(
        kernel,
        out_shape=jax.ShapeDtypeStruct((N, 1, L), x.dtype),
        grid=(nb, nc),                                        # C (reduction) axis last
        in_specs=[
            pl.BlockSpec(memory_space=pltpu.MemorySpace.SMEM),    # conv weights
            pl.BlockSpec((B, Ct, L), lambda b, c: (b, c, 0)),     # x block (lane-dense)
        ],
        out_specs=pl.BlockSpec((B, 1, L), lambda b, c: (b, 0, 0)),
        scratch_shapes=[
            pltpu.VMEM((B, L), jnp.float32),                  # running channel sum
            pltpu.VMEM((B, L), jnp.float32),                  # running channel max
            pltpu.VMEM((B, Hp, Wp), jnp.float32),             # padded avg map
            pltpu.VMEM((B, Hp, Wp), jnp.float32),             # padded max map
        ],
        compiler_params=pltpu.CompilerParams(
            dimension_semantics=("parallel", "arbitrary"),
            vmem_limit_bytes=vmem_limit,
        ),
    )(w_flat, x_flat)
    return out_flat.reshape(N, 1, H, W)


def spatial_attention_ref(x, weight):
    """Pure-JAX reference matching the PyTorch module."""
    avg = jnp.mean(x, axis=1, keepdims=True)
    mx = jnp.max(x, axis=1, keepdims=True)
    cat = jnp.concatenate([avg, mx], axis=1)
    out = lax.conv_general_dilated(
        cat, weight, window_strides=(1, 1), padding=[(PAD, PAD), (PAD, PAD)],
        dimension_numbers=("NCHW", "OIHW", "NCHW"))
    return jax.nn.sigmoid(out)


if __name__ == "__main__":
    key = jax.random.PRNGKey(0)
    kx, kw = jax.random.split(key)

    N, C, H, W = 2, 4, 16, 16
    x = jax.random.normal(kx, (N, C, H, W), dtype=jnp.float32)
    # Deterministic synthetic conv weight, shape (out=1, in=2, KS, KS).
    weight = 0.1 * jax.random.normal(kw, (1, 2, KS, KS), dtype=jnp.float32)

    y = spatial_attention(x, weight)
    y = jax.block_until_ready(y)

    y_ref = spatial_attention_ref(x, weight)
    assert y.shape == (N, 1, H, W)
    assert jnp.allclose(y, y_ref, atol=1e-5, rtol=1e-5), "mismatch vs reference"

    print("KERNEL_OK")
</pallas_src>

<mosaic_0001>
module attributes {stable_mosaic.version = 11 : i64} {
  func.func @_spatial_attention_kernel(%arg0: i32, %arg1: i32, %arg2: memref<98xf32, #tpu.memory_space<smem>>, %arg3: memref<1x4x256xf32, #tpu.memory_space<vmem>>, %arg4: memref<1x1x256xf32, #tpu.memory_space<vmem>>, %arg5: memref<1x256xf32, #tpu.memory_space<vmem>>, %arg6: memref<1x256xf32, #tpu.memory_space<vmem>>, %arg7: memref<1x22x22xf32, #tpu.memory_space<vmem>>, %arg8: memref<1x22x22xf32, #tpu.memory_space<vmem>>) attributes {dimension_semantics = [#tpu.dimension_semantics<parallel>, #tpu.dimension_semantics<arbitrary>], iteration_bounds = array<i64: 2, 1>, scalar_prefetch = 0 : i64, scratch_operands = 4 : i64, tpu.core_type = #tpu.core_type<tc>, window_params = [{transform_indices = @transform_0, window_bounds = array<i64: 98>}, {transform_indices = @transform_1, window_bounds = array<i64: 1, 4, 256>}, {transform_indices = @transform_2, window_bounds = array<i64: 1, 1, 256>}]} {
    %c0_i32 = arith.constant 0 : i32
    %0 = arith.cmpi eq, %arg1, %c0_i32 : i32
    %1 = arith.extui %0 : i1 to i32
    %c0_i32_0 = arith.constant 0 : i32
    %2 = arith.cmpi ne, %1, %c0_i32_0 : i32
    scf.if %2 {
      %cst_12 = arith.constant 0.000000e+00 : f32
      %16 = vector.broadcast %cst_12 : f32 to vector<1x256xf32>
      %c0_13 = arith.constant 0 : index
      %c0_14 = arith.constant 0 : index
      %17 = vector.load %arg5[%c0_13, %c0_14] : memref<1x256xf32, #tpu.memory_space<vmem>>, vector<1x256xf32>
      tpu.vector_store %arg5[%c0_13, %c0_14], %16 {strides = array<i32>} : memref<1x256xf32, #tpu.memory_space<vmem>>, vector<1x256xf32>,
      %cst_15 = arith.constant 0xFF800000 : f32
      %18 = vector.broadcast %cst_15 : f32 to vector<1x256xf32>
      %c0_16 = arith.constant 0 : index
      %c0_17 = arith.constant 0 : index
      %19 = vector.load %arg6[%c0_16, %c0_17] : memref<1x256xf32, #tpu.memory_space<vmem>>, vector<1x256xf32>
      tpu.vector_store %arg6[%c0_16, %c0_17], %18 {strides = array<i32>} : memref<1x256xf32, #tpu.memory_space<vmem>>, vector<1x256xf32>,
    } else {
    }
    %c0 = arith.constant 0 : index
    %c0_1 = arith.constant 0 : index
    %3 = vector.load %arg5[%c0, %c0_1] : memref<1x256xf32, #tpu.memory_space<vmem>>, vector<1x256xf32>
    %c0_2 = arith.constant 0 : index
    %c0_3 = arith.constant 0 : index
    %4 = vector.load %arg6[%c0_2, %c0_3] : memref<1x256xf32, #tpu.memory_space<vmem>>, vector<1x256xf32>
    %c0_4 = arith.constant 0 : index
    %c0_5 = arith.constant 0 : index
    %c0_6 = arith.constant 0 : index
    %5 = vector.load %arg3[%c0_4, %c0_5, %c0_6] : memref<1x4x256xf32, #tpu.memory_space<vmem>>, vector<1x4x256xf32>
    %cst = arith.constant dense<0.000000e+00> : vector<1x256xf32>
    %6 = vector.multi_reduction <add>, %5, %cst [1] : vector<1x4x256xf32> to vector<1x256xf32>
    %7 = arith.addf %3, %6 : vector<1x256xf32>
    %cst_7 = arith.constant dense<0xFF800000> : vector<1x256xf32>
    %8 = vector.multi_reduction <maximumf>, %5, %cst_7 [1] : vector<1x4x256xf32> to vector<1x256xf32>
    %9 = arith.maximumf %4, %8 : vector<1x256xf32>
    %c0_i32_8 = arith.constant 0 : i32
    %10 = arith.cmpi ne, %arg1, %c0_i32_8 : i32
    %11 = arith.extui %10 : i1 to i32
    %c0_i32_9 = arith.constant 0 : i32
    %12 = arith.cmpi ne, %11, %c0_i32_9 : i32
    scf.if %12 {
      %c0_12 = arith.constant 0 : index
      %c0_13 = arith.constant 0 : index
      %16 = vector.load %arg5[%c0_12, %c0_13] : memref<1x256xf32, #tpu.memory_space<vmem>>, vector<1x256xf32>
      tpu.vector_store %arg5[%c0_12, %c0_13], %7 {strides = array<i32>} : memref<1x256xf32, #tpu.memory_space<vmem>>, vector<1x256xf32>,
      %c0_14 = arith.constant 0 : index
      %c0_15 = arith.constant 0 : index
      %17 = vector.load %arg6[%c0_14, %c0_15] : memref<1x256xf32, #tpu.memory_space<vmem>>, vector<1x256xf32>
      tpu.vector_store %arg6[%c0_14, %c0_15], %9 {strides = array<i32>} : memref<1x256xf32, #tpu.memory_space<vmem>>, vector<1x256xf32>,
    } else {
    }
    %c0_i32_10 = arith.constant 0 : i32
    %13 = arith.cmpi eq, %arg1, %c0_i32_10 : i32
    %14 = arith.extui %13 : i1 to i32
    %c0_i32_11 = arith.constant 0 : i32
    %15 = arith.cmpi ne, %14, %c0_i32_11 : i32
    scf.if %15 {
      %cst_12 = arith.constant 2.500000e-01 : f32
      %16 = vector.broadcast %cst_12 : f32 to vector<1x256xf32>
      %17 = arith.mulf %7, %16 : vector<1x256xf32>
      %cst_13 = arith.constant 0.000000e+00 : f32
      %18 = vector.broadcast %cst_13 : f32 to vector<1x3x22xf32>
      %cst_14 = arith.constant 0.000000e+00 : f32
      %19 = vector.broadcast %cst_14 : f32 to vector<1x16x3xf32>
      %c0_15 = arith.constant 0 : index
      %c0_16 = arith.constant 0 : index
      %c0_17 = arith.constant 0 : index
      %20 = vector.load %arg7[%c0_15, %c0_16, %c0_17] : memref<1x22x22xf32, #tpu.memory_space<vmem>>, vector<1x3x22xf32>
      tpu.vector_store %arg7[%c0_15, %c0_16, %c0_17], %18 {strides = array<i32>} : memref<1x22x22xf32, #tpu.memory_space<vmem>>, vector<1x3x22xf32>,
      %c0_18 = arith.constant 0 : index
      %c19 = arith.constant 19 : index
      %c0_19 = arith.constant 0 : index
      %21 = vector.load %arg7[%c0_18, %c19, %c0_19] : memref<1x22x22xf32, #tpu.memory_space<vmem>>, vector<1x3x22xf32>
      tpu.vector_store %arg7[%c0_18, %c19, %c0_19], %18 {strides = array<i32>} : memref<1x22x22xf32, #tpu.memory_space<vmem>>, vector<1x3x22xf32>,
      %c0_20 = arith.constant 0 : index
      %c3 = arith.constant 3 : index
      %c0_21 = arith.constant 0 : index
      %22 = vector.load %arg7[%c0_20, %c3, %c0_21] : memref<1x22x22xf32, #tpu.memory_space<vmem>>, vector<1x16x3xf32>
      tpu.vector_store %arg7[%c0_20, %c3, %c0_21], %19 {strides = array<i32>} : memref<1x22x22xf32, #tpu.memory_space<vmem>>, vector<1x16x3xf32>,
      %c0_22 = arith.constant 0 : index
      %c3_23 = arith.constant 3 : index
      %c19_24 = arith.constant 19 : index
      %23 = vector.load %arg7[%c0_22, %c3_23, %c19_24] : memref<1x22x22xf32, #tpu.memory_space<vmem>>, vector<1x16x3xf32>
      tpu.vector_store %arg7[%c0_22, %c3_23, %c19_24], %19 {strides = array<i32>} : memref<1x22x22xf32, #tpu.memory_space<vmem>>, vector<1x16x3xf32>,
      %c0_25 = arith.constant 0 : index
      %c0_26 = arith.constant 0 : index
      %c0_27 = arith.constant 0 : index
      %24 = vector.load %arg8[%c0_25, %c0_26, %c0_27] : memref<1x22x22xf32, #tpu.memory_space<vmem>>, vector<1x3x22xf32>
      tpu.vector_store %arg8[%c0_25, %c0_26, %c0_27], %18 {strides = array<i32>} : memref<1x22x22xf32, #tpu.memory_space<vmem>>, vector<1x3x22xf32>,
      %c0_28 = arith.constant 0 : index
      %c19_29 = arith.constant 19 : index
      %c0_30 = arith.constant 0 : index
      %25 = vector.load %arg8[%c0_28, %c19_29, %c0_30] : memref<1x22x22xf32, #tpu.memory_space<vmem>>, vector<1x3x22xf32>
      tpu.vector_store %arg8[%c0_28, %c19_29, %c0_30], %18 {strides = array<i32>} : memref<1x22x22xf32, #tpu.memory_space<vmem>>, vector<1x3x22xf32>,
      %c0_31 = arith.constant 0 : index
      %c3_32 = arith.constant 3 : index
      %c0_33 = arith.constant 0 : index
      %26 = vector.load %arg8[%c0_31, %c3_32, %c0_33] : memref<1x22x22xf32, #tpu.memory_space<vmem>>, vector<1x16x3xf32>
      tpu.vector_store %arg8[%c0_31, %c3_32, %c0_33], %19 {strides = array<i32>} : memref<1x22x22xf32, #tpu.memory_space<vmem>>, vector<1x16x3xf32>,
      %c0_34 = arith.constant 0 : index
      %c3_35 = arith.constant 3 : index
      %c19_36 = arith.constant 19 : index
      %27 = vector.load %arg8[%c0_34, %c3_35, %c19_36] : memref<1x22x22xf32, #tpu.memory_space<vmem>>, vector<1x16x3xf32>
      tpu.vector_store %arg8[%c0_34, %c3_35, %c19_36], %19 {strides = array<i32>} : memref<1x22x22xf32, #tpu.memory_space<vmem>>, vector<1x16x3xf32>,
      %28 = vector.extract_strided_slice %17 {offsets = [0, 0], sizes = [1, 16], strides = [1, 1]} : vector<1x256xf32> to vector<1x16xf32>
      %c0_37 = arith.constant 0 : index
      %c3_38 = arith.constant 3 : index
      %c3_39 = arith.constant 3 : index
      %29 = vector.load %arg7[%c0_37, %c3_38, %c3_39] : memref<1x22x22xf32, #tpu.memory_space<vmem>>, vector<1x1x16xf32>
      %30 = vector.shape_cast %29 : vector<1x1x16xf32> to vector<1x16xf32>
      %31 = vector.shape_cast %28 : vector<1x16xf32> to vector<1x1x16xf32>
      tpu.vector_store %arg7[%c0_37, %c3_38, %c3_39], %31 {strides = array<i32>} : memref<1x22x22xf32, #tpu.memory_space<vmem>>, vector<1x1x16xf32>,
      %32 = vector.extract_strided_slice %9 {offsets = [0, 0], sizes = [1, 16], strides = [1, 1]} : vector<1x256xf32> to vector<1x16xf32>
      %c0_40 = arith.constant 0 : index
      %c3_41 = arith.constant 3 : index
      %c3_42 = arith.constant 3 : index
      %33 = vector.load %arg8[%c0_40, %c3_41, %c3_42] : memref<1x22x22xf32, #tpu.memory_space<vmem>>, vector<1x1x16xf32>
      %34 = vector.shape_cast %33 : vector<1x1x16xf32> to vector<1x16xf32>
      %35 = vector.shape_cast %32 : vector<1x16xf32> to vector<1x1x16xf32>
      tpu.vector_store %arg8[%c0_40, %c3_41, %c3_42], %35 {strides = array<i32>} : memref<1x22x22xf32, #tpu.memory_space<vmem>>, vector<1x1x16xf32>,
      %36 = vector.extract_strided_slice %17 {offsets = [0, 16], sizes = [1, 16], strides = [1, 1]} : vector<1x256xf32> to vector<1x16xf32>
      %c0_43 = arith.constant 0 : index
      %c4 = arith.constant 4 : index
      %c3_44 = arith.constant 3 : index
      %37 = vector.load %arg7[%c0_43, %c4, %c3_44] : memref<1x22x22xf32, #tpu.memory_space<vmem>>, vector<1x1x16xf32>
      %38 = vector.shape_cast %37 : vector<1x1x16xf32> to vector<1x16xf32>
      %39 = vector.shape_cast %36 : vector<1x16xf32> to vector<1x1x16xf32>
      tpu.vector_store %arg7[%c0_43, %c4, %c3_44], %39 {strides = array<i32>} : memref<1x22x22xf32, #tpu.memory_space<vmem>>, vector<1x1x16xf32>,
      %40 = vector.extract_strided_slice %9 {offsets = [0, 16], sizes = [1, 16], strides = [1, 1]} : vector<1x256xf32> to vector<1x16xf32>
      %c0_45 = arith.constant 0 : index
      %c4_46 = arith.constant 4 : index
      %c3_47 = arith.constant 3 : index
      %41 = vector.load %arg8[%c0_45, %c4_46, %c3_47] : memref<1x22x22xf32, #tpu.memory_space<vmem>>, vector<1x1x16xf32>
      %42 = vector.shape_cast %41 : vector<1x1x16xf32> to vector<1x16xf32>
      %43 = vector.shape_cast %40 : vector<1x16xf32> to vector<1x1x16xf32>
      tpu.vector_store %arg8[%c0_45, %c4_46, %c3_47], %43 {strides = array<i32>} : memref<1x22x22xf32, #tpu.memory_space<vmem>>, vector<1x1x16xf32>,
      %44 = vector.extract_strided_slice %17 {offsets = [0, 32], sizes = [1, 16], strides = [1, 1]} : vector<1x256xf32> to vector<1x16xf32>
      %c0_48 = arith.constant 0 : index
      %c5 = arith.constant 5 : index
      %c3_49 = arith.constant 3 : index
      %45 = vector.load %arg7[%c0_48, %c5, %c3_49] : memref<1x22x22xf32, #tpu.memory_space<vmem>>, vector<1x1x16xf32>
      %46 = vector.shape_cast %45 : vector<1x1x16xf32> to vector<1x16xf32>
      %47 = vector.shape_cast %44 : vector<1x16xf32> to vector<1x1x16xf32>
      tpu.vector_store %arg7[%c0_48, %c5, %c3_49], %47 {strides = array<i32>} : memref<1x22x22xf32, #tpu.memory_space<vmem>>, vector<1x1x16xf32>,
      %48 = vector.extract_strided_slice %9 {offsets = [0, 32], sizes = [1, 16], strides = [1, 1]} : vector<1x256xf32> to vector<1x16xf32>
      %c0_50 = arith.constant 0 : index
      %c5_51 = arith.constant 5 : index
      %c3_52 = arith.constant 3 : index
      %49 = vector.load %arg8[%c0_50, %c5_51, %c3_52] : memref<1x22x22xf32, #tpu.memory_space<vmem>>, vector<1x1x16xf32>
      %50 = vector.shape_cast %49 : vector<1x1x16xf32> to vector<1x16xf32>
      %51 = vector.shape_cast %48 : vector<1x16xf32> to vector<1x1x16xf32>
      tpu.vector_store %arg8[%c0_50, %c5_51, %c3_52], %51 {strides = array<i32>} : memref<1x22x22xf32, #tpu.memory_space<vmem>>, vector<1x1x16xf32>,
      %52 = vector.extract_strided_slice %17 {offsets = [0, 48], sizes = [1, 16], strides = [1, 1]} : vector<1x256xf32> to vector<1x16xf32>
      %c0_53 = arith.constant 0 : index
      %c6 = arith.constant 6 : index
      %c3_54 = arith.constant 3 : index
      %53 = vector.load %arg7[%c0_53, %c6, %c3_54] : memref<1x22x22xf32, #tpu.memory_space<vmem>>, vector<1x1x16xf32>
      %54 = vector.shape_cast %53 : vector<1x1x16xf32> to vector<1x16xf32>
      %55 = vector.shape_cast %52 : vector<1x16xf32> to vector<1x1x16xf32>
      tpu.vector_store %arg7[%c0_53, %c6, %c3_54], %55 {strides = array<i32>} : memref<1x22x22xf32, #tpu.memory_space<vmem>>, vector<1x1x16xf32>,
      %56 = vector.extract_strided_slice %9 {offsets = [0, 48], sizes = [1, 16], strides = [1, 1]} : vector<1x256xf32> to vector<1x16xf32>
      %c0_55 = arith.constant 0 : index
      %c6_56 = arith.constant 6 : index
      %c3_57 = arith.constant 3 : index
      %57 = vector.load %arg8[%c0_55, %c6_56, %c3_57] : memref<1x22x22xf32, #tpu.memory_space<vmem>>, vector<1x1x16xf32>
      %58 = vector.shape_cast %57 : vector<1x1x16xf32> to vector<1x16xf32>
      %59 = vector.shape_cast %56 : vector<1x16xf32> to vector<1x1x16xf32>
      tpu.vector_store %arg8[%c0_55, %c6_56, %c3_57], %59 {strides = array<i32>} : memref<1x22x22xf32, #tpu.memory_space<vmem>>, vector<1x1x16xf32>,
      %60 = vector.extract_strided_slice %17 {offsets = [0, 64], sizes = [1, 16], strides = [1, 1]} : vector<1x256xf32> to vector<1x16xf32>
      %c0_58 = arith.constant 0 : index
      %c7 = arith.constant 7 : index
      %c3_59 = arith.constant 3 : index
      %61 = vector.load %arg7[%c0_58, %c7, %c3_59] : memref<1x22x22xf32, #tpu.memory_space<vmem>>, vector<1x1x16xf32>
      %62 = vector.shape_cast %61 : vector<1x1x16xf32> to vector<1x16xf32>
      %63 = vector.shape_cast %60 : vector<1x16xf32> to vector<1x1x16xf32>
      tpu.vector_store %arg7[%c0_58, %c7, %c3_59], %63 {strides = array<i32>} : memref<1x22x22xf32, #tpu.memory_space<vmem>>, vector<1x1x16xf32>,
      %64 = vector.extract_strided_slice %9 {offsets = [0, 64], sizes = [1, 16], strides = [1, 1]} : vector<1x256xf32> to vector<1x16xf32>
      %c0_60 = arith.constant 0 : index
      %c7_61 = arith.constant 7 : index
      %c3_62 = arith.constant 3 : index
      %65 = vector.load %arg8[%c0_60, %c7_61, %c3_62] : memref<1x22x22xf32, #tpu.memory_space<vmem>>, vector<1x1x16xf32>
      %66 = vector.shape_cast %65 : vector<1x1x16xf32> to vector<1x16xf32>
      %67 = vector.shape_cast %64 : vector<1x16xf32> to vector<1x1x16xf32>
      tpu.vector_store %arg8[%c0_60, %c7_61, %c3_62], %67 {strides = array<i32>} : memref<1x22x22xf32, #tpu.memory_space<vmem>>, vector<1x1x16xf32>,
      %68 = vector.extract_strided_slice %17 {offsets = [0, 80], sizes = [1, 16], strides = [1, 1]} : vector<1x256xf32> to vector<1x16xf32>
      %c0_63 = arith.constant 0 : index
      %c8 = arith.constant 8 : index
      %c3_64 = arith.constant 3 : index
      %69 = vector.load %arg7[%c0_63, %c8, %c3_64] : memref<1x22x22xf32, #tpu.memory_space<vmem>>, vector<1x1x16xf32>
      %70 = vector.shape_cast %69 : vector<1x1x16xf32> to vector<1x16xf32>
      %71 = vector.shape_cast %68 : vector<1x16xf32> to vector<1x1x16xf32>
      tpu.vector_store %arg7[%c0_63, %c8, %c3_64], %71 {strides = array<i32>} : memref<1x22x22xf32, #tpu.memory_space<vmem>>, vector<1x1x16xf32>,
      %72 = vector.extract_strided_slice %9 {offsets = [0, 80], sizes = [1, 16], strides = [1, 1]} : vector<1x256xf32> to vector<1x16xf32>
      %c0_65 = arith.constant 0 : index
      %c8_66 = arith.constant 8 : index
      %c3_67 = arith.constant 3 : index
      %73 = vector.load %arg8[%c0_65, %c8_66, %c3_67] : memref<1x22x22xf32, #tpu.memory_space<vmem>>, vector<1x1x16xf32>
      %74 = vector.shape_cast %73 : vector<1x1x16xf32> to vector<1x16xf32>
      %75 = vector.shape_cast %72 : vector<1x16xf32> to vector<1x1x16xf32>
      tpu.vector_store %arg8[%c0_65, %c8_66, %c3_67], %75 {strides = array<i32>} : memref<1x22x22xf32, #tpu.memory_space<vmem>>, vector<1x1x16xf32>,
      %76 = vector.extract_strided_slice %17 {offsets = [0, 96], sizes = [1, 16], strides = [1, 1]} : vector<1x256xf32> to vector<1x16xf32>
      %c0_68 = arith.constant 0 : index
      %c9 = arith.constant 9 : index
      %c3_69 = arith.constant 3 : index
      %77 = vector.load %arg7[%c0_68, %c9, %c3_69] : memref<1x22x22xf32, #tpu.memory_space<vmem>>, vector<1x1x16xf32>
      %78 = vector.shape_cast %77 : vector<1x1x16xf32> to vector<1x16xf32>
      %79 = vector.shape_cast %76 : vector<1x16xf32> to vector<1x1x16xf32>
      tpu.vector_store %arg7[%c0_68, %c9, %c3_69], %79 {strides = array<i32>} : memref<1x22x22xf32, #tpu.memory_space<vmem>>, vector<1x1x16xf32>,
      %80 = vector.extract_strided_slice %9 {offsets = [0, 96], sizes = [1, 16], strides = [1, 1]} : vector<1x256xf32> to vector<1x16xf32>
      %c0_70 = arith.constant 0 : index
      %c9_71 = arith.constant 9 : index
      %c3_72 = arith.constant 3 : index
      %81 = vector.load %arg8[%c0_70, %c9_71, %c3_72] : memref<1x22x22xf32, #tpu.memory_space<vmem>>, vector<1x1x16xf32>
      %82 = vector.shape_cast %81 : vector<1x1x16xf32> to vector<1x16xf32>
      %83 = vector.shape_cast %80 : vector<1x16xf32> to vector<1x1x16xf32>
      tpu.vector_store %arg8[%c0_70, %c9_71, %c3_72], %83 {strides = array<i32>} : memref<1x22x22xf32, #tpu.memory_space<vmem>>, vector<1x1x16xf32>,
      %84 = vector.extract_strided_slice %17 {offsets = [0, 112], sizes = [1, 16], strides = [1, 1]} : vector<1x256xf32> to vector<1x16xf32>
      %c0_73 = arith.constant 0 : index
      %c10 = arith.constant 10 : index
      %c3_74 = arith.constant 3 : index
      %85 = vector.load %arg7[%c0_73, %c10, %c3_74] : memref<1x22x22xf32, #tpu.memory_space<vmem>>, vector<1x1x16xf32>
      %86 = vector.shape_cast %85 : vector<1x1x16xf32> to vector<1x16xf32>
      %87 = vector.shape_cast %84 : vector<1x16xf32> to vector<1x1x16xf32>
      tpu.vector_store %arg7[%c0_73, %c10, %c3_74], %87 {strides = array<i32>} : memref<1x22x22xf32, #tpu.memory_space<vmem>>, vector<1x1x16xf32>,
      %88 = vector.extract_strided_slice %9 {offsets = [0, 112], sizes = [1, 16], strides = [1, 1]} : vector<1x256xf32> to vector<1x16xf32>
      %c0_75 = arith.constant 0 : index
      %c10_76 = arith.constant 10 : index
      %c3_77 = arith.constant 3 : index
      %89 = vector.load %arg8[%c0_75, %c10_76, %c3_77] : memref<1x22x22xf32, #tpu.memory_space<vmem>>, vector<1x1x16xf32>
      %90 = vector.shape_cast %89 : vector<1x1x16xf32> to vector<1x16xf32>
      %91 = vector.shape_cast %88 : vector<1x16xf32> to vector<1x1x16xf32>
      tpu.vector_store %arg8[%c0_75, %c10_76, %c3_77], %91 {strides = array<i32>} : memref<1x22x22xf32, #tpu.memory_space<vmem>>, vector<1x1x16xf32>,
      %92 = vector.extract_strided_slice %17 {offsets = [0, 128], sizes = [1, 16], strides = [1, 1]} : vector<1x256xf32> to vector<1x16xf32>
      %c0_78 = arith.constant 0 : index
      %c11 = arith.constant 11 : index
      %c3_79 = arith.constant 3 : index
      %93 = vector.load %arg7[%c0_78, %c11, %c3_79] : memref<1x22x22xf32, #tpu.memory_space<vmem>>, vector<1x1x16xf32>
      %94 = vector.shape_cast %93 : vector<1x1x16xf32> to vector<1x16xf32>
      %95 = vector.shape_cast %92 : vector<1x16xf32> to vector<1x1x16xf32>
      tpu.vector_store %arg7[%c0_78, %c11, %c3_79], %95 {strides = array<i32>} : memref<1x22x22xf32, #tpu.memory_space<vmem>>, vector<1x1x16xf32>,
      %96 = vector.extract_strided_slice %9 {offsets = [0, 128], sizes = [1, 16], strides = [1, 1]} : vector<1x256xf32> to vector<1x16xf32>
      %c0_80 = arith.constant 0 : index
      %c11_81 = arith.constant 11 : index
      %c3_82 = arith.constant 3 : index
      %97 = vector.load %arg8[%c0_80, %c11_81, %c3_82] : memref<1x22x22xf32, #tpu.memory_space<vmem>>, vector<1x1x16xf32>
      %98 = vector.shape_cast %97 : vector<1x1x16xf32> to vector<1x16xf32>
      %99 = vector.shape_cast %96 : vector<1x16xf32> to vector<1x1x16xf32>
      tpu.vector_store %arg8[%c0_80, %c11_81, %c3_82], %99 {strides = array<i32>} : memref<1x22x22xf32, #tpu.memory_space<vmem>>, vector<1x1x16xf32>,
      %100 = vector.extract_strided_slice %17 {offsets = [0, 144], sizes = [1, 16], strides = [1, 1]} : vector<1x256xf32> to vector<1x16xf32>
      %c0_83 = arith.constant 0 : index
      %c12 = arith.constant 12 : index
      %c3_84 = arith.constant 3 : index
      %101 = vector.load %arg7[%c0_83, %c12, %c3_84] : memref<1x22x22xf32, #tpu.memory_space<vmem>>, vector<1x1x16xf32>
      %102 = vector.shape_cast %101 : vector<1x1x16xf32> to vector<1x16xf32>
      %103 = vector.shape_cast %100 : vector<1x16xf32> to vector<1x1x16xf32>
      tpu.vector_store %arg7[%c0_83, %c12, %c3_84], %103 {strides = array<i32>} : memref<1x22x22xf32, #tpu.memory_space<vmem>>, vector<1x1x16xf32>,
      %104 = vector.extract_strided_slice %9 {offsets = [0, 144], sizes = [1, 16], strides = [1, 1]} : vector<1x256xf32> to vector<1x16xf32>
      %c0_85 = arith.constant 0 : index
      %c12_86 = arith.constant 12 : index
      %c3_87 = arith.constant 3 : index
      %105 = vector.load %arg8[%c0_85, %c12_86, %c3_87] : memref<1x22x22xf32, #tpu.memory_space<vmem>>, vector<1x1x16xf32>
      %106 = vector.shape_cast %105 : vector<1x1x16xf32> to vector<1x16xf32>
      %107 = vector.shape_cast %104 : vector<1x16xf32> to vector<1x1x16xf32>
      tpu.vector_store %arg8[%c0_85, %c12_86, %c3_87], %107 {strides = array<i32>} : memref<1x22x22xf32, #tpu.memory_space<vmem>>, vector<1x1x16xf32>,
      %108 = vector.extract_strided_slice %17 {offsets = [0, 160], sizes = [1, 16], strides = [1, 1]} : vector<1x256xf32> to vector<1x16xf32>
      %c0_88 = arith.constant 0 : index
      %c13 = arith.constant 13 : index
      %c3_89 = arith.constant 3 : index
      %109 = vector.load %arg7[%c0_88, %c13, %c3_89] : memref<1x22x22xf32, #tpu.memory_space<vmem>>, vector<1x1x16xf32>
      %110 = vector.shape_cast %109 : vector<1x1x16xf32> to vector<1x16xf32>
      %111 = vector.shape_cast %108 : vector<1x16xf32> to vector<1x1x16xf32>
      tpu.vector_store %arg7[%c0_88, %c13, %c3_89], %111 {strides = array<i32>} : memref<1x22x22xf32, #tpu.memory_space<vmem>>, vector<1x1x16xf32>,
      %112 = vector.extract_strided_slice %9 {offsets = [0, 160], sizes = [1, 16], strides = [1, 1]} : vector<1x256xf32> to vector<1x16xf32>
      %c0_90 = arith.constant 0 : index
      %c13_91 = arith.constant 13 : index
      %c3_92 = arith.constant 3 : index
      %113 = vector.load %arg8[%c0_90, %c13_91, %c3_92] : memref<1x22x22xf32, #tpu.memory_space<vmem>>, vector<1x1x16xf32>
      %114 = vector.shape_cast %113 : vector<1x1x16xf32> to vector<1x16xf32>
      %115 = vector.shape_cast %112 : vector<1x16xf32> to vector<1x1x16xf32>
      tpu.vector_store %arg8[%c0_90, %c13_91, %c3_92], %115 {strides = array<i32>} : memref<1x22x22xf32, #tpu.memory_space<vmem>>, vector<1x1x16xf32>,
      %116 = vector.extract_strided_slice %17 {offsets = [0, 176], sizes = [1, 16], strides = [1, 1]} : vector<1x256xf32> to vector<1x16xf32>
      %c0_93 = arith.constant 0 : index
      %c14 = arith.constant 14 : index
      %c3_94 = arith.constant 3 : index
      %117 = vector.load %arg7[%c0_93, %c14, %c3_94] : memref<1x22x22xf32, #tpu.memory_space<vmem>>, vector<1x1x16xf32>
      %118 = vector.shape_cast %117 : vector<1x1x16xf32> to vector<1x16xf32>
      %119 = vector.shape_cast %116 : vector<1x16xf32> to vector<1x1x16xf32>
      tpu.vector_store %arg7[%c0_93, %c14, %c3_94], %119 {strides = array<i32>} : memref<1x22x22xf32, #tpu.memory_space<vmem>>, vector<1x1x16xf32>,
      %120 = vector.extract_strided_slice %9 {offsets = [0, 176], sizes = [1, 16], strides = [1, 1]} : vector<1x256xf32> to vector<1x16xf32>
      %c0_95 = arith.constant 0 : index
      %c14_96 = arith.constant 14 : index
      %c3_97 = arith.constant 3 : index
      %121 = vector.load %arg8[%c0_95, %c14_96, %c3_97] : memref<1x22x22xf32, #tpu.memory_space<vmem>>, vector<1x1x16xf32>
      %122 = vector.shape_cast %121 : vector<1x1x16xf32> to vector<1x16xf32>
      %123 = vector.shape_cast %120 : vector<1x16xf32> to vector<1x1x16xf32>
      tpu.vector_store %arg8[%c0_95, %c14_96, %c3_97], %123 {strides = array<i32>} : memref<1x22x22xf32, #tpu.memory_space<vmem>>, vector<1x1x16xf32>,
      %124 = vector.extract_strided_slice %17 {offsets = [0, 192], sizes = [1, 16], strides = [1, 1]} : vector<1x256xf32> to vector<1x16xf32>
      %c0_98 = arith.constant 0 : index
      %c15 = arith.constant 15 : index
      %c3_99 = arith.constant 3 : index
      %125 = vector.load %arg7[%c0_98, %c15, %c3_99] : memref<1x22x22xf32, #tpu.memory_space<vmem>>, vector<1x1x16xf32>
      %126 = vector.shape_cast %125 : vector<1x1x16xf32> to vector<1x16xf32>
      %127 = vector.shape_cast %124 : vector<1x16xf32> to vector<1x1x16xf32>
      tpu.vector_store %arg7[%c0_98, %c15, %c3_99], %127 {strides = array<i32>} : memref<1x22x22xf32, #tpu.memory_space<vmem>>, vector<1x1x16xf32>,
      %128 = vector.extract_strided_slice %9 {offsets = [0, 192], sizes = [1, 16], strides = [1, 1]} : vector<1x256xf32> to vector<1x16xf32>
      %c0_100 = arith.constant 0 : index
      %c15_101 = arith.constant 15 : index
      %c3_102 = arith.constant 3 : index
      %129 = vector.load %arg8[%c0_100, %c15_101, %c3_102] : memref<1x22x22xf32, #tpu.memory_space<vmem>>, vector<1x1x16xf32>
      %130 = vector.shape_cast %129 : vector<1x1x16xf32> to vector<1x16xf32>
      %131 = vector.shape_cast %128 : vector<1x16xf32> to vector<1x1x16xf32>
      tpu.vector_store %arg8[%c0_100, %c15_101, %c3_102], %131 {strides = array<i32>} : memref<1x22x22xf32, #tpu.memory_space<vmem>>, vector<1x1x16xf32>,
      %132 = vector.extract_strided_slice %17 {offsets = [0, 208], sizes = [1, 16], strides = [1, 1]} : vector<1x256xf32> to vector<1x16xf32>
      %c0_103 = arith.constant 0 : index
      %c16 = arith.constant 16 : index
      %c3_104 = arith.constant 3 : index
      %133 = vector.load %arg7[%c0_103, %c16, %c3_104] : memref<1x22x22xf32, #tpu.memory_space<vmem>>, vector<1x1x16xf32>
      %134 = vector.shape_cast %133 : vector<1x1x16xf32> to vector<1x16xf32>
      %135 = vector.shape_cast %132 : vector<1x16xf32> to vector<1x1x16xf32>
      tpu.vector_store %arg7[%c0_103, %c16, %c3_104], %135 {strides = array<i32>} : memref<1x22x22xf32, #tpu.memory_space<vmem>>, vector<1x1x16xf32>,
      %136 = vector.extract_strided_slice %9 {offsets = [0, 208], sizes = [1, 16], strides = [1, 1]} : vector<1x256xf32> to vector<1x16xf32>
      %c0_105 = arith.constant 0 : index
      %c16_106 = arith.constant 16 : index
      %c3_107 = arith.constant 3 : index
      %137 = vector.load %arg8[%c0_105, %c16_106, %c3_107] : memref<1x22x22xf32, #tpu.memory_space<vmem>>, vector<1x1x16xf32>
      %138 = vector.shape_cast %137 : vector<1x1x16xf32> to vector<1x16xf32>
      %139 = vector.shape_cast %136 : vector<1x16xf32> to vector<1x1x16xf32>
      tpu.vector_store %arg8[%c0_105, %c16_106, %c3_107], %139 {strides = array<i32>} : memref<1x22x22xf32, #tpu.memory_space<vmem>>, vector<1x1x16xf32>,
      %140 = vector.extract_strided_slice %17 {offsets = [0, 224], sizes = [1, 16], strides = [1, 1]} : vector<1x256xf32> to vector<1x16xf32>
      %c0_108 = arith.constant 0 : index
      %c17 = arith.constant 17 : index
      %c3_109 = arith.constant 3 : index
      %141 = vector.load %arg7[%c0_108, %c17, %c3_109] : memref<1x22x22xf32, #tpu.memory_space<vmem>>, vector<1x1x16xf32>
      %142 = vector.shape_cast %141 : vector<1x1x16xf32> to vector<1x16xf32>
      %143 = vector.shape_cast %140 : vector<1x16xf32> to vector<1x1x16xf32>
      tpu.vector_store %arg7[%c0_108, %c17, %c3_109], %143 {strides = array<i32>} : memref<1x22x22xf32, #tpu.memory_space<vmem>>, vector<1x1x16xf32>,
      %144 = vector.extract_strided_slice %9 {offsets = [0, 224], sizes = [1, 16], strides = [1, 1]} : vector<1x256xf32> to vector<1x16xf32>
      %c0_110 = arith.constant 0 : index
      %c17_111 = arith.constant 17 : index
      %c3_112 = arith.constant 3 : index
      %145 = vector.load %arg8[%c0_110, %c17_111, %c3_112] : memref<1x22x22xf32, #tpu.memory_space<vmem>>, vector<1x1x16xf32>
      %146 = vector.shape_cast %145 : vector<1x1x16xf32> to vector<1x16xf32>
      %147 = vector.shape_cast %144 : vector<1x16xf32> to vector<1x1x16xf32>
      tpu.vector_store %arg8[%c0_110, %c17_111, %c3_112], %147 {strides = array<i32>} : memref<1x22x22xf32, #tpu.memory_space<vmem>>, vector<1x1x16xf32>,
      %148 = vector.extract_strided_slice %17 {offsets = [0, 240], sizes = [1, 16], strides = [1, 1]} : vector<1x256xf32> to vector<1x16xf32>
      %c0_113 = arith.constant 0 : index
      %c18 = arith.constant 18 : index
      %c3_114 = arith.constant 3 : index
      %149 = vector.load %arg7[%c0_113, %c18, %c3_114] : memref<1x22x22xf32, #tpu.memory_space<vmem>>, vector<1x1x16xf32>
      %150 = vector.shape_cast %149 : vector<1x1x16xf32> to vector<1x16xf32>
      %151 = vector.shape_cast %148 : vector<1x16xf32> to vector<1x1x16xf32>
      tpu.vector_store %arg7[%c0_113, %c18, %c3_114], %151 {strides = array<i32>} : memref<1x22x22xf32, #tpu.memory_space<vmem>>, vector<1x1x16xf32>,
      %152 = vector.extract_strided_slice %9 {offsets = [0, 240], sizes = [1, 16], strides = [1, 1]} : vector<1x256xf32> to vector<1x16xf32>
      %c0_115 = arith.constant 0 : index
      %c18_116 = arith.constant 18 : index
      %c3_117 = arith.constant 3 : index
      %153 = vector.load %arg8[%c0_115, %c18_116, %c3_117] : memref<1x22x22xf32, #tpu.memory_space<vmem>>, vector<1x1x16xf32>
      %154 = vector.shape_cast %153 : vector<1x1x16xf32> to vector<1x16xf32>
      %155 = vector.shape_cast %152 : vector<1x16xf32> to vector<1x1x16xf32>
      tpu.vector_store %arg8[%c0_115, %c18_116, %c3_117], %155 {strides = array<i32>} : memref<1x22x22xf32, #tpu.memory_space<vmem>>, vector<1x1x16xf32>,
      %cst_118 = arith.constant 0.000000e+00 : f32
      %156 = vector.broadcast %cst_118 : f32 to vector<1x16x16xf32>
      %c0_119 = arith.constant 0 : index
      %157 = memref.load %arg2[%c0_119] : memref<98xf32, #tpu.memory_space<smem>>
      %c49 = arith.constant 49 : index
      %158 = memref.load %arg2[%c49] : memref<98xf32, #tpu.memory_space<smem>>
      %c0_120 = arith.constant 0 : index
      %c0_121 = arith.constant 0 : index
      %c0_122 = arith.constant 0 : index
      %159 = vector.load %arg7[%c0_120, %c0_121, %c0_122] : memref<1x22x22xf32, #tpu.memory_space<vmem>>, vector<1x16x16xf32>
      %160 = vector.broadcast %157 : f32 to vector<1x16x16xf32>
      %161 = arith.mulf %160, %159 : vector<1x16x16xf32>
      %162 = arith.addf %156, %161 : vector<1x16x16xf32>
      %c0_123 = arith.constant 0 : index
      %c0_124 = arith.constant 0 : index
      %c0_125 = arith.constant 0 : index
      %163 = vector.load %arg8[%c0_123, %c0_124, %c0_125] : memref<1x22x22xf32, #tpu.memory_space<vmem>>, vector<1x16x16xf32>
      %164 = vector.broadcast %158 : f32 to vector<1x16x16xf32>
      %165 = arith.mulf %164, %163 : vector<1x16x16xf32>
      %166 = arith.addf %162, %165 : vector<1x16x16xf32>
      %c1 = arith.constant 1 : index
      %167 = memref.load %arg2[%c1] : memref<98xf32, #tpu.memory_space<smem>>
      %c50 = arith.constant 50 : index
      %168 = memref.load %arg2[%c50] : memref<98xf32, #tpu.memory_space<smem>>
      %c0_126 = arith.constant 0 : index
      %c0_127 = arith.constant 0 : index
      %c1_128 = arith.constant 1 : index
      %169 = vector.load %arg7[%c0_126, %c0_127, %c1_128] : memref<1x22x22xf32, #tpu.memory_space<vmem>>, vector<1x16x16xf32>
      %170 = vector.broadcast %167 : f32 to vector<1x16x16xf32>
      %171 = arith.mulf %170, %169 : vector<1x16x16xf32>
      %172 = arith.addf %166, %171 : vector<1x16x16xf32>
      %c0_129 = arith.constant 0 : index
      %c0_130 = arith.constant 0 : index
      %c1_131 = arith.constant 1 : index
      %173 = vector.load %arg8[%c0_129, %c0_130, %c1_131] : memref<1x22x22xf32, #tpu.memory_space<vmem>>, vector<1x16x16xf32>
      %174 = vector.broadcast %168 : f32 to vector<1x16x16xf32>
      %175 = arith.mulf %174, %173 : vector<1x16x16xf32>
      %176 = arith.addf %172, %175 : vector<1x16x16xf32>
      %c2 = arith.constant 2 : index
      %177 = memref.load %arg2[%c2] : memref<98xf32, #tpu.memory_space<smem>>
      %c51 = arith.constant 51 : index
      %178 = memref.load %arg2[%c51] : memref<98xf32, #tpu.memory_space<smem>>
      %c0_132 = arith.constant 0 : index
      %c0_133 = arith.constant 0 : index
      %c2_134 = arith.constant 2 : index
      %179 = vector.load %arg7[%c0_132, %c0_133, %c2_134] : memref<1x22x22xf32, #tpu.memory_space<vmem>>, vector<1x16x16xf32>
      %180 = vector.broadcast %177 : f32 to vector<1x16x16xf32>
      %181 = arith.mulf %180, %179 : vector<1x16x16xf32>
      %182 = arith.addf %176, %181 : vector<1x16x16xf32>
      %c0_135 = arith.constant 0 : index
      %c0_136 = arith.constant 0 : index
      %c2_137 = arith.constant 2 : index
      %183 = vector.load %arg8[%c0_135, %c0_136, %c2_137] : memref<1x22x22xf32, #tpu.memory_space<vmem>>, vector<1x16x16xf32>
      %184 = vector.broadcast %178 : f32 to vector<1x16x16xf32>
      %185 = arith.mulf %184, %183 : vector<1x16x16xf32>
      %186 = arith.addf %182, %185 : vector<1x16x16xf32>
      %c3_138 = arith.constant 3 : index
      %187 = memref.load %arg2[%c3_138] : memref<98xf32, #tpu.memory_space<smem>>
      %c52 = arith.constant 52 : index
      %188 = memref.load %arg2[%c52] : memref<98xf32, #tpu.memory_space<smem>>
      %c0_139 = arith.constant 0 : index
      %c0_140 = arith.constant 0 : index
      %c3_141 = arith.constant 3 : index
      %189 = vector.load %arg7[%c0_139, %c0_140, %c3_141] : memref<1x22x22xf32, #tpu.memory_space<vmem>>, vector<1x16x16xf32>
      %190 = vector.broadcast %187 : f32 to vector<1x16x16xf32>
      %191 = arith.mulf %190, %189 : vector<1x16x16xf32>
      %192 = arith.addf %186, %191 : vector<1x16x16xf32>
      %c0_142 = arith.constant 0 : index
      %c0_143 = arith.constant 0 : index
      %c3_144 = arith.constant 3 : index
      %193 = vector.load %arg8[%c0_142, %c0_143, %c3_144] : memref<1x22x22xf32, #tpu.memory_space<vmem>>, vector<1x16x16xf32>
      %194 = vector.broadcast %188 : f32 to vector<1x16x16xf32>
      %195 = arith.mulf %194, %193 : vector<1x16x16xf32>
      %196 = arith.addf %192, %195 : vector<1x16x16xf32>
      %c4_145 = arith.constant 4 : index
      %197 = memref.load %arg2[%c4_145] : memref<98xf32, #tpu.memory_space<smem>>
      %c53 = arith.constant 53 : index
      %198 = memref.load %arg2[%c53] : memref<98xf32, #tpu.memory_space<smem>>
      %c0_146 = arith.constant 0 : index
      %c0_147 = arith.constant 0 : index
      %c4_148 = arith.constant 4 : index
      %199 = vector.load %arg7[%c0_146, %c0_147, %c4_148] : memref<1x22x22xf32, #tpu.memory_space<vmem>>, vector<1x16x16xf32>
      %200 = vector.broadcast %197 : f32 to vector<1x16x16xf32>
      %201 = arith.mulf %200, %199 : vector<1x16x16xf32>
      %202 = arith.addf %196, %201 : vector<1x16x16xf32>
      %c0_149 = arith.constant 0 : index
      %c0_150 = arith.constant 0 : index
      %c4_151 = arith.constant 4 : index
      %203 = vector.load %arg8[%c0_149, %c0_150, %c4_151] : memref<1x22x22xf32, #tpu.memory_space<vmem>>, vector<1x16x16xf32>
      %204 = vector.broadcast %198 : f32 to vector<1x16x16xf32>
      %205 = arith.mulf %204, %203 : vector<1x16x16xf32>
      %206 = arith.addf %202, %205 : vector<1x16x16xf32>
      %c5_152 = arith.constant 5 : index
      %207 = memref.load %arg2[%c5_152] : memref<98xf32, #tpu.memory_space<smem>>
      %c54 = arith.constant 54 : index
      %208 = memref.load %arg2[%c54] : memref<98xf32, #tpu.memory_space<smem>>
      %c0_153 = arith.constant 0 : index
      %c0_154 = arith.constant 0 : index
      %c5_155 = arith.constant 5 : index
      %209 = vector.load %arg7[%c0_153, %c0_154, %c5_155] : memref<1x22x22xf32, #tpu.memory_space<vmem>>, vector<1x16x16xf32>
      %210 = vector.broadcast %207 : f32 to vector<1x16x16xf32>
      %211 = arith.mulf %210, %209 : vector<1x16x16xf32>
      %212 = arith.addf %206, %211 : vector<1x16x16xf32>
      %c0_156 = arith.constant 0 : index
      %c0_157 = arith.constant 0 : index
      %c5_158 = arith.constant 5 : index
      %213 = vector.load %arg8[%c0_156, %c0_157, %c5_158] : memref<1x22x22xf32, #tpu.memory_space<vmem>>, vector<1x16x16xf32>
      %214 = vector.broadcast %208 : f32 to vector<1x16x16xf32>
      %215 = arith.mulf %214, %213 : vector<1x16x16xf32>
      %216 = arith.addf %212, %215 : vector<1x16x16xf32>
      %c6_159 = arith.constant 6 : index
      %217 = memref.load %arg2[%c6_159] : memref<98xf32, #tpu.memory_space<smem>>
      %c55 = arith.constant 55 : index
      %218 = memref.load %arg2[%c55] : memref<98xf32, #tpu.memory_space<smem>>
      %c0_160 = arith.constant 0 : index
      %c0_161 = arith.constant 0 : index
      %c6_162 = arith.constant 6 : index
      %219 = vector.load %arg7[%c0_160, %c0_161, %c6_162] : memref<1x22x22xf32, #tpu.memory_space<vmem>>, vector<1x16x16xf32>
      %220 = vector.broadcast %217 : f32 to vector<1x16x16xf32>
      %221 = arith.mulf %220, %219 : vector<1x16x16xf32>
      %222 = arith.addf %216, %221 : vector<1x16x16xf32>
      %c0_163 = arith.constant 0 : index
      %c0_164 = arith.constant 0 : index
      %c6_165 = arith.constant 6 : index
      %223 = vector.load %arg8[%c0_163, %c0_164, %c6_165] : memref<1x22x22xf32, #tpu.memory_space<vmem>>, vector<1x16x16xf32>
      %224 = vector.broadcast %218 : f32 to vector<1x16x16xf32>
      %225 = arith.mulf %224, %223 : vector<1x16x16xf32>
      %226 = arith.addf %222, %225 : vector<1x16x16xf32>
      %c7_166 = arith.constant 7 : index
      %227 = memref.load %arg2[%c7_166] : memref<98xf32, #tpu.memory_space<smem>>
      %c56 = arith.constant 56 : index
      %228 = memref.load %arg2[%c56] : memref<98xf32, #tpu.memory_space<smem>>
      %c0_167 = arith.constant 0 : index
      %c1_168 = arith.constant 1 : index
      %c0_169 = arith.constant 0 : index
      %229 = vector.load %arg7[%c0_167, %c1_168, %c0_169] : memref<1x22x22xf32, #tpu.memory_space<vmem>>, vector<1x16x16xf32>
      %230 = vector.broadcast %227 : f32 to vector<1x16x16xf32>
      %231 = arith.mulf %230, %229 : vector<1x16x16xf32>
      %232 = arith.addf %226, %231 : vector<1x16x16xf32>
      %c0_170 = arith.constant 0 : index
      %c1_171 = arith.constant 1 : index
      %c0_172 = arith.constant 0 : index
      %233 = vector.load %arg8[%c0_170, %c1_171, %c0_172] : memref<1x22x22xf32, #tpu.memory_space<vmem>>, vector<1x16x16xf32>
      %234 = vector.broadcast %228 : f32 to vector<1x16x16xf32>
      %235 = arith.mulf %234, %233 : vector<1x16x16xf32>
      %236 = arith.addf %232, %235 : vector<1x16x16xf32>
      %c8_173 = arith.constant 8 : index
      %237 = memref.load %arg2[%c8_173] : memref<98xf32, #tpu.memory_space<smem>>
      %c57 = arith.constant 57 : index
      %238 = memref.load %arg2[%c57] : memref<98xf32, #tpu.memory_space<smem>>
      %c0_174 = arith.constant 0 : index
      %c1_175 = arith.constant 1 : index
      %c1_176 = arith.constant 1 : index
      %239 = vector.load %arg7[%c0_174, %c1_175, %c1_176] : memref<1x22x22xf32, #tpu.memory_space<vmem>>, vector<1x16x16xf32>
      %240 = vector.broadcast %237 : f32 to vector<1x16x16xf32>
      %241 = arith.mulf %240, %239 : vector<1x16x16xf32>
      %242 = arith.addf %236, %241 : vector<1x16x16xf32>
      %c0_177 = arith.constant 0 : index
      %c1_178 = arith.constant 1 : index
      %c1_179 = arith.constant 1 : index
      %243 = vector.load %arg8[%c0_177, %c1_178, %c1_179] : memref<1x22x22xf32, #tpu.memory_space<vmem>>, vector<1x16x16xf32>
      %244 = vector.broadcast %238 : f32 to vector<1x16x16xf32>
      %245 = arith.mulf %244, %243 : vector<1x16x16xf32>
      %246 = arith.addf %242, %245 : vector<1x16x16xf32>
      %c9_180 = arith.constant 9 : index
      %247 = memref.load %arg2[%c9_180] : memref<98xf32, #tpu.memory_space<smem>>
      %c58 = arith.constant 58 : index
      %248 = memref.load %arg2[%c58] : memref<98xf32, #tpu.memory_space<smem>>
      %c0_181 = arith.constant 0 : index
      %c1_182 = arith.constant 1 : index
      %c2_183 = arith.constant 2 : index
      %249 = vector.load %arg7[%c0_181, %c1_182, %c2_183] : memref<1x22x22xf32, #tpu.memory_space<vmem>>, vector<1x16x16xf32>
      %250 = vector.broadcast %247 : f32 to vector<1x16x16xf32>
      %251 = arith.mulf %250, %249 : vector<1x16x16xf32>
      %252 = arith.addf %246, %251 : vector<1x16x16xf32>
      %c0_184 = arith.constant 0 : index
      %c1_185 = arith.constant 1 : index
      %c2_186 = arith.constant 2 : index
      %253 = vector.load %arg8[%c0_184, %c1_185, %c2_186] : memref<1x22x22xf32, #tpu.memory_space<vmem>>, vector<1x16x16xf32>
      %254 = vector.broadcast %248 : f32 to vector<1x16x16xf32>
      %255 = arith.mulf %254, %253 : vector<1x16x16xf32>
      %256 = arith.addf %252, %255 : vector<1x16x16xf32>
      %c10_187 = arith.constant 10 : index
      %257 = memref.load %arg2[%c10_187] : memref<98xf32, #tpu.memory_space<smem>>
      %c59 = arith.constant 59 : index
      %258 = memref.load %arg2[%c59] : memref<98xf32, #tpu.memory_space<smem>>
      %c0_188 = arith.constant 0 : index
      %c1_189 = arith.constant 1 : index
      %c3_190 = arith.constant 3 : index
      %259 = vector.load %arg7[%c0_188, %c1_189, %c3_190] : memref<1x22x22xf32, #tpu.memory_space<vmem>>, vector<1x16x16xf32>
      %260 = vector.broadcast %257 : f32 to vector<1x16x16xf32>
      %261 = arith.mulf %260, %259 : vector<1x16x16xf32>
      %262 = arith.addf %256, %261 : vector<1x16x16xf32>
      %c0_191 = arith.constant 0 : index
      %c1_192 = arith.constant 1 : index
      %c3_193 = arith.constant 3 : index
      %263 = vector.load %arg8[%c0_191, %c1_192, %c3_193] : memref<1x22x22xf32, #tpu.memory_space<vmem>>, vector<1x16x16xf32>
      %264 = vector.broadcast %258 : f32 to vector<1x16x16xf32>
      %265 = arith.mulf %264, %263 : vector<1x16x16xf32>
      %266 = arith.addf %262, %265 : vector<1x16x16xf32>
      %c11_194 = arith.constant 11 : index
      %267 = memref.load %arg2[%c11_194] : memref<98xf32, #tpu.memory_space<smem>>
      %c60 = arith.constant 60 : index
      %268 = memref.load %arg2[%c60] : memref<98xf32, #tpu.memory_space<smem>>
      %c0_195 = arith.constant 0 : index
      %c1_196 = arith.constant 1 : index
      %c4_197 = arith.constant 4 : index
      %269 = vector.load %arg7[%c0_195, %c1_196, %c4_197] : memref<1x22x22xf32, #tpu.memory_space<vmem>>, vector<1x16x16xf32>
      %270 = vector.broadcast %267 : f32 to vector<1x16x16xf32>
      %271 = arith.mulf %270, %269 : vector<1x16x16xf32>
      %272 = arith.addf %266, %271 : vector<1x16x16xf32>
      %c0_198 = arith.constant 0 : index
      %c1_199 = arith.constant 1 : index
      %c4_200 = arith.constant 4 : index
      %273 = vector.load %arg8[%c0_198, %c1_199, %c4_200] : memref<1x22x22xf32, #tpu.memory_space<vmem>>, vector<1x16x16xf32>
      %274 = vector.broadcast %268 : f32 to vector<1x16x16xf32>
      %275 = arith.mulf %274, %273 : vector<1x16x16xf32>
      %276 = arith.addf %272, %275 : vector<1x16x16xf32>
      %c12_201 = arith.constant 12 : index
      %277 = memref.load %arg2[%c12_201] : memref<98xf32, #tpu.memory_space<smem>>
      %c61 = arith.constant 61 : index
      %278 = memref.load %arg2[%c61] : memref<98xf32, #tpu.memory_space<smem>>
      %c0_202 = arith.constant 0 : index
      %c1_203 = arith.constant 1 : index
      %c5_204 = arith.constant 5 : index
      %279 = vector.load %arg7[%c0_202, %c1_203, %c5_204] : memref<1x22x22xf32, #tpu.memory_space<vmem>>, vector<1x16x16xf32>
      %280 = vector.broadcast %277 : f32 to vector<1x16x16xf32>
      %281 = arith.mulf %280, %279 : vector<1x16x16xf32>
      %282 = arith.addf %276, %281 : vector<1x16x16xf32>
      %c0_205 = arith.constant 0 : index
      %c1_206 = arith.constant 1 : index
      %c5_207 = arith.constant 5 : index
      %283 = vector.load %arg8[%c0_205, %c1_206, %c5_207] : memref<1x22x22xf32, #tpu.memory_space<vmem>>, vector<1x16x16xf32>
      %284 = vector.broadcast %278 : f32 to vector<1x16x16xf32>
      %285 = arith.mulf %284, %283 : vector<1x16x16xf32>
      %286 = arith.addf %282, %285 : vector<1x16x16xf32>
      %c13_208 = arith.constant 13 : index
      %287 = memref.load %arg2[%c13_208] : memref<98xf32, #tpu.memory_space<smem>>
      %c62 = arith.constant 62 : index
      %288 = memref.load %arg2[%c62] : memref<98xf32, #tpu.memory_space<smem>>
      %c0_209 = arith.constant 0 : index
      %c1_210 = arith.constant 1 : index
      %c6_211 = arith.constant 6 : index
      %289 = vector.load %arg7[%c0_209, %c1_210, %c6_211] : memref<1x22x22xf32, #tpu.memory_space<vmem>>, vector<1x16x16xf32>
      %290 = vector.broadcast %287 : f32 to vector<1x16x16xf32>
      %291 = arith.mulf %290, %289 : vector<1x16x16xf32>
      %292 = arith.addf %286, %291 : vector<1x16x16xf32>
      %c0_212 = arith.constant 0 : index
      %c1_213 = arith.constant 1 : index
      %c6_214 = arith.constant 6 : index
      %293 = vector.load %arg8[%c0_212, %c1_213, %c6_214] : memref<1x22x22xf32, #tpu.memory_space<vmem>>, vector<1x16x16xf32>
      %294 = vector.broadcast %288 : f32 to vector<1x16x16xf32>
      %295 = arith.mulf %294, %293 : vector<1x16x16xf32>
      %296 = arith.addf %292, %295 : vector<1x16x16xf32>
      %c14_215 = arith.constant 14 : index
      %297 = memref.load %arg2[%c14_215] : memref<98xf32, #tpu.memory_space<smem>>
      %c63 = arith.constant 63 : index
      %298 = memref.load %arg2[%c63] : memref<98xf32, #tpu.memory_space<smem>>
      %c0_216 = arith.constant 0 : index
      %c2_217 = arith.constant 2 : index
      %c0_218 = arith.constant 0 : index
      %299 = vector.load %arg7[%c0_216, %c2_217, %c0_218] : memref<1x22x22xf32, #tpu.memory_space<vmem>>, vector<1x16x16xf32>
      %300 = vector.broadcast %297 : f32 to vector<1x16x16xf32>
      %301 = arith.mulf %300, %299 : vector<1x16x16xf32>
      %302 = arith.addf %296, %301 : vector<1x16x16xf32>
      %c0_219 = arith.constant 0 : index
      %c2_220 = arith.constant 2 : index
      %c0_221 = arith.constant 0 : index
      %303 = vector.load %arg8[%c0_219, %c2_220, %c0_221] : memref<1x22x22xf32, #tpu.memory_space<vmem>>, vector<1x16x16xf32>
      %304 = vector.broadcast %298 : f32 to vector<1x16x16xf32>
      %305 = arith.mulf %304, %303 : vector<1x16x16xf32>
      %306 = arith.addf %302, %305 : vector<1x16x16xf32>
      %c15_222 = arith.constant 15 : index
      %307 = memref.load %arg2[%c15_222] : memref<98xf32, #tpu.memory_space<smem>>
      %c64 = arith.constant 64 : index
      %308 = memref.load %arg2[%c64] : memref<98xf32, #tpu.memory_space<smem>>
      %c0_223 = arith.constant 0 : index
      %c2_224 = arith.constant 2 : index
      %c1_225 = arith.constant 1 : index
      %309 = vector.load %arg7[%c0_223, %c2_224, %c1_225] : memref<1x22x22xf32, #tpu.memory_space<vmem>>, vector<1x16x16xf32>
      %310 = vector.broadcast %307 : f32 to vector<1x16x16xf32>
      %311 = arith.mulf %310, %309 : vector<1x16x16xf32>
      %312 = arith.addf %306, %311 : vector<1x16x16xf32>
      %c0_226 = arith.constant 0 : index
      %c2_227 = arith.constant 2 : index
      %c1_228 = arith.constant 1 : index
      %313 = vector.load %arg8[%c0_226, %c2_227, %c1_228] : memref<1x22x22xf32, #tpu.memory_space<vmem>>, vector<1x16x16xf32>
      %314 = vector.broadcast %308 : f32 to vector<1x16x16xf32>
      %315 = arith.mulf %314, %313 : vector<1x16x16xf32>
      %316 = arith.addf %312, %315 : vector<1x16x16xf32>
      %c16_229 = arith.constant 16 : index
      %317 = memref.load %arg2[%c16_229] : memref<98xf32, #tpu.memory_space<smem>>
      %c65 = arith.constant 65 : index
      %318 = memref.load %arg2[%c65] : memref<98xf32, #tpu.memory_space<smem>>
      %c0_230 = arith.constant 0 : index
      %c2_231 = arith.constant 2 : index
      %c2_232 = arith.constant 2 : index
      %319 = vector.load %arg7[%c0_230, %c2_231, %c2_232] : memref<1x22x22xf32, #tpu.memory_space<vmem>>, vector<1x16x16xf32>
      %320 = vector.broadcast %317 : f32 to vector<1x16x16xf32>
      %321 = arith.mulf %320, %319 : vector<1x16x16xf32>
      %322 = arith.addf %316, %321 : vector<1x16x16xf32>
      %c0_233 = arith.constant 0 : index
      %c2_234 = arith.constant 2 : index
      %c2_235 = arith.constant 2 : index
      %323 = vector.load %arg8[%c0_233, %c2_234, %c2_235] : memref<1x22x22xf32, #tpu.memory_space<vmem>>, vector<1x16x16xf32>
      %324 = vector.broadcast %318 : f32 to vector<1x16x16xf32>
      %325 = arith.mulf %324, %323 : vector<1x16x16xf32>
      %326 = arith.addf %322, %325 : vector<1x16x16xf32>
      %c17_236 = arith.constant 17 : index
      %327 = memref.load %arg2[%c17_236] : memref<98xf32, #tpu.memory_space<smem>>
      %c66 = arith.constant 66 : index
      %328 = memref.load %arg2[%c66] : memref<98xf32, #tpu.memory_space<smem>>
      %c0_237 = arith.constant 0 : index
      %c2_238 = arith.constant 2 : index
      %c3_239 = arith.constant 3 : index
      %329 = vector.load %arg7[%c0_237, %c2_238, %c3_239] : memref<1x22x22xf32, #tpu.memory_space<vmem>>, vector<1x16x16xf32>
      %330 = vector.broadcast %327 : f32 to vector<1x16x16xf32>
      %331 = arith.mulf %330, %329 : vector<1x16x16xf32>
      %332 = arith.addf %326, %331 : vector<1x16x16xf32>
      %c0_240 = arith.constant 0 : index
      %c2_241 = arith.constant 2 : index
      %c3_242 = arith.constant 3 : index
      %333 = vector.load %arg8[%c0_240, %c2_241, %c3_242] : memref<1x22x22xf32, #tpu.memory_space<vmem>>, vector<1x16x16xf32>
      %334 = vector.broadcast %328 : f32 to vector<1x16x16xf32>
      %335 = arith.mulf %334, %333 : vector<1x16x16xf32>
      %336 = arith.addf %332, %335 : vector<1x16x16xf32>
      %c18_243 = arith.constant 18 : index
      %337 = memref.load %arg2[%c18_243] : memref<98xf32, #tpu.memory_space<smem>>
      %c67 = arith.constant 67 : index
      %338 = memref.load %arg2[%c67] : memref<98xf32, #tpu.memory_space<smem>>
      %c0_244 = arith.constant 0 : index
      %c2_245 = arith.constant 2 : index
      %c4_246 = arith.constant 4 : index
      %339 = vector.load %arg7[%c0_244, %c2_245, %c4_246] : memref<1x22x22xf32, #tpu.memory_space<vmem>>, vector<1x16x16xf32>
      %340 = vector.broadcast %337 : f32 to vector<1x16x16xf32>
      %341 = arith.mulf %340, %339 : vector<1x16x16xf32>
      %342 = arith.addf %336, %341 : vector<1x16x16xf32>
      %c0_247 = arith.constant 0 : index
      %c2_248 = arith.constant 2 : index
      %c4_249 = arith.constant 4 : index
      %343 = vector.load %arg8[%c0_247, %c2_248, %c4_249] : memref<1x22x22xf32, #tpu.memory_space<vmem>>, vector<1x16x16xf32>
      %344 = vector.broadcast %338 : f32 to vector<1x16x16xf32>
      %345 = arith.mulf %344, %343 : vector<1x16x16xf32>
      %346 = arith.addf %342, %345 : vector<1x16x16xf32>
      %c19_250 = arith.constant 19 : index
      %347 = memref.load %arg2[%c19_250] : memref<98xf32, #tpu.memory_space<smem>>
      %c68 = arith.constant 68 : index
      %348 = memref.load %arg2[%c68] : memref<98xf32, #tpu.memory_space<smem>>
      %c0_251 = arith.constant 0 : index
      %c2_252 = arith.constant 2 : index
      %c5_253 = arith.constant 5 : index
      %349 = vector.load %arg7[%c0_251, %c2_252, %c5_253] : memref<1x22x22xf32, #tpu.memory_space<vmem>>, vector<1x16x16xf32>
      %350 = vector.broadcast %347 : f32 to vector<1x16x16xf32>
      %351 = arith.mulf %350, %349 : vector<1x16x16xf32>
      %352 = arith.addf %346, %351 : vector<1x16x16xf32>
      %c0_254 = arith.constant 0 : index
      %c2_255 = arith.constant 2 : index
      %c5_256 = arith.constant 5 : index
      %353 = vector.load %arg8[%c0_254, %c2_255, %c5_256] : memref<1x22x22xf32, #tpu.memory_space<vmem>>, vector<1x16x16xf32>
      %354 = vector.broadcast %348 : f32 to vector<1x16x16xf32>
      %355 = arith.mulf %354, %353 : vector<1x16x16xf32>
      %356 = arith.addf %352, %355 : vector<1x16x16xf32>
      %c20 = arith.constant 20 : index
      %357 = memref.load %arg2[%c20] : memref<98xf32, #tpu.memory_space<smem>>
      %c69 = arith.constant 69 : index
      %358 = memref.load %arg2[%c69] : memref<98xf32, #tpu.memory_space<smem>>
      %c0_257 = arith.constant 0 : index
      %c2_258 = arith.constant 2 : index
      %c6_259 = arith.constant 6 : index
      %359 = vector.load %arg7[%c0_257, %c2_258, %c6_259] : memref<1x22x22xf32, #tpu.memory_space<vmem>>, vector<1x16x16xf32>
      %360 = vector.broadcast %357 : f32 to vector<1x16x16xf32>
      %361 = arith.mulf %360, %359 : vector<1x16x16xf32>
      %362 = arith.addf %356, %361 : vector<1x16x16xf32>
      %c0_260 = arith.constant 0 : index
      %c2_261 = arith.constant 2 : index
      %c6_262 = arith.constant 6 : index
      %363 = vector.load %arg8[%c0_260, %c2_261, %c6_262] : memref<1x22x22xf32, #tpu.memory_space<vmem>>, vector<1x16x16xf32>
      %364 = vector.broadcast %358 : f32 to vector<1x16x16xf32>
      %365 = arith.mulf %364, %363 : vector<1x16x16xf32>
      %366 = arith.addf %362, %365 : vector<1x16x16xf32>
      %c21 = arith.constant 21 : index
      %367 = memref.load %arg2[%c21] : memref<98xf32, #tpu.memory_space<smem>>
      %c70 = arith.constant 70 : index
      %368 = memref.load %arg2[%c70] : memref<98xf32, #tpu.memory_space<smem>>
      %c0_263 = arith.constant 0 : index
      %c3_264 = arith.constant 3 : index
      %c0_265 = arith.constant 0 : index
      %369 = vector.load %arg7[%c0_263, %c3_264, %c0_265] : memref<1x22x22xf32, #tpu.memory_space<vmem>>, vector<1x16x16xf32>
      %370 = vector.broadcast %367 : f32 to vector<1x16x16xf32>
      %371 = arith.mulf %370, %369 : vector<1x16x16xf32>
      %372 = arith.addf %366, %371 : vector<1x16x16xf32>
      %c0_266 = arith.constant 0 : index
      %c3_267 = arith.constant 3 : index
      %c0_268 = arith.constant 0 : index
      %373 = vector.load %arg8[%c0_266, %c3_267, %c0_268] : memref<1x22x22xf32, #tpu.memory_space<vmem>>, vector<1x16x16xf32>
      %374 = vector.broadcast %368 : f32 to vector<1x16x16xf32>
      %375 = arith.mulf %374, %373 : vector<1x16x16xf32>
      %376 = arith.addf %372, %375 : vector<1x16x16xf32>
      %c22 = arith.constant 22 : index
      %377 = memref.load %arg2[%c22] : memref<98xf32, #tpu.memory_space<smem>>
      %c71 = arith.constant 71 : index
      %378 = memref.load %arg2[%c71] : memref<98xf32, #tpu.memory_space<smem>>
      %c0_269 = arith.constant 0 : index
      %c3_270 = arith.constant 3 : index
      %c1_271 = arith.constant 1 : index
      %379 = vector.load %arg7[%c0_269, %c3_270, %c1_271] : memref<1x22x22xf32, #tpu.memory_space<vmem>>, vector<1x16x16xf32>
      %380 = vector.broadcast %377 : f32 to vector<1x16x16xf32>
      %381 = arith.mulf %380, %379 : vector<1x16x16xf32>
      %382 = arith.addf %376, %381 : vector<1x16x16xf32>
      %c0_272 = arith.constant 0 : index
      %c3_273 = arith.constant 3 : index
      %c1_274 = arith.constant 1 : index
      %383 = vector.load %arg8[%c0_272, %c3_273, %c1_274] : memref<1x22x22xf32, #tpu.memory_space<vmem>>, vector<1x16x16xf32>
      %384 = vector.broadcast %378 : f32 to vector<1x16x16xf32>
      %385 = arith.mulf %384, %383 : vector<1x16x16xf32>
      %386 = arith.addf %382, %385 : vector<1x16x16xf32>
      %c23 = arith.constant 23 : index
      %387 = memref.load %arg2[%c23] : memref<98xf32, #tpu.memory_space<smem>>
      %c72 = arith.constant 72 : index
      %388 = memref.load %arg2[%c72] : memref<98xf32, #tpu.memory_space<smem>>
      %c0_275 = arith.constant 0 : index
      %c3_276 = arith.constant 3 : index
      %c2_277 = arith.constant 2 : index
      %389 = vector.load %arg7[%c0_275, %c3_276, %c2_277] : memref<1x22x22xf32, #tpu.memory_space<vmem>>, vector<1x16x16xf32>
      %390 = vector.broadcast %387 : f32 to vector<1x16x16xf32>
      %391 = arith.mulf %390, %389 : vector<1x16x16xf32>
      %392 = arith.addf %386, %391 : vector<1x16x16xf32>
      %c0_278 = arith.constant 0 : index
      %c3_279 = arith.constant 3 : index
      %c2_280 = arith.constant 2 : index
      %393 = vector.load %arg8[%c0_278, %c3_279, %c2_280] : memref<1x22x22xf32, #tpu.memory_space<vmem>>, vector<1x16x16xf32>
      %394 = vector.broadcast %388 : f32 to vector<1x16x16xf32>
      %395 = arith.mulf %394, %393 : vector<1x16x16xf32>
      %396 = arith.addf %392, %395 : vector<1x16x16xf32>
      %c24 = arith.constant 24 : index
      %397 = memref.load %arg2[%c24] : memref<98xf32, #tpu.memory_space<smem>>
      %c73 = arith.constant 73 : index
      %398 = memref.load %arg2[%c73] : memref<98xf32, #tpu.memory_space<smem>>
      %c0_281 = arith.constant 0 : index
      %c3_282 = arith.constant 3 : index
      %c3_283 = arith.constant 3 : index
      %399 = vector.load %arg7[%c0_281, %c3_282, %c3_283] : memref<1x22x22xf32, #tpu.memory_space<vmem>>, vector<1x16x16xf32>
      %400 = vector.broadcast %397 : f32 to vector<1x16x16xf32>
      %401 = arith.mulf %400, %399 : vector<1x16x16xf32>
      %402 = arith.addf %396, %401 : vector<1x16x16xf32>
      %c0_284 = arith.constant 0 : index
      %c3_285 = arith.constant 3 : index
      %c3_286 = arith.constant 3 : index
      %403 = vector.load %arg8[%c0_284, %c3_285, %c3_286] : memref<1x22x22xf32, #tpu.memory_space<vmem>>, vector<1x16x16xf32>
      %404 = vector.broadcast %398 : f32 to vector<1x16x16xf32>
      %405 = arith.mulf %404, %403 : vector<1x16x16xf32>
      %406 = arith.addf %402, %405 : vector<1x16x16xf32>
      %c25 = arith.constant 25 : index
      %407 = memref.load %arg2[%c25] : memref<98xf32, #tpu.memory_space<smem>>
      %c74 = arith.constant 74 : index
      %408 = memref.load %arg2[%c74] : memref<98xf32, #tpu.memory_space<smem>>
      %c0_287 = arith.constant 0 : index
      %c3_288 = arith.constant 3 : index
      %c4_289 = arith.constant 4 : index
      %409 = vector.load %arg7[%c0_287, %c3_288, %c4_289] : memref<1x22x22xf32, #tpu.memory_space<vmem>>, vector<1x16x16xf32>
      %410 = vector.broadcast %407 : f32 to vector<1x16x16xf32>
      %411 = arith.mulf %410, %409 : vector<1x16x16xf32>
      %412 = arith.addf %406, %411 : vector<1x16x16xf32>
      %c0_290 = arith.constant 0 : index
      %c3_291 = arith.constant 3 : index
      %c4_292 = arith.constant 4 : index
      %413 = vector.load %arg8[%c0_290, %c3_291, %c4_292] : memref<1x22x22xf32, #tpu.memory_space<vmem>>, vector<1x16x16xf32>
      %414 = vector.broadcast %408 : f32 to vector<1x16x16xf32>
      %415 = arith.mulf %414, %413 : vector<1x16x16xf32>
      %416 = arith.addf %412, %415 : vector<1x16x16xf32>
      %c26 = arith.constant 26 : index
      %417 = memref.load %arg2[%c26] : memref<98xf32, #tpu.memory_space<smem>>
      %c75 = arith.constant 75 : index
      %418 = memref.load %arg2[%c75] : memref<98xf32, #tpu.memory_space<smem>>
      %c0_293 = arith.constant 0 : index
      %c3_294 = arith.constant 3 : index
      %c5_295 = arith.constant 5 : index
      %419 = vector.load %arg7[%c0_293, %c3_294, %c5_295] : memref<1x22x22xf32, #tpu.memory_space<vmem>>, vector<1x16x16xf32>
      %420 = vector.broadcast %417 : f32 to vector<1x16x16xf32>
      %421 = arith.mulf %420, %419 : vector<1x16x16xf32>
      %422 = arith.addf %416, %421 : vector<1x16x16xf32>
      %c0_296 = arith.constant 0 : index
      %c3_297 = arith.constant 3 : index
      %c5_298 = arith.constant 5 : index
      %423 = vector.load %arg8[%c0_296, %c3_297, %c5_298] : memref<1x22x22xf32, #tpu.memory_space<vmem>>, vector<1x16x16xf32>
      %424 = vector.broadcast %418 : f32 to vector<1x16x16xf32>
      %425 = arith.mulf %424, %423 : vector<1x16x16xf32>
      %426 = arith.addf %422, %425 : vector<1x16x16xf32>
      %c27 = arith.constant 27 : index
      %427 = memref.load %arg2[%c27] : memref<98xf32, #tpu.memory_space<smem>>
      %c76 = arith.constant 76 : index
      %428 = memref.load %arg2[%c76] : memref<98xf32, #tpu.memory_space<smem>>
      %c0_299 = arith.constant 0 : index
      %c3_300 = arith.constant 3 : index
      %c6_301 = arith.constant 6 : index
      %429 = vector.load %arg7[%c0_299, %c3_300, %c6_301] : memref<1x22x22xf32, #tpu.memory_space<vmem>>, vector<1x16x16xf32>
      %430 = vector.broadcast %427 : f32 to vector<1x16x16xf32>
      %431 = arith.mulf %430, %429 : vector<1x16x16xf32>
      %432 = arith.addf %426, %431 : vector<1x16x16xf32>
      %c0_302 = arith.constant 0 : index
      %c3_303 = arith.constant 3 : index
      %c6_304 = arith.constant 6 : index
      %433 = vector.load %arg8[%c0_302, %c3_303, %c6_304] : memref<1x22x22xf32, #tpu.memory_space<vmem>>, vector<1x16x16xf32>
      %434 = vector.broadcast %428 : f32 to vector<1x16x16xf32>
      %435 = arith.mulf %434, %433 : vector<1x16x16xf32>
      %436 = arith.addf %432, %435 : vector<1x16x16xf32>
      %c28 = arith.constant 28 : index
      %437 = memref.load %arg2[%c28] : memref<98xf32, #tpu.memory_space<smem>>
      %c77 = arith.constant 77 : index
      %438 = memref.load %arg2[%c77] : memref<98xf32, #tpu.memory_space<smem>>
      %c0_305 = arith.constant 0 : index
      %c4_306 = arith.constant 4 : index
      %c0_307 = arith.constant 0 : index
      %439 = vector.load %arg7[%c0_305, %c4_306, %c0_307] : memref<1x22x22xf32, #tpu.memory_space<vmem>>, vector<1x16x16xf32>
      %440 = vector.broadcast %437 : f32 to vector<1x16x16xf32>
      %441 = arith.mulf %440, %439 : vector<1x16x16xf32>
      %442 = arith.addf %436, %441 : vector<1x16x16xf32>
      %c0_308 = arith.constant 0 : index
      %c4_309 = arith.constant 4 : index
      %c0_310 = arith.constant 0 : index
      %443 = vector.load %arg8[%c0_308, %c4_309, %c0_310] : memref<1x22x22xf32, #tpu.memory_space<vmem>>, vector<1x16x16xf32>
      %444 = vector.broadcast %438 : f32 to vector<1x16x16xf32>
      %445 = arith.mulf %444, %443 : vector<1x16x16xf32>
      %446 = arith.addf %442, %445 : vector<1x16x16xf32>
      %c29 = arith.constant 29 : index
      %447 = memref.load %arg2[%c29] : memref<98xf32, #tpu.memory_space<smem>>
      %c78 = arith.constant 78 : index
      %448 = memref.load %arg2[%c78] : memref<98xf32, #tpu.memory_space<smem>>
      %c0_311 = arith.constant 0 : index
      %c4_312 = arith.constant 4 : index
      %c1_313 = arith.constant 1 : index
      %449 = vector.load %arg7[%c0_311, %c4_312, %c1_313] : memref<1x22x22xf32, #tpu.memory_space<vmem>>, vector<1x16x16xf32>
      %450 = vector.broadcast %447 : f32 to vector<1x16x16xf32>
      %451 = arith.mulf %450, %449 : vector<1x16x16xf32>
      %452 = arith.addf %446, %451 : vector<1x16x16xf32>
      %c0_314 = arith.constant 0 : index
      %c4_315 = arith.constant 4 : index
      %c1_316 = arith.constant 1 : index
      %453 = vector.load %arg8[%c0_314, %c4_315, %c1_316] : memref<1x22x22xf32, #tpu.memory_space<vmem>>, vector<1x16x16xf32>
      %454 = vector.broadcast %448 : f32 to vector<1x16x16xf32>
      %455 = arith.mulf %454, %453 : vector<1x16x16xf32>
      %456 = arith.addf %452, %455 : vector<1x16x16xf32>
      %c30 = arith.constant 30 : index
      %457 = memref.load %arg2[%c30] : memref<98xf32, #tpu.memory_space<smem>>
      %c79 = arith.constant 79 : index
      %458 = memref.load %arg2[%c79] : memref<98xf32, #tpu.memory_space<smem>>
      %c0_317 = arith.constant 0 : index
      %c4_318 = arith.constant 4 : index
      %c2_319 = arith.constant 2 : index
      %459 = vector.load %arg7[%c0_317, %c4_318, %c2_319] : memref<1x22x22xf32, #tpu.memory_space<vmem>>, vector<1x16x16xf32>
      %460 = vector.broadcast %457 : f32 to vector<1x16x16xf32>
      %461 = arith.mulf %460, %459 : vector<1x16x16xf32>
      %462 = arith.addf %456, %461 : vector<1x16x16xf32>
      %c0_320 = arith.constant 0 : index
      %c4_321 = arith.constant 4 : index
      %c2_322 = arith.constant 2 : index
      %463 = vector.load %arg8[%c0_320, %c4_321, %c2_322] : memref<1x22x22xf32, #tpu.memory_space<vmem>>, vector<1x16x16xf32>
      %464 = vector.broadcast %458 : f32 to vector<1x16x16xf32>
      %465 = arith.mulf %464, %463 : vector<1x16x16xf32>
      %466 = arith.addf %462, %465 : vector<1x16x16xf32>
      %c31 = arith.constant 31 : index
      %467 = memref.load %arg2[%c31] : memref<98xf32, #tpu.memory_space<smem>>
      %c80 = arith.constant 80 : index
      %468 = memref.load %arg2[%c80] : memref<98xf32, #tpu.memory_space<smem>>
      %c0_323 = arith.constant 0 : index
      %c4_324 = arith.constant 4 : index
      %c3_325 = arith.constant 3 : index
      %469 = vector.load %arg7[%c0_323, %c4_324, %c3_325] : memref<1x22x22xf32, #tpu.memory_space<vmem>>, vector<1x16x16xf32>
      %470 = vector.broadcast %467 : f32 to vector<1x16x16xf32>
      %471 = arith.mulf %470, %469 : vector<1x16x16xf32>
      %472 = arith.addf %466, %471 : vector<1x16x16xf32>
      %c0_326 = arith.constant 0 : index
      %c4_327 = arith.constant 4 : index
      %c3_328 = arith.constant 3 : index
      %473 = vector.load %arg8[%c0_326, %c4_327, %c3_328] : memref<1x22x22xf32, #tpu.memory_space<vmem>>, vector<1x16x16xf32>
      %474 = vector.broadcast %468 : f32 to vector<1x16x16xf32>
      %475 = arith.mulf %474, %473 : vector<1x16x16xf32>
      %476 = arith.addf %472, %475 : vector<1x16x16xf32>
      %c32 = arith.constant 32 : index
      %477 = memref.load %arg2[%c32] : memref<98xf32, #tpu.memory_space<smem>>
      %c81 = arith.constant 81 : index
      %478 = memref.load %arg2[%c81] : memref<98xf32, #tpu.memory_space<smem>>
      %c0_329 = arith.constant 0 : index
      %c4_330 = arith.constant 4 : index
      %c4_331 = arith.constant 4 : index
      %479 = vector.load %arg7[%c0_329, %c4_330, %c4_331] : memref<1x22x22xf32, #tpu.memory_space<vmem>>, vector<1x16x16xf32>
      %480 = vector.broadcast %477 : f32 to vector<1x16x16xf32>
      %481 = arith.mulf %480, %479 : vector<1x16x16xf32>
      %482 = arith.addf %476, %481 : vector<1x16x16xf32>
      %c0_332 = arith.constant 0 : index
      %c4_333 = arith.constant 4 : index
      %c4_334 = arith.constant 4 : index
      %483 = vector.load %arg8[%c0_332, %c4_333, %c4_334] : memref<1x22x22xf32, #tpu.memory_space<vmem>>, vector<1x16x16xf32>
      %484 = vector.broadcast %478 : f32 to vector<1x16x16xf32>
      %485 = arith.mulf %484, %483 : vector<1x16x16xf32>
      %486 = arith.addf %482, %485 : vector<1x16x16xf32>
      %c33 = arith.constant 33 : index
      %487 = memref.load %arg2[%c33] : memref<98xf32, #tpu.memory_space<smem>>
      %c82 = arith.constant 82 : index
      %488 = memref.load %arg2[%c82] : memref<98xf32, #tpu.memory_space<smem>>
      %c0_335 = arith.constant 0 : index
      %c4_336 = arith.constant 4 : index
      %c5_337 = arith.constant 5 : index
      %489 = vector.load %arg7[%c0_335, %c4_336, %c5_337] : memref<1x22x22xf32, #tpu.memory_space<vmem>>, vector<1x16x16xf32>
      %490 = vector.broadcast %487 : f32 to vector<1x16x16xf32>
      %491 = arith.mulf %490, %489 : vector<1x16x16xf32>
      %492 = arith.addf %486, %491 : vector<1x16x16xf32>
      %c0_338 = arith.constant 0 : index
      %c4_339 = arith.constant 4 : index
      %c5_340 = arith.constant 5 : index
      %493 = vector.load %arg8[%c0_338, %c4_339, %c5_340] : memref<1x22x22xf32, #tpu.memory_space<vmem>>, vector<1x16x16xf32>
      %494 = vector.broadcast %488 : f32 to vector<1x16x16xf32>
      %495 = arith.mulf %494, %493 : vector<1x16x16xf32>
      %496 = arith.addf %492, %495 : vector<1x16x16xf32>
      %c34 = arith.constant 34 : index
      %497 = memref.load %arg2[%c34] : memref<98xf32, #tpu.memory_space<smem>>
      %c83 = arith.constant 83 : index
      %498 = memref.load %arg2[%c83] : memref<98xf32, #tpu.memory_space<smem>>
      %c0_341 = arith.constant 0 : index
      %c4_342 = arith.constant 4 : index
      %c6_343 = arith.constant 6 : index
      %499 = vector.load %arg7[%c0_341, %c4_342, %c6_343] : memref<1x22x22xf32, #tpu.memory_space<vmem>>, vector<1x16x16xf32>
      %500 = vector.broadcast %497 : f32 to vector<1x16x16xf32>
      %501 = arith.mulf %500, %499 : vector<1x16x16xf32>
      %502 = arith.addf %496, %501 : vector<1x16x16xf32>
      %c0_344 = arith.constant 0 : index
      %c4_345 = arith.constant 4 : index
      %c6_346 = arith.constant 6 : index
      %503 = vector.load %arg8[%c0_344, %c4_345, %c6_346] : memref<1x22x22xf32, #tpu.memory_space<vmem>>, vector<1x16x16xf32>
      %504 = vector.broadcast %498 : f32 to vector<1x16x16xf32>
      %505 = arith.mulf %504, %503 : vector<1x16x16xf32>
      %506 = arith.addf %502, %505 : vector<1x16x16xf32>
      %c35 = arith.constant 35 : index
      %507 = memref.load %arg2[%c35] : memref<98xf32, #tpu.memory_space<smem>>
      %c84 = arith.constant 84 : index
      %508 = memref.load %arg2[%c84] : memref<98xf32, #tpu.memory_space<smem>>
      %c0_347 = arith.constant 0 : index
      %c5_348 = arith.constant 5 : index
      %c0_349 = arith.constant 0 : index
      %509 = vector.load %arg7[%c0_347, %c5_348, %c0_349] : memref<1x22x22xf32, #tpu.memory_space<vmem>>, vector<1x16x16xf32>
      %510 = vector.broadcast %507 : f32 to vector<1x16x16xf32>
      %511 = arith.mulf %510, %509 : vector<1x16x16xf32>
      %512 = arith.addf %506, %511 : vector<1x16x16xf32>
      %c0_350 = arith.constant 0 : index
      %c5_351 = arith.constant 5 : index
      %c0_352 = arith.constant 0 : index
      %513 = vector.load %arg8[%c0_350, %c5_351, %c0_352] : memref<1x22x22xf32, #tpu.memory_space<vmem>>, vector<1x16x16xf32>
      %514 = vector.broadcast %508 : f32 to vector<1x16x16xf32>
      %515 = arith.mulf %514, %513 : vector<1x16x16xf32>
      %516 = arith.addf %512, %515 : vector<1x16x16xf32>
      %c36 = arith.constant 36 : index
      %517 = memref.load %arg2[%c36] : memref<98xf32, #tpu.memory_space<smem>>
      %c85 = arith.constant 85 : index
      %518 = memref.load %arg2[%c85] : memref<98xf32, #tpu.memory_space<smem>>
      %c0_353 = arith.constant 0 : index
      %c5_354 = arith.constant 5 : index
      %c1_355 = arith.constant 1 : index
      %519 = vector.load %arg7[%c0_353, %c5_354, %c1_355] : memref<1x22x22xf32, #tpu.memory_space<vmem>>, vector<1x16x16xf32>
      %520 = vector.broadcast %517 : f32 to vector<1x16x16xf32>
      %521 = arith.mulf %520, %519 : vector<1x16x16xf32>
      %522 = arith.addf %516, %521 : vector<1x16x16xf32>
      %c0_356 = arith.constant 0 : index
      %c5_357 = arith.constant 5 : index
      %c1_358 = arith.constant 1 : index
      %523 = vector.load %arg8[%c0_356, %c5_357, %c1_358] : memref<1x22x22xf32, #tpu.memory_space<vmem>>, vector<1x16x16xf32>
      %524 = vector.broadcast %518 : f32 to vector<1x16x16xf32>
      %525 = arith.mulf %524, %523 : vector<1x16x16xf32>
      %526 = arith.addf %522, %525 : vector<1x16x16xf32>
      %c37 = arith.constant 37 : index
      %527 = memref.load %arg2[%c37] : memref<98xf32, #tpu.memory_space<smem>>
      %c86 = arith.constant 86 : index
      %528 = memref.load %arg2[%c86] : memref<98xf32, #tpu.memory_space<smem>>
      %c0_359 = arith.constant 0 : index
      %c5_360 = arith.constant 5 : index
      %c2_361 = arith.constant 2 : index
      %529 = vector.load %arg7[%c0_359, %c5_360, %c2_361] : memref<1x22x22xf32, #tpu.memory_space<vmem>>, vector<1x16x16xf32>
      %530 = vector.broadcast %527 : f32 to vector<1x16x16xf32>
      %531 = arith.mulf %530, %529 : vector<1x16x16xf32>
      %532 = arith.addf %526, %531 : vector<1x16x16xf32>
      %c0_362 = arith.constant 0 : index
      %c5_363 = arith.constant 5 : index
      %c2_364 = arith.constant 2 : index
      %533 = vector.load %arg8[%c0_362, %c5_363, %c2_364] : memref<1x22x22xf32, #tpu.memory_space<vmem>>, vector<1x16x16xf32>
      %534 = vector.broadcast %528 : f32 to vector<1x16x16xf32>
      %535 = arith.mulf %534, %533 : vector<1x16x16xf32>
      %536 = arith.addf %532, %535 : vector<1x16x16xf32>
      %c38 = arith.constant 38 : index
      %537 = memref.load %arg2[%c38] : memref<98xf32, #tpu.memory_space<smem>>
      %c87 = arith.constant 87 : index
      %538 = memref.load %arg2[%c87] : memref<98xf32, #tpu.memory_space<smem>>
      %c0_365 = arith.constant 0 : index
      %c5_366 = arith.constant 5 : index
      %c3_367 = arith.constant 3 : index
      %539 = vector.load %arg7[%c0_365, %c5_366, %c3_367] : memref<1x22x22xf32, #tpu.memory_space<vmem>>, vector<1x16x16xf32>
      %540 = vector.broadcast %537 : f32 to vector<1x16x16xf32>
      %541 = arith.mulf %540, %539 : vector<1x16x16xf32>
      %542 = arith.addf %536, %541 : vector<1x16x16xf32>
      %c0_368 = arith.constant 0 : index
      %c5_369 = arith.constant 5 : index
      %c3_370 = arith.constant 3 : index
      %543 = vector.load %arg8[%c0_368, %c5_369, %c3_370] : memref<1x22x22xf32, #tpu.memory_space<vmem>>, vector<1x16x16xf32>
      %544 = vector.broadcast %538 : f32 to vector<1x16x16xf32>
      %545 = arith.mulf %544, %543 : vector<1x16x16xf32>
      %546 = arith.addf %542, %545 : vector<1x16x16xf32>
      %c39 = arith.constant 39 : index
      %547 = memref.load %arg2[%c39] : memref<98xf32, #tpu.memory_space<smem>>
      %c88 = arith.constant 88 : index
      %548 = memref.load %arg2[%c88] : memref<98xf32, #tpu.memory_space<smem>>
      %c0_371 = arith.constant 0 : index
      %c5_372 = arith.constant 5 : index
      %c4_373 = arith.constant 4 : index
      %549 = vector.load %arg7[%c0_371, %c5_372, %c4_373] : memref<1x22x22xf32, #tpu.memory_space<vmem>>, vector<1x16x16xf32>
      %550 = vector.broadcast %547 : f32 to vector<1x16x16xf32>
      %551 = arith.mulf %550, %549 : vector<1x16x16xf32>
      %552 = arith.addf %546, %551 : vector<1x16x16xf32>
      %c0_374 = arith.constant 0 : index
      %c5_375 = arith.constant 5 : index
      %c4_376 = arith.constant 4 : index
      %553 = vector.load %arg8[%c0_374, %c5_375, %c4_376] : memref<1x22x22xf32, #tpu.memory_space<vmem>>, vector<1x16x16xf32>
      %554 = vector.broadcast %548 : f32 to vector<1x16x16xf32>
      %555 = arith.mulf %554, %553 : vector<1x16x16xf32>
      %556 = arith.addf %552, %555 : vector<1x16x16xf32>
      %c40 = arith.constant 40 : index
      %557 = memref.load %arg2[%c40] : memref<98xf32, #tpu.memory_space<smem>>
      %c89 = arith.constant 89 : index
      %558 = memref.load %arg2[%c89] : memref<98xf32, #tpu.memory_space<smem>>
      %c0_377 = arith.constant 0 : index
      %c5_378 = arith.constant 5 : index
      %c5_379 = arith.constant 5 : index
      %559 = vector.load %arg7[%c0_377, %c5_378, %c5_379] : memref<1x22x22xf32, #tpu.memory_space<vmem>>, vector<1x16x16xf32>
      %560 = vector.broadcast %557 : f32 to vector<1x16x16xf32>
      %561 = arith.mulf %560, %559 : vector<1x16x16xf32>
      %562 = arith.addf %556, %561 : vector<1x16x16xf32>
      %c0_380 = arith.constant 0 : index
      %c5_381 = arith.constant 5 : index
      %c5_382 = arith.constant 5 : index
      %563 = vector.load %arg8[%c0_380, %c5_381, %c5_382] : memref<1x22x22xf32, #tpu.memory_space<vmem>>, vector<1x16x16xf32>
      %564 = vector.broadcast %558 : f32 to vector<1x16x16xf32>
      %565 = arith.mulf %564, %563 : vector<1x16x16xf32>
      %566 = arith.addf %562, %565 : vector<1x16x16xf32>
      %c41 = arith.constant 41 : index
      %567 = memref.load %arg2[%c41] : memref<98xf32, #tpu.memory_space<smem>>
      %c90 = arith.constant 90 : index
      %568 = memref.load %arg2[%c90] : memref<98xf32, #tpu.memory_space<smem>>
      %c0_383 = arith.constant 0 : index
      %c5_384 = arith.constant 5 : index
      %c6_385 = arith.constant 6 : index
      %569 = vector.load %arg7[%c0_383, %c5_384, %c6_385] : memref<1x22x22xf32, #tpu.memory_space<vmem>>, vector<1x16x16xf32>
      %570 = vector.broadcast %567 : f32 to vector<1x16x16xf32>
      %571 = arith.mulf %570, %569 : vector<1x16x16xf32>
      %572 = arith.addf %566, %571 : vector<1x16x16xf32>
      %c0_386 = arith.constant 0 : index
      %c5_387 = arith.constant 5 : index
      %c6_388 = arith.constant 6 : index
      %573 = vector.load %arg8[%c0_386, %c5_387, %c6_388] : memref<1x22x22xf32, #tpu.memory_space<vmem>>, vector<1x16x16xf32>
      %574 = vector.broadcast %568 : f32 to vector<1x16x16xf32>
      %575 = arith.mulf %574, %573 : vector<1x16x16xf32>
      %576 = arith.addf %572, %575 : vector<1x16x16xf32>
      %c42 = arith.constant 42 : index
      %577 = memref.load %arg2[%c42] : memref<98xf32, #tpu.memory_space<smem>>
      %c91 = arith.constant 91 : index
      %578 = memref.load %arg2[%c91] : memref<98xf32, #tpu.memory_space<smem>>
      %c0_389 = arith.constant 0 : index
      %c6_390 = arith.constant 6 : index
      %c0_391 = arith.constant 0 : index
      %579 = vector.load %arg7[%c0_389, %c6_390, %c0_391] : memref<1x22x22xf32, #tpu.memory_space<vmem>>, vector<1x16x16xf32>
      %580 = vector.broadcast %577 : f32 to vector<1x16x16xf32>
      %581 = arith.mulf %580, %579 : vector<1x16x16xf32>
      %582 = arith.addf %576, %581 : vector<1x16x16xf32>
      %c0_392 = arith.constant 0 : index
      %c6_393 = arith.constant 6 : index
      %c0_394 = arith.constant 0 : index
      %583 = vector.load %arg8[%c0_392, %c6_393, %c0_394] : memref<1x22x22xf32, #tpu.memory_space<vmem>>, vector<1x16x16xf32>
      %584 = vector.broadcast %578 : f32 to vector<1x16x16xf32>
      %585 = arith.mulf %584, %583 : vector<1x16x16xf32>
      %586 = arith.addf %582, %585 : vector<1x16x16xf32>
      %c43 = arith.constant 43 : index
      %587 = memref.load %arg2[%c43] : memref<98xf32, #tpu.memory_space<smem>>
      %c92 = arith.constant 92 : index
      %588 = memref.load %arg2[%c92] : memref<98xf32, #tpu.memory_space<smem>>
      %c0_395 = arith.constant 0 : index
      %c6_396 = arith.constant 6 : index
      %c1_397 = arith.constant 1 : index
      %589 = vector.load %arg7[%c0_395, %c6_396, %c1_397] : memref<1x22x22xf32, #tpu.memory_space<vmem>>, vector<1x16x16xf32>
      %590 = vector.broadcast %587 : f32 to vector<1x16x16xf32>
      %591 = arith.mulf %590, %589 : vector<1x16x16xf32>
      %592 = arith.addf %586, %591 : vector<1x16x16xf32>
      %c0_398 = arith.constant 0 : index
      %c6_399 = arith.constant 6 : index
      %c1_400 = arith.constant 1 : index
      %593 = vector.load %arg8[%c0_398, %c6_399, %c1_400] : memref<1x22x22xf32, #tpu.memory_space<vmem>>, vector<1x16x16xf32>
      %594 = vector.broadcast %588 : f32 to vector<1x16x16xf32>
      %595 = arith.mulf %594, %593 : vector<1x16x16xf32>
      %596 = arith.addf %592, %595 : vector<1x16x16xf32>
      %c44 = arith.constant 44 : index
      %597 = memref.load %arg2[%c44] : memref<98xf32, #tpu.memory_space<smem>>
      %c93 = arith.constant 93 : index
      %598 = memref.load %arg2[%c93] : memref<98xf32, #tpu.memory_space<smem>>
      %c0_401 = arith.constant 0 : index
      %c6_402 = arith.constant 6 : index
      %c2_403 = arith.constant 2 : index
      %599 = vector.load %arg7[%c0_401, %c6_402, %c2_403] : memref<1x22x22xf32, #tpu.memory_space<vmem>>, vector<1x16x16xf32>
      %600 = vector.broadcast %597 : f32 to vector<1x16x16xf32>
      %601 = arith.mulf %600, %599 : vector<1x16x16xf32>
      %602 = arith.addf %596, %601 : vector<1x16x16xf32>
      %c0_404 = arith.constant 0 : index
      %c6_405 = arith.constant 6 : index
      %c2_406 = arith.constant 2 : index
      %603 = vector.load %arg8[%c0_404, %c6_405, %c2_406] : memref<1x22x22xf32, #tpu.memory_space<vmem>>, vector<1x16x16xf32>
      %604 = vector.broadcast %598 : f32 to vector<1x16x16xf32>
      %605 = arith.mulf %604, %603 : vector<1x16x16xf32>
      %606 = arith.addf %602, %605 : vector<1x16x16xf32>
      %c45 = arith.constant 45 : index
      %607 = memref.load %arg2[%c45] : memref<98xf32, #tpu.memory_space<smem>>
      %c94 = arith.constant 94 : index
      %608 = memref.load %arg2[%c94] : memref<98xf32, #tpu.memory_space<smem>>
      %c0_407 = arith.constant 0 : index
      %c6_408 = arith.constant 6 : index
      %c3_409 = arith.constant 3 : index
      %609 = vector.load %arg7[%c0_407, %c6_408, %c3_409] : memref<1x22x22xf32, #tpu.memory_space<vmem>>, vector<1x16x16xf32>
      %610 = vector.broadcast %607 : f32 to vector<1x16x16xf32>
      %611 = arith.mulf %610, %609 : vector<1x16x16xf32>
      %612 = arith.addf %606, %611 : vector<1x16x16xf32>
      %c0_410 = arith.constant 0 : index
      %c6_411 = arith.constant 6 : index
      %c3_412 = arith.constant 3 : index
      %613 = vector.load %arg8[%c0_410, %c6_411, %c3_412] : memref<1x22x22xf32, #tpu.memory_space<vmem>>, vector<1x16x16xf32>
      %614 = vector.broadcast %608 : f32 to vector<1x16x16xf32>
      %615 = arith.mulf %614, %613 : vector<1x16x16xf32>
      %616 = arith.addf %612, %615 : vector<1x16x16xf32>
      %c46 = arith.constant 46 : index
      %617 = memref.load %arg2[%c46] : memref<98xf32, #tpu.memory_space<smem>>
      %c95 = arith.constant 95 : index
      %618 = memref.load %arg2[%c95] : memref<98xf32, #tpu.memory_space<smem>>
      %c0_413 = arith.constant 0 : index
      %c6_414 = arith.constant 6 : index
      %c4_415 = arith.constant 4 : index
      %619 = vector.load %arg7[%c0_413, %c6_414, %c4_415] : memref<1x22x22xf32, #tpu.memory_space<vmem>>, vector<1x16x16xf32>
      %620 = vector.broadcast %617 : f32 to vector<1x16x16xf32>
      %621 = arith.mulf %620, %619 : vector<1x16x16xf32>
      %622 = arith.addf %616, %621 : vector<1x16x16xf32>
      %c0_416 = arith.constant 0 : index
      %c6_417 = arith.constant 6 : index
      %c4_418 = arith.constant 4 : index
      %623 = vector.load %arg8[%c0_416, %c6_417, %c4_418] : memref<1x22x22xf32, #tpu.memory_space<vmem>>, vector<1x16x16xf32>
      %624 = vector.broadcast %618 : f32 to vector<1x16x16xf32>
      %625 = arith.mulf %624, %623 : vector<1x16x16xf32>
      %626 = arith.addf %622, %625 : vector<1x16x16xf32>
      %c47 = arith.constant 47 : index
      %627 = memref.load %arg2[%c47] : memref<98xf32, #tpu.memory_space<smem>>
      %c96 = arith.constant 96 : index
      %628 = memref.load %arg2[%c96] : memref<98xf32, #tpu.memory_space<smem>>
      %c0_419 = arith.constant 0 : index
      %c6_420 = arith.constant 6 : index
      %c5_421 = arith.constant 5 : index
      %629 = vector.load %arg7[%c0_419, %c6_420, %c5_421] : memref<1x22x22xf32, #tpu.memory_space<vmem>>, vector<1x16x16xf32>
      %630 = vector.broadcast %627 : f32 to vector<1x16x16xf32>
      %631 = arith.mulf %630, %629 : vector<1x16x16xf32>
      %632 = arith.addf %626, %631 : vector<1x16x16xf32>
      %c0_422 = arith.constant 0 : index
      %c6_423 = arith.constant 6 : index
      %c5_424 = arith.constant 5 : index
      %633 = vector.load %arg8[%c0_422, %c6_423, %c5_424] : memref<1x22x22xf32, #tpu.memory_space<vmem>>, vector<1x16x16xf32>
      %634 = vector.broadcast %628 : f32 to vector<1x16x16xf32>
      %635 = arith.mulf %634, %633 : vector<1x16x16xf32>
      %636 = arith.addf %632, %635 : vector<1x16x16xf32>
      %c48 = arith.constant 48 : index
      %637 = memref.load %arg2[%c48] : memref<98xf32, #tpu.memory_space<smem>>
      %c97 = arith.constant 97 : index
      %638 = memref.load %arg2[%c97] : memref<98xf32, #tpu.memory_space<smem>>
      %c0_425 = arith.constant 0 : index
      %c6_426 = arith.constant 6 : index
      %c6_427 = arith.constant 6 : index
      %639 = vector.load %arg7[%c0_425, %c6_426, %c6_427] : memref<1x22x22xf32, #tpu.memory_space<vmem>>, vector<1x16x16xf32>
      %640 = vector.broadcast %637 : f32 to vector<1x16x16xf32>
      %641 = arith.mulf %640, %639 : vector<1x16x16xf32>
      %642 = arith.addf %636, %641 : vector<1x16x16xf32>
      %c0_428 = arith.constant 0 : index
      %c6_429 = arith.constant 6 : index
      %c6_430 = arith.constant 6 : index
      %643 = vector.load %arg8[%c0_428, %c6_429, %c6_430] : memref<1x22x22xf32, #tpu.memory_space<vmem>>, vector<1x16x16xf32>
      %644 = vector.broadcast %638 : f32 to vector<1x16x16xf32>
      %645 = arith.mulf %644, %643 : vector<1x16x16xf32>
      %646 = arith.addf %642, %645 : vector<1x16x16xf32>
      %647 = arith.negf %646 : vector<1x16x16xf32>
      %648 = math.exp %647 : vector<1x16x16xf32>
      %cst_431 = arith.constant 1.000000e+00 : f32
      %649 = vector.broadcast %cst_431 : f32 to vector<1x16x16xf32>
      %650 = arith.addf %649, %648 : vector<1x16x16xf32>
      %651 = arith.divf %649, %650 : vector<1x16x16xf32>
      %652 = vector.extract_strided_slice %651 {offsets = [0, 0, 0], sizes = [1, 1, 16], strides = [1, 1, 1]} : vector<1x16x16xf32> to vector<1x1x16xf32>
      %653 = vector.shape_cast %652 : vector<1x1x16xf32> to vector<1x16xf32>
      %c0_432 = arith.constant 0 : index
      %c0_433 = arith.constant 0 : index
      %c0_434 = arith.constant 0 : index
      %654 = vector.load %arg4[%c0_432, %c0_433, %c0_434] : memref<1x1x256xf32, #tpu.memory_space<vmem>>, vector<1x1x16xf32>
      %655 = vector.shape_cast %654 : vector<1x1x16xf32> to vector<1x16xf32>
      %656 = vector.shape_cast %653 : vector<1x16xf32> to vector<1x1x16xf32>
      tpu.vector_store %arg4[%c0_432, %c0_433, %c0_434], %656 {strides = array<i32>} : memref<1x1x256xf32, #tpu.memory_space<vmem>>, vector<1x1x16xf32>,
      %657 = vector.extract_strided_slice %651 {offsets = [0, 1, 0], sizes = [1, 1, 16], strides = [1, 1, 1]} : vector<1x16x16xf32> to vector<1x1x16xf32>
      %658 = vector.shape_cast %657 : vector<1x1x16xf32> to vector<1x16xf32>
      %c0_435 = arith.constant 0 : index
      %c0_436 = arith.constant 0 : index
      %c16_437 = arith.constant 16 : index
      %659 = vector.load %arg4[%c0_435, %c0_436, %c16_437] : memref<1x1x256xf32, #tpu.memory_space<vmem>>, vector<1x1x16xf32>
      %660 = vector.shape_cast %659 : vector<1x1x16xf32> to vector<1x16xf32>
      %661 = vector.shape_cast %658 : vector<1x16xf32> to vector<1x1x16xf32>
      tpu.vector_store %arg4[%c0_435, %c0_436, %c16_437], %661 {strides = array<i32>} : memref<1x1x256xf32, #tpu.memory_space<vmem>>, vector<1x1x16xf32>,
      %662 = vector.extract_strided_slice %651 {offsets = [0, 2, 0], sizes = [1, 1, 16], strides = [1, 1, 1]} : vector<1x16x16xf32> to vector<1x1x16xf32>
      %663 = vector.shape_cast %662 : vector<1x1x16xf32> to vector<1x16xf32>
      %c0_438 = arith.constant 0 : index
      %c0_439 = arith.constant 0 : index
      %c32_440 = arith.constant 32 : index
      %664 = vector.load %arg4[%c0_438, %c0_439, %c32_440] : memref<1x1x256xf32, #tpu.memory_space<vmem>>, vector<1x1x16xf32>
      %665 = vector.shape_cast %664 : vector<1x1x16xf32> to vector<1x16xf32>
      %666 = vector.shape_cast %663 : vector<1x16xf32> to vector<1x1x16xf32>
      tpu.vector_store %arg4[%c0_438, %c0_439, %c32_440], %666 {strides = array<i32>} : memref<1x1x256xf32, #tpu.memory_space<vmem>>, vector<1x1x16xf32>,
      %667 = vector.extract_strided_slice %651 {offsets = [0, 3, 0], sizes = [1, 1, 16], strides = [1, 1, 1]} : vector<1x16x16xf32> to vector<1x1x16xf32>
      %668 = vector.shape_cast %667 : vector<1x1x16xf32> to vector<1x16xf32>
      %c0_441 = arith.constant 0 : index
      %c0_442 = arith.constant 0 : index
      %c48_443 = arith.constant 48 : index
      %669 = vector.load %arg4[%c0_441, %c0_442, %c48_443] : memref<1x1x256xf32, #tpu.memory_space<vmem>>, vector<1x1x16xf32>
      %670 = vector.shape_cast %669 : vector<1x1x16xf32> to vector<1x16xf32>
      %671 = vector.shape_cast %668 : vector<1x16xf32> to vector<1x1x16xf32>
      tpu.vector_store %arg4[%c0_441, %c0_442, %c48_443], %671 {strides = array<i32>} : memref<1x1x256xf32, #tpu.memory_space<vmem>>, vector<1x1x16xf32>,
      %672 = vector.extract_strided_slice %651 {offsets = [0, 4, 0], sizes = [1, 1, 16], strides = [1, 1, 1]} : vector<1x16x16xf32> to vector<1x1x16xf32>
      %673 = vector.shape_cast %672 : vector<1x1x16xf32> to vector<1x16xf32>
      %c0_444 = arith.constant 0 : index
      %c0_445 = arith.constant 0 : index
      %c64_446 = arith.constant 64 : index
      %674 = vector.load %arg4[%c0_444, %c0_445, %c64_446] : memref<1x1x256xf32, #tpu.memory_space<vmem>>, vector<1x1x16xf32>
      %675 = vector.shape_cast %674 : vector<1x1x16xf32> to vector<1x16xf32>
      %676 = vector.shape_cast %673 : vector<1x16xf32> to vector<1x1x16xf32>
      tpu.vector_store %arg4[%c0_444, %c0_445, %c64_446], %676 {strides = array<i32>} : memref<1x1x256xf32, #tpu.memory_space<vmem>>, vector<1x1x16xf32>,
      %677 = vector.extract_strided_slice %651 {offsets = [0, 5, 0], sizes = [1, 1, 16], strides = [1, 1, 1]} : vector<1x16x16xf32> to vector<1x1x16xf32>
      %678 = vector.shape_cast %677 : vector<1x1x16xf32> to vector<1x16xf32>
      %c0_447 = arith.constant 0 : index
      %c0_448 = arith.constant 0 : index
      %c80_449 = arith.constant 80 : index
      %679 = vector.load %arg4[%c0_447, %c0_448, %c80_449] : memref<1x1x256xf32, #tpu.memory_space<vmem>>, vector<1x1x16xf32>
      %680 = vector.shape_cast %679 : vector<1x1x16xf32> to vector<1x16xf32>
      %681 = vector.shape_cast %678 : vector<1x16xf32> to vector<1x1x16xf32>
      tpu.vector_store %arg4[%c0_447, %c0_448, %c80_449], %681 {strides = array<i32>} : memref<1x1x256xf32, #tpu.memory_space<vmem>>, vector<1x1x16xf32>,
      %682 = vector.extract_strided_slice %651 {offsets = [0, 6, 0], sizes = [1, 1, 16], strides = [1, 1, 1]} : vector<1x16x16xf32> to vector<1x1x16xf32>
      %683 = vector.shape_cast %682 : vector<1x1x16xf32> to vector<1x16xf32>
      %c0_450 = arith.constant 0 : index
      %c0_451 = arith.constant 0 : index
      %c96_452 = arith.constant 96 : index
      %684 = vector.load %arg4[%c0_450, %c0_451, %c96_452] : memref<1x1x256xf32, #tpu.memory_space<vmem>>, vector<1x1x16xf32>
      %685 = vector.shape_cast %684 : vector<1x1x16xf32> to vector<1x16xf32>
      %686 = vector.shape_cast %683 : vector<1x16xf32> to vector<1x1x16xf32>
      tpu.vector_store %arg4[%c0_450, %c0_451, %c96_452], %686 {strides = array<i32>} : memref<1x1x256xf32, #tpu.memory_space<vmem>>, vector<1x1x16xf32>,
      %687 = vector.extract_strided_slice %651 {offsets = [0, 7, 0], sizes = [1, 1, 16], strides = [1, 1, 1]} : vector<1x16x16xf32> to vector<1x1x16xf32>
      %688 = vector.shape_cast %687 : vector<1x1x16xf32> to vector<1x16xf32>
      %c0_453 = arith.constant 0 : index
      %c0_454 = arith.constant 0 : index
      %c112 = arith.constant 112 : index
      %689 = vector.load %arg4[%c0_453, %c0_454, %c112] : memref<1x1x256xf32, #tpu.memory_space<vmem>>, vector<1x1x16xf32>
      %690 = vector.shape_cast %689 : vector<1x1x16xf32> to vector<1x16xf32>
      %691 = vector.shape_cast %688 : vector<1x16xf32> to vector<1x1x16xf32>
      tpu.vector_store %arg4[%c0_453, %c0_454, %c112], %691 {strides = array<i32>} : memref<1x1x256xf32, #tpu.memory_space<vmem>>, vector<1x1x16xf32>,
      %692 = vector.extract_strided_slice %651 {offsets = [0, 8, 0], sizes = [1, 1, 16], strides = [1, 1, 1]} : vector<1x16x16xf32> to vector<1x1x16xf32>
      %693 = vector.shape_cast %692 : vector<1x1x16xf32> to vector<1x16xf32>
      %c0_455 = arith.constant 0 : index
      %c0_456 = arith.constant 0 : index
      %c128 = arith.constant 128 : index
      %694 = vector.load %arg4[%c0_455, %c0_456, %c128] : memref<1x1x256xf32, #tpu.memory_space<vmem>>, vector<1x1x16xf32>
      %695 = vector.shape_cast %694 : vector<1x1x16xf32> to vector<1x16xf32>
      %696 = vector.shape_cast %693 : vector<1x16xf32> to vector<1x1x16xf32>
      tpu.vector_store %arg4[%c0_455, %c0_456, %c128], %696 {strides = array<i32>} : memref<1x1x256xf32, #tpu.memory_space<vmem>>, vector<1x1x16xf32>,
      %697 = vector.extract_strided_slice %651 {offsets = [0, 9, 0], sizes = [1, 1, 16], strides = [1, 1, 1]} : vector<1x16x16xf32> to vector<1x1x16xf32>
      %698 = vector.shape_cast %697 : vector<1x1x16xf32> to vector<1x16xf32>
      %c0_457 = arith.constant 0 : index
      %c0_458 = arith.constant 0 : index
      %c144 = arith.constant 144 : index
      %699 = vector.load %arg4[%c0_457, %c0_458, %c144] : memref<1x1x256xf32, #tpu.memory_space<vmem>>, vector<1x1x16xf32>
      %700 = vector.shape_cast %699 : vector<1x1x16xf32> to vector<1x16xf32>
      %701 = vector.shape_cast %698 : vector<1x16xf32> to vector<1x1x16xf32>
      tpu.vector_store %arg4[%c0_457, %c0_458, %c144], %701 {strides = array<i32>} : memref<1x1x256xf32, #tpu.memory_space<vmem>>, vector<1x1x16xf32>,
      %702 = vector.extract_strided_slice %651 {offsets = [0, 10, 0], sizes = [1, 1, 16], strides = [1, 1, 1]} : vector<1x16x16xf32> to vector<1x1x16xf32>
      %703 = vector.shape_cast %702 : vector<1x1x16xf32> to vector<1x16xf32>
      %c0_459 = arith.constant 0 : index
      %c0_460 = arith.constant 0 : index
      %c160 = arith.constant 160 : index
      %704 = vector.load %arg4[%c0_459, %c0_460, %c160] : memref<1x1x256xf32, #tpu.memory_space<vmem>>, vector<1x1x16xf32>
      %705 = vector.shape_cast %704 : vector<1x1x16xf32> to vector<1x16xf32>
      %706 = vector.shape_cast %703 : vector<1x16xf32> to vector<1x1x16xf32>
      tpu.vector_store %arg4[%c0_459, %c0_460, %c160], %706 {strides = array<i32>} : memref<1x1x256xf32, #tpu.memory_space<vmem>>, vector<1x1x16xf32>,
      %707 = vector.extract_strided_slice %651 {offsets = [0, 11, 0], sizes = [1, 1, 16], strides = [1, 1, 1]} : vector<1x16x16xf32> to vector<1x1x16xf32>
      %708 = vector.shape_cast %707 : vector<1x1x16xf32> to vector<1x16xf32>
      %c0_461 = arith.constant 0 : index
      %c0_462 = arith.constant 0 : index
      %c176 = arith.constant 176 : index
      %709 = vector.load %arg4[%c0_461, %c0_462, %c176] : memref<1x1x256xf32, #tpu.memory_space<vmem>>, vector<1x1x16xf32>
      %710 = vector.shape_cast %709 : vector<1x1x16xf32> to vector<1x16xf32>
      %711 = vector.shape_cast %708 : vector<1x16xf32> to vector<1x1x16xf32>
      tpu.vector_store %arg4[%c0_461, %c0_462, %c176], %711 {strides = array<i32>} : memref<1x1x256xf32, #tpu.memory_space<vmem>>, vector<1x1x16xf32>,
      %712 = vector.extract_strided_slice %651 {offsets = [0, 12, 0], sizes = [1, 1, 16], strides = [1, 1, 1]} : vector<1x16x16xf32> to vector<1x1x16xf32>
      %713 = vector.shape_cast %712 : vector<1x1x16xf32> to vector<1x16xf32>
      %c0_463 = arith.constant 0 : index
      %c0_464 = arith.constant 0 : index
      %c192 = arith.constant 192 : index
      %714 = vector.load %arg4[%c0_463, %c0_464, %c192] : memref<1x1x256xf32, #tpu.memory_space<vmem>>, vector<1x1x16xf32>
      %715 = vector.shape_cast %714 : vector<1x1x16xf32> to vector<1x16xf32>
      %716 = vector.shape_cast %713 : vector<1x16xf32> to vector<1x1x16xf32>
      tpu.vector_store %arg4[%c0_463, %c0_464, %c192], %716 {strides = array<i32>} : memref<1x1x256xf32, #tpu.memory_space<vmem>>, vector<1x1x16xf32>,
      %717 = vector.extract_strided_slice %651 {offsets = [0, 13, 0], sizes = [1, 1, 16], strides = [1, 1, 1]} : vector<1x16x16xf32> to vector<1x1x16xf32>
      %718 = vector.shape_cast %717 : vector<1x1x16xf32> to vector<1x16xf32>
      %c0_465 = arith.constant 0 : index
      %c0_466 = arith.constant 0 : index
      %c208 = arith.constant 208 : index
      %719 = vector.load %arg4[%c0_465, %c0_466, %c208] : memref<1x1x256xf32, #tpu.memory_space<vmem>>, vector<1x1x16xf32>
      %720 = vector.shape_cast %719 : vector<1x1x16xf32> to vector<1x16xf32>
      %721 = vector.shape_cast %718 : vector<1x16xf32> to vector<1x1x16xf32>
      tpu.vector_store %arg4[%c0_465, %c0_466, %c208], %721 {strides = array<i32>} : memref<1x1x256xf32, #tpu.memory_space<vmem>>, vector<1x1x16xf32>,
      %722 = vector.extract_strided_slice %651 {offsets = [0, 14, 0], sizes = [1, 1, 16], strides = [1, 1, 1]} : vector<1x16x16xf32> to vector<1x1x16xf32>
      %723 = vector.shape_cast %722 : vector<1x1x16xf32> to vector<1x16xf32>
      %c0_467 = arith.constant 0 : index
      %c0_468 = arith.constant 0 : index
      %c224 = arith.constant 224 : index
      %724 = vector.load %arg4[%c0_467, %c0_468, %c224] : memref<1x1x256xf32, #tpu.memory_space<vmem>>, vector<1x1x16xf32>
      %725 = vector.shape_cast %724 : vector<1x1x16xf32> to vector<1x16xf32>
      %726 = vector.shape_cast %723 : vector<1x16xf32> to vector<1x1x16xf32>
      tpu.vector_store %arg4[%c0_467, %c0_468, %c224], %726 {strides = array<i32>} : memref<1x1x256xf32, #tpu.memory_space<vmem>>, vector<1x1x16xf32>,
      %727 = vector.extract_strided_slice %651 {offsets = [0, 15, 0], sizes = [1, 1, 16], strides = [1, 1, 1]} : vector<1x16x16xf32> to vector<1x1x16xf32>
      %728 = vector.shape_cast %727 : vector<1x1x16xf32> to vector<1x16xf32>
      %c0_469 = arith.constant 0 : index
      %c0_470 = arith.constant 0 : index
      %c240 = arith.constant 240 : index
      %729 = vector.load %arg4[%c0_469, %c0_470, %c240] : memref<1x1x256xf32, #tpu.memory_space<vmem>>, vector<1x1x16xf32>
      %730 = vector.shape_cast %729 : vector<1x1x16xf32> to vector<1x16xf32>
      %731 = vector.shape_cast %728 : vector<1x16xf32> to vector<1x1x16xf32>
      tpu.vector_store %arg4[%c0_469, %c0_470, %c240], %731 {strides = array<i32>} : memref<1x1x256xf32, #tpu.memory_space<vmem>>, vector<1x1x16xf32>,
    } else {
    }
    return
  }
  func.func @transform_0(%arg0: i32, %arg1: i32) -> i32 {
    %c0_i32 = arith.constant 0 : i32
    %c0_i32_0 = arith.constant 0 : i32
    return %c0_i32 : i32
  }
  func.func @transform_1(%arg0: i32, %arg1: i32) -> (i32, i32, i32) {
    %c0_i32 = arith.constant 0 : i32
    %c0_i32_0 = arith.constant 0 : i32
    return %arg0, %arg1, %c0_i32 : i32, i32, i32
  }
  func.func @transform_2(%arg0: i32, %arg1: i32) -> (i32, i32, i32) {
    %c0_i32 = arith.constant 0 : i32
    %c0_i32_0 = arith.constant 0 : i32
    %c0_i32_1 = arith.constant 0 : i32
    return %arg0, %c0_i32, %c0_i32_0 : i32, i32, i32
  }
}

</mosaic_0001>

<llo_original>
// kernel: tpu_custom_call.1
$region0: #{tpu_custom_call.1}
  #allocation0 [shape = 'u32[]', space=smem, size = 0x4, offset = 0x4, fixed_abs, tag = 'smem constant byte address 0x4 - core index']
  #allocation1 [shape = 'u32[144,128]{1,0:T(1,128)}', space=vmem, size = 0x12000, scoped, tag = 'internal scratch']
  #allocation2 [shape = 'f32[1,256]{1,0:T(1,128)}', space=vmem, size = 0x400, scoped, tag = 'scratch operand']
  #allocation3 [shape = 'f32[1,256]{1,0:T(1,128)}', space=vmem, size = 0x400, scoped, tag = 'scratch operand']
  #allocation4 [shape = 'f32[1,22,22]{2,1,0:T(8,128)}', space=vmem, size = 0x3000, scoped, tag = 'scratch operand']
  #allocation5 [shape = 'f32[1,22,22]{2,1,0:T(8,128)}', space=vmem, size = 0x3000, scoped, tag = 'scratch operand']
  %s0 = inlined_call_operand.hbm [shape: f32[98], index: 0, kind: input, shape index: {}]
  %s1 = inlined_call_operand.hbm [shape: f32[2,4,256], index: 1, kind: input, shape index: {}]
  %s2 = inlined_call_operand.hbm [shape: f32[2,1,256], index: 2, kind: output, shape index: {}]
  %s3 = sld [smem:[#allocation0]]
  $region61: #{tpu_custom_call.1} parent=0
    _
  %s5 = ssub.s32 1, %s3
  %s6 = scalar_select 0, %s5, %s3
  $region1: #{tpu_custom_call.1} parent=0
    #allocation6 [shape = 'u8[512]{0}', space=smem, size = 0x200, scoped, tag = 'input window, operand 0, single buffered']
    #allocation7 [shape = 's32[2]{0}', space=sflag, size = 0x8, scoped, tag = 'scoped memory for tpu_custom_call.1']
    #allocation8 [shape = 's32[2]{0}', space=sflag, size = 0x8, scoped, tag = 'scoped memory for tpu_custom_call.1']
    #allocation9 [shape = 's32[2]{0}', space=sflag, size = 0x8, scoped, tag = 'scoped memory for tpu_custom_call.1']
    #allocation10 [shape = 'u8[8192]{0}', space=vmem, size = 0x2000, scoped, tag = 'input window, operand 1']
    #allocation11 [shape = 'u8[2048]{0}', space=vmem, size = 0x800, scoped, tag = 'output window, operand 0']
    %7 = vsyncpa [#allocation9], 0
    %8 = vsyncpa [#allocation7], 0
    %s9 = scalar_lea.sflag [#allocation7], 1
    %10 = vsyncpa %s9, 0
    %11 = vsyncpa [#allocation8], 0
    %s12 = scalar_lea.sflag [#allocation8], 1
    %13 = vsyncpa %s12, 0
    loop: start=0, step=1, limit=4
    $region2: #{tpu_custom_call.1} parent=1 // loop_pre_header
      _
    $region3: #{tpu_custom_call.1} parent=1 // loop_header
      %s15 = sphi 0, %s19
      %p16 = scmp.ge.s32.totalorder %s15, 4
      %s22 = sphi 0, %s34
      %s23 = sphi 0, %s30
      %s24 = sphi 0, %s22
      %s25 = sphi 0, %s23
      %s26 = sphi 0, %s24
      %s27 = sphi 0, %s25
      %s35 = sphi 0, %s35
      %s37 = sphi 0, %s35
      %s38 = sphi 0, %s37
      %s52 = sphi 0, %s38
      %s60 = sphi 0, %s62
      %s63 = sphi 0, %s60
      %s64 = sphi 0, %s63
      %s80 = sphi 0, %s64
      %s86 = sphi 0, %s88
      %s89 = sphi 0, %s86
      %s90 = sphi 0, %s89
      %s106 = sphi 0, %s90
    $region4: #{tpu_custom_call.1} parent=1 // loop_header_branch
      %18 = sbr.rel (%p16) target = $region8
    $region5: #{tpu_custom_call.1} parent=1 // loop_body
      %s20 = ssub.s32 %s15, 1
      %s21 = ssub.s32 %s15, 2
      %s28 = sadd.s32 1, %s23
      %p29 = scmp.ge.s32.totalorder %s28, 1
      %s30 = scalar_select %p29, 0, %s28
      %s31 = sadd.s32 1, %s22
      %s32 = scalar_select %p29, %s31, %s22
      %p33 = scmp.ge.s32.totalorder %s32, 2
      %s34 = scalar_select %p33, 0, %s32
      %s36 = sadd.s32 %s35, 1
      %p39 = scmp.eq.s32.totalorder %s15, 1
      %p40 = scmp.ne.s32.totalorder %s35, %s37
      %p41 = scmp.eq.s32.totalorder %s15, 0
      %p42 = por %p40, %p41
      %p43 = scmp.ne.s32.totalorder %s35, %s37
      %p44 = scmp.eq.s32.totalorder %s20, 1
      %p45 = por %p43, %p44
      %p46 = scmp.ne.s32.totalorder %s37, %s38
      %p47 = scmp.eq.s32.totalorder %s20, 0
      %p48 = por %p46, %p47
      %p49 = scmp.ne.s32.totalorder %s37, %s38
      %p50 = scmp.eq.s32.totalorder %s21, 1
      %p51 = por %p49, %p50
      %p53 = scmp.ne.s32.totalorder %s38, %s52
      %p54 = scmp.eq.s32.totalorder %s21, 0
      %p55 = por %p53, %p54
      %s56 = ssub.s32 %s22, %s34
      %s57 = ssub.s32 %s23, %s30
      %s58 = sor.u32 %s56, %s57
      %p59 = scmp.eq.s32.totalorder %s58, 0
      %s61 = sadd.s32 %s60, 1
      %s62 = scalar_select %p59, %s60, %s61
      %p65 = pneg %p59
      %p66 = scmp.eq.s32.totalorder %s15, 1
      %p67 = por %p65, %p66
      %p68 = scmp.ne.s32.totalorder %s60, %s63
      %p69 = scmp.eq.s32.totalorder %s15, 0
      %p70 = por %p68, %p69
      %p71 = scmp.ne.s32.totalorder %s60, %s63
      %p72 = scmp.eq.s32.totalorder %s20, 1
      %p73 = por %p71, %p72
      %p74 = scmp.ne.s32.totalorder %s63, %s64
      %p75 = scmp.eq.s32.totalorder %s20, 0
      %p76 = por %p74, %p75
      %p77 = scmp.ne.s32.totalorder %s63, %s64
      %p78 = scmp.eq.s32.totalorder %s21, 1
      %p79 = por %p77, %p78
      %p81 = scmp.ne.s32.totalorder %s64, %s80
      %p82 = scmp.eq.s32.totalorder %s21, 0
      %p83 = por %p81, %p82
      %s84 = ssub.s32 %s22, %s34
      %p85 = scmp.eq.s32.totalorder %s84, 0
      %s87 = sadd.s32 %s86, 1
      %s88 = scalar_select %p85, %s86, %s87
      %p91 = pneg %p85
      %p92 = scmp.eq.s32.totalorder %s15, 1
      %p93 = por %p91, %p92
      %p94 = scmp.ne.s32.totalorder %s86, %s89
      %p95 = scmp.eq.s32.totalorder %s15, 0
      %p96 = por %p94, %p95
      %p97 = scmp.ne.s32.totalorder %s86, %s89
      %p98 = scmp.eq.s32.totalorder %s20, 1
      %p99 = por %p97, %p98
      %p100 = scmp.ne.s32.totalorder %s89, %s90
      %p101 = scmp.eq.s32.totalorder %s20, 0
      %p102 = por %p100, %p101
      %p103 = scmp.ne.s32.totalorder %s89, %s90
      %p104 = scmp.eq.s32.totalorder %s21, 1
      %p105 = por %p103, %p104
      %p107 = scmp.ne.s32.totalorder %s90, %s106
      %p108 = scmp.eq.s32.totalorder %s21, 0
      %p109 = por %p107, %p108
      %p110 = scmp.le.s32.totalorder 1, %s15
      %p111 = scmp.lt.s32.totalorder %s15, 3
      %p112 = pnand %p110, %p111
      %p113 = pneg %p112
      // Predicated region
      $region9: #{tpu_custom_call.1} parent=5 // pred_check
        _
      $region10: #{tpu_custom_call.1} parent=5 // pred_check_branch
        %115 = sbr.rel (%p112) target = $region12
      $region11: #{tpu_custom_call.1} parent=5 // pred_region
        %s116 = ssub.s32 %s15, 1
        // Predicated region
        $region13: #{tpu_custom_call.1} parent=11 // pred_check
          %p117 = pneg %p48
        $region14: #{tpu_custom_call.1} parent=11 // pred_check_branch
          %119 = sbr.rel (%p117) target = $region16
        $region15: #{tpu_custom_call.1} parent=11 // pred_region
          %s121 = ssub.s32 16, 16
          %122 = vsyncadd [#allocation9], %s121
          %125 = dma.hbm_to_smem %s0, 16, [#allocation6], [#allocation9]
        $region16: #{tpu_custom_call.1} parent=11 // pred_fallthru
          _
      $region12: #{tpu_custom_call.1} parent=5 // pred_fallthru
        _
      %p126 = scmp.lt.s32.totalorder %s15, 2
      // Predicated region
      $region17: #{tpu_custom_call.1} parent=5 // pred_check
        %p127 = pneg %p126
      $region18: #{tpu_custom_call.1} parent=5 // pred_check_branch
        %129 = sbr.rel (%p127) target = $region20
      $region19: #{tpu_custom_call.1} parent=5 // pred_region
        // Predicated region
        $region21: #{tpu_custom_call.1} parent=19 // pred_check
          %p130 = pneg %p70
        $region22: #{tpu_custom_call.1} parent=19 // pred_check_branch
          %132 = sbr.rel (%p130) target = $region24
        $region23: #{tpu_custom_call.1} parent=19 // pred_region
          %s133 = sand.u32 %s60, 1
          %s134 = scalar_lea.sflag [#allocation7], %s133
          %s135 = sand.u32 %s60, 1
          %s136 = smul.addr %s135, 8
          %s137 = scalar_lea.vmem [#allocation10], %s136
          %s139 = ssub.s32 128, 128
          %140 = vsyncadd %s134, %s139
          %s141 = smul.addr %s23, 2
          %s142 = smul.addr %s22, 2
          %s143 = sadd.s32 %s141, %s142
          %s144 = smul.addr %s143, 64
          %s145 = scalar_lea.hbm %s1, %s144
          %s147 = sshll.u32 %s137, 4
          %s148 = int_to_ptr.vmem [resolvable:$true] %s147
          %150 = dma.hbm_to_vmem [thread:$0]  %s145, 128, %s148, %s134
        $region24: #{tpu_custom_call.1} parent=19 // pred_fallthru
          _
      $region20: #{tpu_custom_call.1} parent=5 // pred_fallthru
        _
      %p151 = scmp.le.s32.totalorder 1, %s15
      %p152 = scmp.lt.s32.totalorder %s15, 3
      %p153 = pnand %p151, %p152
      %p154 = pneg %p153
      // Predicated region
      $region25: #{tpu_custom_call.1} parent=5 // pred_check
        _
      $region26: #{tpu_custom_call.1} parent=5 // pred_check_branch
        %156 = sbr.rel (%p153) target = $region28
      $region27: #{tpu_custom_call.1} parent=5 // pred_region
        %s157 = ssub.s32 %s15, 1
        // Predicated region
        $region29: #{tpu_custom_call.1} parent=27 // pred_check
          %p158 = pneg %p48
        $region30: #{tpu_custom_call.1} parent=27 // pred_check_branch
          %160 = sbr.rel (%p158) target = $region32
        $region31: #{tpu_custom_call.1} parent=27 // pred_region
          %161 = dma.done [#allocation9], 16
        $region32: #{tpu_custom_call.1} parent=27 // pred_fallthru
          _
        %s162 = sand.u32 %s63, 1
        %s163 = scalar_lea.sflag [#allocation7], %s162
        %s164 = sand.u32 %s63, 1
        %s165 = smul.addr %s164, 8
        %s166 = scalar_lea.vmem [#allocation10], %s165
        // Predicated region
        $region33: #{tpu_custom_call.1} parent=27 // pred_check
          %p167 = pneg %p76
        $region34: #{tpu_custom_call.1} parent=27 // pred_check_branch
          %169 = sbr.rel (%p167) target = $region36
        $region35: #{tpu_custom_call.1} parent=27 // pred_region
          %170 = dma.done %s163, 128
        $region36: #{tpu_custom_call.1} parent=27 // pred_fallthru
          _
        %171 = sfence
        %p172 = pneg %p48
        %p173 = pneg %p45
        %s174 = sand.u32 %s63, 1
        %s175 = scalar_lea.sflag [#allocation7], %s174
        %s176 = sand.u32 %s63, 1
        %s177 = smul.addr %s176, 8
        %s178 = scalar_lea.vmem [#allocation10], %s177
        %p179 = pneg %p76
        %p180 = pneg %p73
        %p181 = pneg %p102
        %p182 = pneg %p99
        %s183 = sand.u32 %s89, 1
        %s184 = scalar_lea.sflag [#allocation8], %s183
        %s185 = sand.u32 %s89, 1
        %s186 = smul.addr %s185, 2
        %s187 = scalar_lea.vmem [#allocation11], %s186
        %p188 = scmp.eq.s32.totalorder %s25, 0
        // Predicated region
        $region37: #{tpu_custom_call.1} parent=27 // pred_check
          %p189 = pneg %p188
        $region38: #{tpu_custom_call.1} parent=27 // pred_check_branch
          %191 = sbr.rel (%p189) target = $region40
        $region39: #{tpu_custom_call.1} parent=27 // pred_region
          %v192 = vlaneseq
          %vm193 = vcmp.ge.s32.totalorder %v192, 0
          %vm194 = vcmp.lt.s32.totalorder %v192, 256
          %vm195 = vmand %vm193, %vm194
          %196 = vst.msk [vmem:[#allocation2] sm:$0x3] %vm195, 0.0
          %197 = vst.msk [vmem:[#allocation3] sm:$0x3] %vm195, -inf
        $region40: #{tpu_custom_call.1} parent=27 // pred_fallthru
          _
        %v198 = vld [vmem:[#allocation2] sm:$0x3]
        %v199 = vld [vmem:[#allocation3] sm:$0x3]
        %v200 = vld [vmem:[%s166] sm:$0xff]
        %v202 = vcombine.high %v200, %v200
        %vm204 = vcmask 1043456
        %v205 = vsel %vm204, %v200, 0.0
        %v206 = vrot.slane %v205, 4
        %v207 = vadd.f32 %v205, %v206
        %v208 = vrot.slane %v207, 2
        %v209 = vadd.f32 %v207, %v208
        %v210 = vrot.slane %v209, 1
        %v211 = vadd.f32 %v209, %v210
        %v212 = vsel %vm204, %v202, 0.0
        %v213 = vrot.slane %v212, 4
        %v214 = vadd.f32 %v212, %v213
        %v215 = vrot.slane %v214, 2
        %v216 = vadd.f32 %v214, %v215
        %v217 = vrot.slane %v216, 1
        %v218 = vadd.f32 %v216, %v217
        %v221 = vcombine.low %v211, %v218
        %v223 = vunpack.c.l.s4 1966171168
        %v224 = vunpack.c.0.s8 %v223
        %v225 = vlaneseq
        %v226 = vshrl.u32 %v225, 7
        %v227 = vsub.s32 %v224, %v226
        %v228 = vrot.slane %v221, %v227
        %v230 = vunpack.c.l.s4 1966171168
        %v231 = vunpack.c.0.s8 %v230
        %v232 = vlaneseq
        %v233 = vshrl.u32 %v232, 7
        %v234 = vsub.s32 %v231, %v233
        %v235 = vrot.slane %v228, %v234
        %v237 = vadd.f32 %v198, %v235
        %v238 = vsel %vm204, %v200, -inf
        %v239 = vrot.slane %v238, 4
        %v240 = vmax.f32 %v238, %v239
        %v241 = vrot.slane %v240, 2
        %v242 = vmax.f32 %v240, %v241
        %v243 = vrot.slane %v242, 1
        %v244 = vmax.f32 %v242, %v243
        %v245 = vsel %vm204, %v202, -inf
        %v246 = vrot.slane %v245, 4
        %v247 = vmax.f32 %v245, %v246
        %v248 = vrot.slane %v247, 2
        %v249 = vmax.f32 %v247, %v248
        %v250 = vrot.slane %v249, 1
        %v251 = vmax.f32 %v249, %v250
        %v254 = vcombine.low %v244, %v251
        %v256 = vunpack.c.l.s4 1966171168
        %v257 = vunpack.c.0.s8 %v256
        %v258 = vlaneseq
        %v259 = vshrl.u32 %v258, 7
        %v260 = vsub.s32 %v257, %v259
        %v261 = vrot.slane %v254, %v260
        %v263 = vunpack.c.l.s4 1966171168
        %v264 = vunpack.c.0.s8 %v263
        %v265 = vlaneseq
        %v266 = vshrl.u32 %v265, 7
        %v267 = vsub.s32 %v264, %v266
        %v268 = vrot.slane %v261, %v267
        %v270 = vmax.f32 %v199, %v268
        %p271 = scmp.ne.s32.totalorder %s25, 0
        // Predicated region
        $region41: #{tpu_custom_call.1} parent=27 // pred_check
          %p272 = pneg %p271
        $region42: #{tpu_custom_call.1} parent=27 // pred_check_branch
          %274 = sbr.rel (%p272) target = $region44
        $region43: #{tpu_custom_call.1} parent=27 // pred_region
          %v275 = vlaneseq
          %vm276 = vcmp.ge.s32.totalorder %v275, 0
          %vm277 = vcmp.lt.s32.totalorder %v275, 256
          %vm278 = vmand %vm276, %vm277
          %279 = vst.msk [vmem:[#allocation2] sm:$0x3] %vm278, %v237
          %280 = vst.msk [vmem:[#allocation3] sm:$0x3] %vm278, %v270
        $region44: #{tpu_custom_call.1} parent=27 // pred_fallthru
          _
        // Predicated region
        $region45: #{tpu_custom_call.1} parent=27 // pred_check
          %p281 = pneg %p188
        $region46: #{tpu_custom_call.1} parent=27 // pred_check_branch
          %283 = sbr.rel (%p281) target = $region48
        $region47: #{tpu_custom_call.1} parent=27 // pred_region
          %v284 = vmul.f32 %v237, 0.25
          %vm285 = vcmask 174080
          %286 = vst.msk [vmem:[#allocation4] sm:$0x7] %vm285, 0.0
          %287 = vst.msk [vmem:[#allocation4 + $0x13] sm:$0x7] %vm285, 0.0
          %vm288 = vcmask 23552
          %289 = vst.msk [vmem:[#allocation4 + $0x3] sm:$0xff] %vm288, 0.0
          %290 = vst.msk [vmem:[#allocation4 + $0xb] sm:$0xff] %vm288, 0.0
          %vm291 = vcmask 179352
          %292 = vst.msk [vmem:[#allocation4 + $0x3] sm:$0xff] %vm291, 0.0
          %293 = vst.msk [vmem:[#allocation4 + $0xb] sm:$0xff] %vm291, 0.0
          %294 = vst.msk [vmem:[#allocation5] sm:$0x7] %vm285, 0.0
          %295 = vst.msk [vmem:[#allocation5 + $0x13] sm:$0x7] %vm285, 0.0
          %296 = vst.msk [vmem:[#allocation5 + $0x3] sm:$0xff] %vm288, 0.0
          %297 = vst.msk [vmem:[#allocation5 + $0xb] sm:$0xff] %vm288, 0.0
          %298 = vst.msk [vmem:[#allocation5 + $0x3] sm:$0xff] %vm291, 0.0
          %299 = vst.msk [vmem:[#allocation5 + $0xb] sm:$0xff] %vm291, 0.0
          %v301 = vlaneseq
          %v302 = vshrl.u32 %v301, 7
          %v303 = vsub.s32 0, %v302
          %v304 = vrot.slane %v284, %v303
          %305 = vrot.lane.b32.xlu0 %v304, 3
          %v306 = vpop.permute.xlu0 %305
          %vm308 = vcmask 147480
          %309 = vst.msk [vmem:[#allocation4 + $0x3] sm:$0x1] %vm308, %v306
          %v311 = vlaneseq
          %v312 = vshrl.u32 %v311, 7
          %v313 = vsub.s32 0, %v312
          %v314 = vrot.slane %v270, %v313
          %315 = vrot.lane.b32.xlu0 %v314, 3
          %v316 = vpop.permute.xlu0 %315
          %318 = vst.msk [vmem:[#allocation5 + $0x3] sm:$0x1] %vm308, %v316
          %319 = vrot.lane.b32.xlu0 %v304, 115
          %v320 = vpop.permute.xlu0 %319
          %322 = vst.msk [vmem:[#allocation4 + $0x4] sm:$0x1] %vm308, %v320
          %323 = vrot.lane.b32.xlu0 %v314, 115
          %v324 = vpop.permute.xlu0 %323
          %326 = vst.msk [vmem:[#allocation5 + $0x4] sm:$0x1] %vm308, %v324
          %327 = vrot.lane.b32.xlu0 %v304, 99
          %v328 = vpop.permute.xlu0 %327
          %330 = vst.msk [vmem:[#allocation4 + $0x5] sm:$0x1] %vm308, %v328
          %331 = vrot.lane.b32.xlu0 %v314, 99
          %v332 = vpop.permute.xlu0 %331
          %334 = vst.msk [vmem:[#allocation5 + $0x5] sm:$0x1] %vm308, %v332
          %335 = vrot.lane.b32.xlu0 %v304, 83
          %v336 = vpop.permute.xlu0 %335
          %338 = vst.msk [vmem:[#allocation4 + $0x6] sm:$0x1] %vm308, %v336
          %339 = vrot.lane.b32.xlu0 %v314, 83
          %v340 = vpop.permute.xlu0 %339
          %342 = vst.msk [vmem:[#allocation5 + $0x6] sm:$0x1] %vm308, %v340
          %343 = vrot.lane.b32.xlu0 %v304, 67
          %v344 = vpop.permute.xlu0 %343
          %346 = vst.msk [vmem:[#allocation4 + $0x7] sm:$0x1] %vm308, %v344
          %347 = vrot.lane.b32.xlu0 %v314, 67
          %v348 = vpop.permute.xlu0 %347
          %350 = vst.msk [vmem:[#allocation5 + $0x7] sm:$0x1] %vm308, %v348
          %351 = vrot.lane.b32.xlu0 %v304, 51
          %v352 = vpop.permute.xlu0 %351
          %354 = vst.msk [vmem:[#allocation4 + $0x8] sm:$0x1] %vm308, %v352
          %355 = vrot.lane.b32.xlu0 %v314, 51
          %v356 = vpop.permute.xlu0 %355
          %358 = vst.msk [vmem:[#allocation5 + $0x8] sm:$0x1] %vm308, %v356
          %359 = vrot.lane.b32.xlu0 %v304, 35
          %v360 = vpop.permute.xlu0 %359
          %362 = vst.msk [vmem:[#allocation4 + $0x9] sm:$0x1] %vm308, %v360
          %363 = vrot.lane.b32.xlu0 %v314, 35
          %v364 = vpop.permute.xlu0 %363
          %366 = vst.msk [vmem:[#allocation5 + $0x9] sm:$0x1] %vm308, %v364
          %367 = vrot.lane.b32.xlu0 %v304, 19
          %v368 = vpop.permute.xlu0 %367
          %370 = vst.msk [vmem:[#allocation4 + $0xa] sm:$0x1] %vm308, %v368
          %371 = vrot.lane.b32.xlu0 %v314, 19
          %v372 = vpop.permute.xlu0 %371
          %374 = vst.msk [vmem:[#allocation5 + $0xa] sm:$0x1] %vm308, %v372
          %v375 = vrot.slane %v284, 1
          %v376 = vlaneseq
          %v377 = vshrl.u32 %v376, 7
          %v378 = vsub.s32 0, %v377
          %v379 = vrot.slane %v375, %v378
          %380 = vrot.lane.b32.xlu0 %v379, 3
          %v381 = vpop.permute.xlu0 %380
          %383 = vst.msk [vmem:[#allocation4 + $0xb] sm:$0x1] %vm308, %v381
          %v384 = vrot.slane %v270, 1
          %v385 = vlaneseq
          %v386 = vshrl.u32 %v385, 7
          %v387 = vsub.s32 0, %v386
          %v388 = vrot.slane %v384, %v387
          %389 = vrot.lane.b32.xlu0 %v388, 3
          %v390 = vpop.permute.xlu0 %389
          %392 = vst.msk [vmem:[#allocation5 + $0xb] sm:$0x1] %vm308, %v390
          %393 = vrot.lane.b32.xlu0 %v284, 112
          %v394 = vpop.permute.xlu0 %393
          %v395 = vrot.slane %v394, 1
          %v396 = vlaneseq
          %v397 = vshrl.u32 %v396, 7
          %v398 = vsub.s32 0, %v397
          %v399 = vrot.slane %v395, %v398
          %400 = vrot.lane.b32.xlu0 %v399, 3
          %v401 = vpop.permute.xlu0 %400
          %403 = vst.msk [vmem:[#allocation4 + $0xc] sm:$0x1] %vm308, %v401
          %404 = vrot.lane.b32.xlu0 %v270, 112
          %v405 = vpop.permute.xlu0 %404
          %v406 = vrot.slane %v405, 1
          %v407 = vlaneseq
          %v408 = vshrl.u32 %v407, 7
          %v409 = vsub.s32 0, %v408
          %v410 = vrot.slane %v406, %v409
          %411 = vrot.lane.b32.xlu0 %v410, 3
          %v412 = vpop.permute.xlu0 %411
          %414 = vst.msk [vmem:[#allocation5 + $0xc] sm:$0x1] %vm308, %v412
          %415 = vrot.lane.b32.xlu0 %v284, 96
          %v416 = vpop.permute.xlu0 %415
          %v417 = vrot.slane %v416, 1
          %v418 = vlaneseq
          %v419 = vshrl.u32 %v418, 7
          %v420 = vsub.s32 0, %v419
          %v421 = vrot.slane %v417, %v420
          %422 = vrot.lane.b32.xlu0 %v421, 3
          %v423 = vpop.permute.xlu0 %422
          %425 = vst.msk [vmem:[#allocation4 + $0xd] sm:$0x1] %vm308, %v423
          %426 = vrot.lane.b32.xlu0 %v270, 96
          %v427 = vpop.permute.xlu0 %426
          %v428 = vrot.slane %v427, 1
          %v429 = vlaneseq
          %v430 = vshrl.u32 %v429, 7
          %v431 = vsub.s32 0, %v430
          %v432 = vrot.slane %v428, %v431
          %433 = vrot.lane.b32.xlu0 %v432, 3
          %v434 = vpop.permute.xlu0 %433
          %436 = vst.msk [vmem:[#allocation5 + $0xd] sm:$0x1] %vm308, %v434
          %437 = vrot.lane.b32.xlu0 %v284, 80
          %v438 = vpop.permute.xlu0 %437
          %v439 = vrot.slane %v438, 1
          %v440 = vlaneseq
          %v441 = vshrl.u32 %v440, 7
          %v442 = vsub.s32 0, %v441
          %v443 = vrot.slane %v439, %v442
          %444 = vrot.lane.b32.xlu0 %v443, 3
          %v445 = vpop.permute.xlu0 %444
          %447 = vst.msk [vmem:[#allocation4 + $0xe] sm:$0x1] %vm308, %v445
          %448 = vrot.lane.b32.xlu0 %v270, 80
          %v449 = vpop.permute.xlu0 %448
          %v450 = vrot.slane %v449, 1
          %v451 = vlaneseq
          %v452 = vshrl.u32 %v451, 7
          %v453 = vsub.s32 0, %v452
          %v454 = vrot.slane %v450, %v453
          %455 = vrot.lane.b32.xlu0 %v454, 3
          %v456 = vpop.permute.xlu0 %455
          %458 = vst.msk [vmem:[#allocation5 + $0xe] sm:$0x1] %vm308, %v456
          %459 = vrot.lane.b32.xlu0 %v284, 64
          %v460 = vpop.permute.xlu0 %459
          %v461 = vrot.slane %v460, 1
          %v462 = vlaneseq
          %v463 = vshrl.u32 %v462, 7
          %v464 = vsub.s32 0, %v463
          %v465 = vrot.slane %v461, %v464
          %466 = vrot.lane.b32.xlu0 %v465, 3
          %v467 = vpop.permute.xlu0 %466
          %469 = vst.msk [vmem:[#allocation4 + $0xf] sm:$0x1] %vm308, %v467
          %470 = vrot.lane.b32.xlu0 %v270, 64
          %v471 = vpop.permute.xlu0 %470
          %v472 = vrot.slane %v471, 1
          %v473 = vlaneseq
          %v474 = vshrl.u32 %v473, 7
          %v475 = vsub.s32 0, %v474
          %v476 = vrot.slane %v472, %v475
          %477 = vrot.lane.b32.xlu0 %v476, 3
          %v478 = vpop.permute.xlu0 %477
          %480 = vst.msk [vmem:[#allocation5 + $0xf] sm:$0x1] %vm308, %v478
          %481 = vrot.lane.b32.xlu0 %v284, 48
          %v482 = vpop.permute.xlu0 %481
          %v483 = vrot.slane %v482, 1
          %v484 = vlaneseq
          %v485 = vshrl.u32 %v484, 7
          %v486 = vsub.s32 0, %v485
          %v487 = vrot.slane %v483, %v486
          %488 = vrot.lane.b32.xlu0 %v487, 3
          %v489 = vpop.permute.xlu0 %488
          %491 = vst.msk [vmem:[#allocation4 + $0x10] sm:$0x1] %vm308, %v489
          %492 = vrot.lane.b32.xlu0 %v270, 48
          %v493 = vpop.permute.xlu0 %492
          %v494 = vrot.slane %v493, 1
          %v495 = vlaneseq
          %v496 = vshrl.u32 %v495, 7
          %v497 = vsub.s32 0, %v496
          %v498 = vrot.slane %v494, %v497
          %499 = vrot.lane.b32.xlu0 %v498, 3
          %v500 = vpop.permute.xlu0 %499
          %502 = vst.msk [vmem:[#allocation5 + $0x10] sm:$0x1] %vm308, %v500
          %503 = vrot.lane.b32.xlu0 %v284, 32
          %v504 = vpop.permute.xlu0 %503
          %v505 = vrot.slane %v504, 1
          %v506 = vlaneseq
          %v507 = vshrl.u32 %v506, 7
          %v508 = vsub.s32 0, %v507
          %v509 = vrot.slane %v505, %v508
          %510 = vrot.lane.b32.xlu0 %v509, 3
          %v511 = vpop.permute.xlu0 %510
          %513 = vst.msk [vmem:[#allocation4 + $0x11] sm:$0x1] %vm308, %v511
          %514 = vrot.lane.b32.xlu0 %v270, 32
          %v515 = vpop.permute.xlu0 %514
          %v516 = vrot.slane %v515, 1
          %v517 = vlaneseq
          %v518 = vshrl.u32 %v517, 7
          %v519 = vsub.s32 0, %v518
          %v520 = vrot.slane %v516, %v519
          %521 = vrot.lane.b32.xlu0 %v520, 3
          %v522 = vpop.permute.xlu0 %521
          %524 = vst.msk [vmem:[#allocation5 + $0x11] sm:$0x1] %vm308, %v522
          %525 = vrot.lane.b32.xlu0 %v284, 16
          %v526 = vpop.permute.xlu0 %525
          %v527 = vrot.slane %v526, 1
          %v528 = vlaneseq
          %v529 = vshrl.u32 %v528, 7
          %v530 = vsub.s32 0, %v529
          %v531 = vrot.slane %v527, %v530
          %532 = vrot.lane.b32.xlu0 %v531, 3
          %v533 = vpop.permute.xlu0 %532
          %535 = vst.msk [vmem:[#allocation4 + $0x12] sm:$0x1] %vm308, %v533
          %536 = vrot.lane.b32.xlu0 %v270, 16
          %v537 = vpop.permute.xlu0 %536
          %v538 = vrot.slane %v537, 1
          %v539 = vlaneseq
          %v540 = vshrl.u32 %v539, 7
          %v541 = vsub.s32 0, %v540
          %v542 = vrot.slane %v538, %v541
          %543 = vrot.lane.b32.xlu0 %v542, 3
          %v544 = vpop.permute.xlu0 %543
          %546 = vst.msk [vmem:[#allocation5 + $0x12] sm:$0x1] %vm308, %v544
          %s547 = sld [smem:[#allocation6]]
          %s548 = sld [smem:[#allocation6 + $0x31]]
          %v549 = vld [vmem:[#allocation4] sm:$0xff]
          %v550 = vld [vmem:[#allocation4 + $0x8] sm:$0xff]
          %v551 = vstv %s547
          %v552 = vmul.f32 %v551, %v549
          %v553 = vmul.f32 %v551, %v550
          %v554 = vadd.f32 %v552, 0.0
          %v555 = vadd.f32 %v553, 0.0
          %v556 = vld [vmem:[#allocation5] sm:$0xff]
          %v557 = vld [vmem:[#allocation5 + $0x8] sm:$0xff]
          %v558 = vstv %s548
          %v559 = vmul.f32 %v558, %v556
          %v560 = vmul.f32 %v558, %v557
          %v561 = vadd.f32 %v554, %v559
          %v562 = vadd.f32 %v555, %v560
          %s563 = sld [smem:[#allocation6 + $0x1]]
          %s564 = sld [smem:[#allocation6 + $0x32]]
          %v565 = vstv %s563
          %v566 = vmul.f32 %v565, %v549
          %v567 = vmul.f32 %v565, %v550
          %570 = vrot.lane.b32.xlu0 %v566, 127
          %v571 = vpop.permute.xlu0 %570
          %572 = vrot.lane.b32.xlu0 %v567, 127
          %v573 = vpop.permute.xlu0 %572
          %v576 = vadd.f32 %v561, %v571
          %v577 = vadd.f32 %v562, %v573
          %v578 = vstv %s564
          %v579 = vmul.f32 %v578, %v556
          %v580 = vmul.f32 %v578, %v557
          %583 = vrot.lane.b32.xlu0 %v579, 127
          %v584 = vpop.permute.xlu0 %583
          %585 = vrot.lane.b32.xlu0 %v580, 127
          %v586 = vpop.permute.xlu0 %585
          %v589 = vadd.f32 %v576, %v584
          %v590 = vadd.f32 %v577, %v586
          %s591 = sld [smem:[#allocation6 + $0x2]]
          %s592 = sld [smem:[#allocation6 + $0x33]]
          %v593 = vstv %s591
          %v594 = vmul.f32 %v593, %v549
          %v595 = vmul.f32 %v593, %v550
          %598 = vrot.lane.b32.xlu0 %v594, 126
          %v599 = vpop.permute.xlu0 %598
          %600 = vrot.lane.b32.xlu0 %v595, 126
          %v601 = vpop.permute.xlu0 %600
          %v604 = vadd.f32 %v589, %v599
          %v605 = vadd.f32 %v590, %v601
          %v606 = vstv %s592
          %v607 = vmul.f32 %v606, %v556
          %v608 = vmul.f32 %v606, %v557
          %611 = vrot.lane.b32.xlu0 %v607, 126
          %v612 = vpop.permute.xlu0 %611
          %613 = vrot.lane.b32.xlu0 %v608, 126
          %v614 = vpop.permute.xlu0 %613
          %v617 = vadd.f32 %v604, %v612
          %v618 = vadd.f32 %v605, %v614
          %s619 = sld [smem:[#allocation6 + $0x3]]
          %s620 = sld [smem:[#allocation6 + $0x34]]
          %v621 = vstv %s619
          %v622 = vmul.f32 %v621, %v549
          %v623 = vmul.f32 %v621, %v550
          %626 = vrot.lane.b32.xlu0 %v622, 125
          %v627 = vpop.permute.xlu0 %626
          %628 = vrot.lane.b32.xlu0 %v623, 125
          %v629 = vpop.permute.xlu0 %628
          %v632 = vadd.f32 %v617, %v627
          %v633 = vadd.f32 %v618, %v629
          %v634 = vstv %s620
          %v635 = vmul.f32 %v634, %v556
          %v636 = vmul.f32 %v634, %v557
          %639 = vrot.lane.b32.xlu0 %v635, 125
          %v640 = vpop.permute.xlu0 %639
          %641 = vrot.lane.b32.xlu0 %v636, 125
          %v642 = vpop.permute.xlu0 %641
          %v645 = vadd.f32 %v632, %v640
          %v646 = vadd.f32 %v633, %v642
          %s647 = sld [smem:[#allocation6 + $0x4]]
          %s648 = sld [smem:[#allocation6 + $0x35]]
          %v649 = vstv %s647
          %v650 = vmul.f32 %v649, %v549
          %v651 = vmul.f32 %v649, %v550
          %654 = vrot.lane.b32.xlu0 %v650, 124
          %v655 = vpop.permute.xlu0 %654
          %656 = vrot.lane.b32.xlu0 %v651, 124
          %v657 = vpop.permute.xlu0 %656
          %v660 = vadd.f32 %v645, %v655
          %v661 = vadd.f32 %v646, %v657
          %v662 = vstv %s648
          %v663 = vmul.f32 %v662, %v556
          %v664 = vmul.f32 %v662, %v557
          %667 = vrot.lane.b32.xlu0 %v663, 124
          %v668 = vpop.permute.xlu0 %667
          %669 = vrot.lane.b32.xlu0 %v664, 124
          %v670 = vpop.permute.xlu0 %669
          %v673 = vadd.f32 %v660, %v668
          %v674 = vadd.f32 %v661, %v670
          %s675 = sld [smem:[#allocation6 + $0x5]]
          %s676 = sld [smem:[#allocation6 + $0x36]]
          %v677 = vstv %s675
          %v678 = vmul.f32 %v677, %v549
          %v679 = vmul.f32 %v677, %v550
          %682 = vrot.lane.b32.xlu0 %v678, 123
          %v683 = vpop.permute.xlu0 %682
          %684 = vrot.lane.b32.xlu0 %v679, 123
          %v685 = vpop.permute.xlu0 %684
          %v688 = vadd.f32 %v673, %v683
          %v689 = vadd.f32 %v674, %v685
          %v690 = vstv %s676
          %v691 = vmul.f32 %v690, %v556
          %v692 = vmul.f32 %v690, %v557
          %695 = vrot.lane.b32.xlu0 %v691, 123
          %v696 = vpop.permute.xlu0 %695
          %697 = vrot.lane.b32.xlu0 %v692, 123
          %v698 = vpop.permute.xlu0 %697
          %v701 = vadd.f32 %v688, %v696
          %v702 = vadd.f32 %v689, %v698
          %s703 = sld [smem:[#allocation6 + $0x6]]
          %s704 = sld [smem:[#allocation6 + $0x37]]
          %v705 = vstv %s703
          %v706 = vmul.f32 %v705, %v549
          %v707 = vmul.f32 %v705, %v550
          %710 = vrot.lane.b32.xlu0 %v706, 122
          %v711 = vpop.permute.xlu0 %710
          %712 = vrot.lane.b32.xlu0 %v707, 122
          %v713 = vpop.permute.xlu0 %712
          %v716 = vadd.f32 %v701, %v711
          %v717 = vadd.f32 %v702, %v713
          %v718 = vstv %s704
          %v719 = vmul.f32 %v718, %v556
          %v720 = vmul.f32 %v718, %v557
          %723 = vrot.lane.b32.xlu0 %v719, 122
          %v724 = vpop.permute.xlu0 %723
          %725 = vrot.lane.b32.xlu0 %v720, 122
          %v726 = vpop.permute.xlu0 %725
          %v729 = vadd.f32 %v716, %v724
          %v730 = vadd.f32 %v717, %v726
          %s731 = sld [smem:[#allocation6 + $0x7]]
          %s732 = sld [smem:[#allocation6 + $0x38]]
          %v733 = vld [vmem:[#allocation4 + $0x1] sm:$0xff]
          %v734 = vld [vmem:[#allocation4 + $0x9] sm:$0xff]
          %v735 = vstv %s731
          %v736 = vmul.f32 %v735, %v733
          %v737 = vmul.f32 %v735, %v734
          %v738 = vadd.f32 %v729, %v736
          %v739 = vadd.f32 %v730, %v737
          %v740 = vld [vmem:[#allocation5 + $0x1] sm:$0xff]
          %v741 = vld [vmem:[#allocation5 + $0x9] sm:$0xff]
          %v742 = vstv %s732
          %v743 = vmul.f32 %v742, %v740
          %v744 = vmul.f32 %v742, %v741
          %v745 = vadd.f32 %v738, %v743
          %v746 = vadd.f32 %v739, %v744
          %s747 = sld [smem:[#allocation6 + $0x8]]
          %s748 = sld [smem:[#allocation6 + $0x39]]
          %v749 = vstv %s747
          %v750 = vmul.f32 %v749, %v733
          %v751 = vmul.f32 %v749, %v734
          %754 = vrot.lane.b32.xlu0 %v750, 127
          %v755 = vpop.permute.xlu0 %754
          %756 = vrot.lane.b32.xlu0 %v751, 127
          %v757 = vpop.permute.xlu0 %756
          %v760 = vadd.f32 %v745, %v755
          %v761 = vadd.f32 %v746, %v757
          %v762 = vstv %s748
          %v763 = vmul.f32 %v762, %v740
          %v764 = vmul.f32 %v762, %v741
          %767 = vrot.lane.b32.xlu0 %v763, 127
          %v768 = vpop.permute.xlu0 %767
          %769 = vrot.lane.b32.xlu0 %v764, 127
          %v770 = vpop.permute.xlu0 %769
          %v773 = vadd.f32 %v760, %v768
          %v774 = vadd.f32 %v761, %v770
          %s775 = sld [smem:[#allocation6 + $0x9]]
          %s776 = sld [smem:[#allocation6 + $0x3a]]
          %v777 = vstv %s775
          %v778 = vmul.f32 %v777, %v733
          %v779 = vmul.f32 %v777, %v734
          %782 = vrot.lane.b32.xlu0 %v778, 126
          %v783 = vpop.permute.xlu0 %782
          %784 = vrot.lane.b32.xlu0 %v779, 126
          %v785 = vpop.permute.xlu0 %784
          %v788 = vadd.f32 %v773, %v783
          %v789 = vadd.f32 %v774, %v785
          %v790 = vstv %s776
          %v791 = vmul.f32 %v790, %v740
          %v792 = vmul.f32 %v790, %v741
          %795 = vrot.lane.b32.xlu0 %v791, 126
          %v796 = vpop.permute.xlu0 %795
          %797 = vrot.lane.b32.xlu0 %v792, 126
          %v798 = vpop.permute.xlu0 %797
          %v801 = vadd.f32 %v788, %v796
          %v802 = vadd.f32 %v789, %v798
          %s803 = sld [smem:[#allocation6 + $0xa]]
          %s804 = sld [smem:[#allocation6 + $0x3b]]
          %v805 = vstv %s803
          %v806 = vmul.f32 %v805, %v733
          %v807 = vmul.f32 %v805, %v734
          %810 = vrot.lane.b32.xlu0 %v806, 125
          %v811 = vpop.permute.xlu0 %810
          %812 = vrot.lane.b32.xlu0 %v807, 125
          %v813 = vpop.permute.xlu0 %812
          %v816 = vadd.f32 %v801, %v811
          %v817 = vadd.f32 %v802, %v813
          %v818 = vstv %s804
          %v819 = vmul.f32 %v818, %v740
          %v820 = vmul.f32 %v818, %v741
          %823 = vrot.lane.b32.xlu0 %v819, 125
          %v824 = vpop.permute.xlu0 %823
          %825 = vrot.lane.b32.xlu0 %v820, 125
          %v826 = vpop.permute.xlu0 %825
          %v829 = vadd.f32 %v816, %v824
          %v830 = vadd.f32 %v817, %v826
          %s831 = sld [smem:[#allocation6 + $0xb]]
          %s832 = sld [smem:[#allocation6 + $0x3c]]
          %v833 = vstv %s831
          %v834 = vmul.f32 %v833, %v733
          %v835 = vmul.f32 %v833, %v734
          %838 = vrot.lane.b32.xlu0 %v834, 124
          %v839 = vpop.permute.xlu0 %838
          %840 = vrot.lane.b32.xlu0 %v835, 124
          %v841 = vpop.permute.xlu0 %840
          %v844 = vadd.f32 %v829, %v839
          %v845 = vadd.f32 %v830, %v841
          %v846 = vstv %s832
          %v847 = vmul.f32 %v846, %v740
          %v848 = vmul.f32 %v846, %v741
          %851 = vrot.lane.b32.xlu0 %v847, 124
          %v852 = vpop.permute.xlu0 %851
          %853 = vrot.lane.b32.xlu0 %v848, 124
          %v854 = vpop.permute.xlu0 %853
          %v857 = vadd.f32 %v844, %v852
          %v858 = vadd.f32 %v845, %v854
          %s859 = sld [smem:[#allocation6 + $0xc]]
          %s860 = sld [smem:[#allocation6 + $0x3d]]
          %v861 = vstv %s859
          %v862 = vmul.f32 %v861, %v733
          %v863 = vmul.f32 %v861, %v734
          %866 = vrot.lane.b32.xlu0 %v862, 123
          %v867 = vpop.permute.xlu0 %866
          %868 = vrot.lane.b32.xlu0 %v863, 123
          %v869 = vpop.permute.xlu0 %868
          %v872 = vadd.f32 %v857, %v867
          %v873 = vadd.f32 %v858, %v869
          %v874 = vstv %s860
          %v875 = vmul.f32 %v874, %v740
          %v876 = vmul.f32 %v874, %v741
          %879 = vrot.lane.b32.xlu0 %v875, 123
          %v880 = vpop.permute.xlu0 %879
          %881 = vrot.lane.b32.xlu0 %v876, 123
          %v882 = vpop.permute.xlu0 %881
          %v885 = vadd.f32 %v872, %v880
          %v886 = vadd.f32 %v873, %v882
          %s887 = sld [smem:[#allocation6 + $0xd]]
          %s888 = sld [smem:[#allocation6 + $0x3e]]
          %v889 = vstv %s887
          %v890 = vmul.f32 %v889, %v733
          %v891 = vmul.f32 %v889, %v734
          %894 = vrot.lane.b32.xlu0 %v890, 122
          %v895 = vpop.permute.xlu0 %894
          %896 = vrot.lane.b32.xlu0 %v891, 122
          %v897 = vpop.permute.xlu0 %896
          %v900 = vadd.f32 %v885, %v895
          %v901 = vadd.f32 %v886, %v897
          %v902 = vstv %s888
          %v903 = vmul.f32 %v902, %v740
          %v904 = vmul.f32 %v902, %v741
          %907 = vrot.lane.b32.xlu0 %v903, 122
          %v908 = vpop.permute.xlu0 %907
          %909 = vrot.lane.b32.xlu0 %v904, 122
          %v910 = vpop.permute.xlu0 %909
          %v913 = vadd.f32 %v900, %v908
          %v914 = vadd.f32 %v901, %v910
          %s915 = sld [smem:[#allocation6 + $0xe]]
          %s916 = sld [smem:[#allocation6 + $0x3f]]
          %v917 = vld [vmem:[#allocation4 + $0x2] sm:$0xff]
          %v918 = vld [vmem:[#allocation4 + $0xa] sm:$0xff]
          %v919 = vstv %s915
          %v920 = vmul.f32 %v919, %v917
          %v921 = vmul.f32 %v919, %v918
          %v922 = vadd.f32 %v913, %v920
          %v923 = vadd.f32 %v914, %v921
          %v924 = vld [vmem:[#allocation5 + $0x2] sm:$0xff]
          %v925 = vld [vmem:[#allocation5 + $0xa] sm:$0xff]
          %v926 = vstv %s916
          %v927 = vmul.f32 %v926, %v924
          %v928 = vmul.f32 %v926, %v925
          %v929 = vadd.f32 %v922, %v927
          %v930 = vadd.f32 %v923, %v928
          %s931 = sld [smem:[#allocation6 + $0xf]]
          %s932 = sld [smem:[#allocation6 + $0x40]]
          %v933 = vstv %s931
          %v934 = vmul.f32 %v933, %v917
          %v935 = vmul.f32 %v933, %v918
          %938 = vrot.lane.b32.xlu0 %v934, 127
          %v939 = vpop.permute.xlu0 %938
          %940 = vrot.lane.b32.xlu0 %v935, 127
          %v941 = vpop.permute.xlu0 %940
          %v944 = vadd.f32 %v929, %v939
          %v945 = vadd.f32 %v930, %v941
          %v946 = vstv %s932
          %v947 = vmul.f32 %v946, %v924
          %v948 = vmul.f32 %v946, %v925
          %951 = vrot.lane.b32.xlu0 %v947, 127
          %v952 = vpop.permute.xlu0 %951
          %953 = vrot.lane.b32.xlu0 %v948, 127
          %v954 = vpop.permute.xlu0 %953
          %v957 = vadd.f32 %v944, %v952
          %v958 = vadd.f32 %v945, %v954
          %s959 = sld [smem:[#allocation6 + $0x10]]
          %s960 = sld [smem:[#allocation6 + $0x41]]
          %v961 = vstv %s959
          %v962 = vmul.f32 %v961, %v917
          %v963 = vmul.f32 %v961, %v918
          %966 = vrot.lane.b32.xlu0 %v962, 126
          %v967 = vpop.permute.xlu0 %966
          %968 = vrot.lane.b32.xlu0 %v963, 126
          %v969 = vpop.permute.xlu0 %968
          %v972 = vadd.f32 %v957, %v967
          %v973 = vadd.f32 %v958, %v969
          %v974 = vstv %s960
          %v975 = vmul.f32 %v974, %v924
          %v976 = vmul.f32 %v974, %v925
          %979 = vrot.lane.b32.xlu0 %v975, 126
          %v980 = vpop.permute.xlu0 %979
          %981 = vrot.lane.b32.xlu0 %v976, 126
          %v982 = vpop.permute.xlu0 %981
          %v985 = vadd.f32 %v972, %v980
          %v986 = vadd.f32 %v973, %v982
          %s987 = sld [smem:[#allocation6 + $0x11]]
          %s988 = sld [smem:[#allocation6 + $0x42]]
          %v989 = vstv %s987
          %v990 = vmul.f32 %v989, %v917
          %v991 = vmul.f32 %v989, %v918
          %994 = vrot.lane.b32.xlu0 %v990, 125
          %v995 = vpop.permute.xlu0 %994
          %996 = vrot.lane.b32.xlu0 %v991, 125
          %v997 = vpop.permute.xlu0 %996
          %v1000 = vadd.f32 %v985, %v995
          %v1001 = vadd.f32 %v986, %v997
          %v1002 = vstv %s988
          %v1003 = vmul.f32 %v1002, %v924
          %v1004 = vmul.f32 %v1002, %v925
          %1007 = vrot.lane.b32.xlu0 %v1003, 125
          %v1008 = vpop.permute.xlu0 %1007
          %1009 = vrot.lane.b32.xlu0 %v1004, 125
          %v1010 = vpop.permute.xlu0 %1009
          %v1013 = vadd.f32 %v1000, %v1008
          %v1014 = vadd.f32 %v1001, %v1010
          %s1015 = sld [smem:[#allocation6 + $0x12]]
          %s1016 = sld [smem:[#allocation6 + $0x43]]
          %v1017 = vstv %s1015
          %v1018 = vmul.f32 %v1017, %v917
          %v1019 = vmul.f32 %v1017, %v918
          %1022 = vrot.lane.b32.xlu0 %v1018, 124
          %v1023 = vpop.permute.xlu0 %1022
          %1024 = vrot.lane.b32.xlu0 %v1019, 124
          %v1025 = vpop.permute.xlu0 %1024
          %v1028 = vadd.f32 %v1013, %v1023
          %v1029 = vadd.f32 %v1014, %v1025
          %v1030 = vstv %s1016
          %v1031 = vmul.f32 %v1030, %v924
          %v1032 = vmul.f32 %v1030, %v925
          %1035 = vrot.lane.b32.xlu0 %v1031, 124
          %v1036 = vpop.permute.xlu0 %1035
          %1037 = vrot.lane.b32.xlu0 %v1032, 124
          %v1038 = vpop.permute.xlu0 %1037
          %v1041 = vadd.f32 %v1028, %v1036
          %v1042 = vadd.f32 %v1029, %v1038
          %s1043 = sld [smem:[#allocation6 + $0x13]]
          %s1044 = sld [smem:[#allocation6 + $0x44]]
          %v1045 = vstv %s1043
          %v1046 = vmul.f32 %v1045, %v917
          %v1047 = vmul.f32 %v1045, %v918
          %1050 = vrot.lane.b32.xlu0 %v1046, 123
          %v1051 = vpop.permute.xlu0 %1050
          %1052 = vrot.lane.b32.xlu0 %v1047, 123
          %v1053 = vpop.permute.xlu0 %1052
          %v1056 = vadd.f32 %v1041, %v1051
          %v1057 = vadd.f32 %v1042, %v1053
          %v1058 = vstv %s1044
          %v1059 = vmul.f32 %v1058, %v924
          %v1060 = vmul.f32 %v1058, %v925
          %1063 = vrot.lane.b32.xlu0 %v1059, 123
          %v1064 = vpop.permute.xlu0 %1063
          %1065 = vrot.lane.b32.xlu0 %v1060, 123
          %v1066 = vpop.permute.xlu0 %1065
          %v1069 = vadd.f32 %v1056, %v1064
          %v1070 = vadd.f32 %v1057, %v1066
          %s1071 = sld [smem:[#allocation6 + $0x14]]
          %s1072 = sld [smem:[#allocation6 + $0x45]]
          %v1073 = vstv %s1071
          %v1074 = vmul.f32 %v1073, %v917
          %v1075 = vmul.f32 %v1073, %v918
          %1078 = vrot.lane.b32.xlu0 %v1074, 122
          %v1079 = vpop.permute.xlu0 %1078
          %1080 = vrot.lane.b32.xlu0 %v1075, 122
          %v1081 = vpop.permute.xlu0 %1080
          %v1084 = vadd.f32 %v1069, %v1079
          %v1085 = vadd.f32 %v1070, %v1081
          %v1086 = vstv %s1072
          %v1087 = vmul.f32 %v1086, %v924
          %v1088 = vmul.f32 %v1086, %v925
          %1091 = vrot.lane.b32.xlu0 %v1087, 122
          %v1092 = vpop.permute.xlu0 %1091
          %1093 = vrot.lane.b32.xlu0 %v1088, 122
          %v1094 = vpop.permute.xlu0 %1093
          %v1097 = vadd.f32 %v1084, %v1092
          %v1098 = vadd.f32 %v1085, %v1094
          %s1099 = sld [smem:[#allocation6 + $0x15]]
          %s1100 = sld [smem:[#allocation6 + $0x46]]
          %v1101 = vld [vmem:[#allocation4 + $0x3] sm:$0xff]
          %v1102 = vld [vmem:[#allocation4 + $0xb] sm:$0xff]
          %v1103 = vstv %s1099
          %v1104 = vmul.f32 %v1103, %v1101
          %v1105 = vmul.f32 %v1103, %v1102
          %v1106 = vadd.f32 %v1097, %v1104
          %v1107 = vadd.f32 %v1098, %v1105
          %v1108 = vld [vmem:[#allocation5 + $0x3] sm:$0xff]
          %v1109 = vld [vmem:[#allocation5 + $0xb] sm:$0xff]
          %v1110 = vstv %s1100
          %v1111 = vmul.f32 %v1110, %v1108
          %v1112 = vmul.f32 %v1110, %v1109
          %v1113 = vadd.f32 %v1106, %v1111
          %v1114 = vadd.f32 %v1107, %v1112
          %s1115 = sld [smem:[#allocation6 + $0x16]]
          %s1116 = sld [smem:[#allocation6 + $0x47]]
          %v1117 = vstv %s1115
          %v1118 = vmul.f32 %v1117, %v1101
          %v1119 = vmul.f32 %v1117, %v1102
          %1122 = vrot.lane.b32.xlu0 %v1118, 127
          %v1123 = vpop.permute.xlu0 %1122
          %1124 = vrot.lane.b32.xlu0 %v1119, 127
          %v1125 = vpop.permute.xlu0 %1124
          %v1128 = vadd.f32 %v1113, %v1123
          %v1129 = vadd.f32 %v1114, %v1125
          %v1130 = vstv %s1116
          %v1131 = vmul.f32 %v1130, %v1108
          %v1132 = vmul.f32 %v1130, %v1109
          %1135 = vrot.lane.b32.xlu0 %v1131, 127
          %v1136 = vpop.permute.xlu0 %1135
          %1137 = vrot.lane.b32.xlu0 %v1132, 127
          %v1138 = vpop.permute.xlu0 %1137
          %v1141 = vadd.f32 %v1128, %v1136
          %v1142 = vadd.f32 %v1129, %v1138
          %s1143 = sld [smem:[#allocation6 + $0x17]]
          %s1144 = sld [smem:[#allocation6 + $0x48]]
          %v1145 = vstv %s1143
          %v1146 = vmul.f32 %v1145, %v1101
          %v1147 = vmul.f32 %v1145, %v1102
          %1150 = vrot.lane.b32.xlu0 %v1146, 126
          %v1151 = vpop.permute.xlu0 %1150
          %1152 = vrot.lane.b32.xlu0 %v1147, 126
          %v1153 = vpop.permute.xlu0 %1152
          %v1156 = vadd.f32 %v1141, %v1151
          %v1157 = vadd.f32 %v1142, %v1153
          %v1158 = vstv %s1144
          %v1159 = vmul.f32 %v1158, %v1108
          %v1160 = vmul.f32 %v1158, %v1109
          %1163 = vrot.lane.b32.xlu0 %v1159, 126
          %v1164 = vpop.permute.xlu0 %1163
          %1165 = vrot.lane.b32.xlu0 %v1160, 126
          %v1166 = vpop.permute.xlu0 %1165
          %v1169 = vadd.f32 %v1156, %v1164
          %v1170 = vadd.f32 %v1157, %v1166
          %s1171 = sld [smem:[#allocation6 + $0x18]]
          %s1172 = sld [smem:[#allocation6 + $0x49]]
          %v1173 = vstv %s1171
          %v1174 = vmul.f32 %v1173, %v1101
          %v1175 = vmul.f32 %v1173, %v1102
          %1178 = vrot.lane.b32.xlu0 %v1174, 125
          %v1179 = vpop.permute.xlu0 %1178
          %1180 = vrot.lane.b32.xlu0 %v1175, 125
          %v1181 = vpop.permute.xlu0 %1180
          %v1184 = vadd.f32 %v1169, %v1179
          %v1185 = vadd.f32 %v1170, %v1181
          %v1186 = vstv %s1172
          %v1187 = vmul.f32 %v1186, %v1108
          %v1188 = vmul.f32 %v1186, %v1109
          %1191 = vrot.lane.b32.xlu0 %v1187, 125
          %v1192 = vpop.permute.xlu0 %1191
          %1193 = vrot.lane.b32.xlu0 %v1188, 125
          %v1194 = vpop.permute.xlu0 %1193
          %v1197 = vadd.f32 %v1184, %v1192
          %v1198 = vadd.f32 %v1185, %v1194
          %s1199 = sld [smem:[#allocation6 + $0x19]]
          %s1200 = sld [smem:[#allocation6 + $0x4a]]
          %v1201 = vstv %s1199
          %v1202 = vmul.f32 %v1201, %v1101
          %v1203 = vmul.f32 %v1201, %v1102
          %1206 = vrot.lane.b32.xlu0 %v1202, 124
          %v1207 = vpop.permute.xlu0 %1206
          %1208 = vrot.lane.b32.xlu0 %v1203, 124
          %v1209 = vpop.permute.xlu0 %1208
          %v1212 = vadd.f32 %v1197, %v1207
          %v1213 = vadd.f32 %v1198, %v1209
          %v1214 = vstv %s1200
          %v1215 = vmul.f32 %v1214, %v1108
          %v1216 = vmul.f32 %v1214, %v1109
          %1219 = vrot.lane.b32.xlu0 %v1215, 124
          %v1220 = vpop.permute.xlu0 %1219
          %1221 = vrot.lane.b32.xlu0 %v1216, 124
          %v1222 = vpop.permute.xlu0 %1221
          %v1225 = vadd.f32 %v1212, %v1220
          %v1226 = vadd.f32 %v1213, %v1222
          %s1227 = sld [smem:[#allocation6 + $0x1a]]
          %s1228 = sld [smem:[#allocation6 + $0x4b]]
          %v1229 = vstv %s1227
          %v1230 = vmul.f32 %v1229, %v1101
          %v1231 = vmul.f32 %v1229, %v1102
          %1234 = vrot.lane.b32.xlu0 %v1230, 123
          %v1235 = vpop.permute.xlu0 %1234
          %1236 = vrot.lane.b32.xlu0 %v1231, 123
          %v1237 = vpop.permute.xlu0 %1236
          %v1240 = vadd.f32 %v1225, %v1235
          %v1241 = vadd.f32 %v1226, %v1237
          %v1242 = vstv %s1228
          %v1243 = vmul.f32 %v1242, %v1108
          %v1244 = vmul.f32 %v1242, %v1109
          %1247 = vrot.lane.b32.xlu0 %v1243, 123
          %v1248 = vpop.permute.xlu0 %1247
          %1249 = vrot.lane.b32.xlu0 %v1244, 123
          %v1250 = vpop.permute.xlu0 %1249
          %v1253 = vadd.f32 %v1240, %v1248
          %v1254 = vadd.f32 %v1241, %v1250
          %s1255 = sld [smem:[#allocation6 + $0x1b]]
          %s1256 = sld [smem:[#allocation6 + $0x4c]]
          %v1257 = vstv %s1255
          %v1258 = vmul.f32 %v1257, %v1101
          %v1259 = vmul.f32 %v1257, %v1102
          %1262 = vrot.lane.b32.xlu0 %v1258, 122
          %v1263 = vpop.permute.xlu0 %1262
          %1264 = vrot.lane.b32.xlu0 %v1259, 122
          %v1265 = vpop.permute.xlu0 %1264
          %v1268 = vadd.f32 %v1253, %v1263
          %v1269 = vadd.f32 %v1254, %v1265
          %v1270 = vstv %s1256
          %v1271 = vmul.f32 %v1270, %v1108
          %v1272 = vmul.f32 %v1270, %v1109
          %1275 = vrot.lane.b32.xlu0 %v1271, 122
          %v1276 = vpop.permute.xlu0 %1275
          %1277 = vrot.lane.b32.xlu0 %v1272, 122
          %v1278 = vpop.permute.xlu0 %1277
          %v1281 = vadd.f32 %v1268, %v1276
          %v1282 = vadd.f32 %v1269, %v1278
          %s1283 = sld [smem:[#allocation6 + $0x1c]]
          %s1284 = sld [smem:[#allocation6 + $0x4d]]
          %v1285 = vld [vmem:[#allocation4 + $0x4] sm:$0xff]
          %v1286 = vld [vmem:[#allocation4 + $0xc] sm:$0xff]
          %v1287 = vstv %s1283
          %v1288 = vmul.f32 %v1287, %v1285
          %v1289 = vmul.f32 %v1287, %v1286
          %v1290 = vadd.f32 %v1281, %v1288
          %v1291 = vadd.f32 %v1282, %v1289
          %v1292 = vld [vmem:[#allocation5 + $0x4] sm:$0xff]
          %v1293 = vld [vmem:[#allocation5 + $0xc] sm:$0xff]
          %v1294 = vstv %s1284
          %v1295 = vmul.f32 %v1294, %v1292
          %v1296 = vmul.f32 %v1294, %v1293
          %v1297 = vadd.f32 %v1290, %v1295
          %v1298 = vadd.f32 %v1291, %v1296
          %s1299 = sld [smem:[#allocation6 + $0x1d]]
          %s1300 = sld [smem:[#allocation6 + $0x4e]]
          %v1301 = vstv %s1299
          %v1302 = vmul.f32 %v1301, %v1285
          %v1303 = vmul.f32 %v1301, %v1286
          %1306 = vrot.lane.b32.xlu0 %v1302, 127
          %v1307 = vpop.permute.xlu0 %1306
          %1308 = vrot.lane.b32.xlu0 %v1303, 127
          %v1309 = vpop.permute.xlu0 %1308
          %v1312 = vadd.f32 %v1297, %v1307
          %v1313 = vadd.f32 %v1298, %v1309
          %v1314 = vstv %s1300
          %v1315 = vmul.f32 %v1314, %v1292
          %v1316 = vmul.f32 %v1314, %v1293
          %1319 = vrot.lane.b32.xlu0 %v1315, 127
          %v1320 = vpop.permute.xlu0 %1319
          %1321 = vrot.lane.b32.xlu0 %v1316, 127
          %v1322 = vpop.permute.xlu0 %1321
          %v1325 = vadd.f32 %v1312, %v1320
          %v1326 = vadd.f32 %v1313, %v1322
          %s1327 = sld [smem:[#allocation6 + $0x1e]]
          %s1328 = sld [smem:[#allocation6 + $0x4f]]
          %v1329 = vstv %s1327
          %v1330 = vmul.f32 %v1329, %v1285
          %v1331 = vmul.f32 %v1329, %v1286
          %1334 = vrot.lane.b32.xlu0 %v1330, 126
          %v1335 = vpop.permute.xlu0 %1334
          %1336 = vrot.lane.b32.xlu0 %v1331, 126
          %v1337 = vpop.permute.xlu0 %1336
          %v1340 = vadd.f32 %v1325, %v1335
          %v1341 = vadd.f32 %v1326, %v1337
          %v1342 = vstv %s1328
          %v1343 = vmul.f32 %v1342, %v1292
          %v1344 = vmul.f32 %v1342, %v1293
          %1347 = vrot.lane.b32.xlu0 %v1343, 126
          %v1348 = vpop.permute.xlu0 %1347
          %1349 = vrot.lane.b32.xlu0 %v1344, 126
          %v1350 = vpop.permute.xlu0 %1349
          %v1353 = vadd.f32 %v1340, %v1348
          %v1354 = vadd.f32 %v1341, %v1350
          %s1355 = sld [smem:[#allocation6 + $0x1f]]
          %s1356 = sld [smem:[#allocation6 + $0x50]]
          %v1357 = vstv %s1355
          %v1358 = vmul.f32 %v1357, %v1285
          %v1359 = vmul.f32 %v1357, %v1286
          %1362 = vrot.lane.b32.xlu0 %v1358, 125
          %v1363 = vpop.permute.xlu0 %1362
          %1364 = vrot.lane.b32.xlu0 %v1359, 125
          %v1365 = vpop.permute.xlu0 %1364
          %v1368 = vadd.f32 %v1353, %v1363
          %v1369 = vadd.f32 %v1354, %v1365
          %v1370 = vstv %s1356
          %v1371 = vmul.f32 %v1370, %v1292
          %v1372 = vmul.f32 %v1370, %v1293
          %1375 = vrot.lane.b32.xlu0 %v1371, 125
          %v1376 = vpop.permute.xlu0 %1375
          %1377 = vrot.lane.b32.xlu0 %v1372, 125
          %v1378 = vpop.permute.xlu0 %1377
          %v1381 = vadd.f32 %v1368, %v1376
          %v1382 = vadd.f32 %v1369, %v1378
          %s1383 = sld [smem:[#allocation6 + $0x20]]
          %s1384 = sld [smem:[#allocation6 + $0x51]]
          %v1385 = vstv %s1383
          %v1386 = vmul.f32 %v1385, %v1285
          %v1387 = vmul.f32 %v1385, %v1286
          %1390 = vrot.lane.b32.xlu0 %v1386, 124
          %v1391 = vpop.permute.xlu0 %1390
          %1392 = vrot.lane.b32.xlu0 %v1387, 124
          %v1393 = vpop.permute.xlu0 %1392
          %v1396 = vadd.f32 %v1381, %v1391
          %v1397 = vadd.f32 %v1382, %v1393
          %v1398 = vstv %s1384
          %v1399 = vmul.f32 %v1398, %v1292
          %v1400 = vmul.f32 %v1398, %v1293
          %1403 = vrot.lane.b32.xlu0 %v1399, 124
          %v1404 = vpop.permute.xlu0 %1403
          %1405 = vrot.lane.b32.xlu0 %v1400, 124
          %v1406 = vpop.permute.xlu0 %1405
          %v1409 = vadd.f32 %v1396, %v1404
          %v1410 = vadd.f32 %v1397, %v1406
          %s1411 = sld [smem:[#allocation6 + $0x21]]
          %s1412 = sld [smem:[#allocation6 + $0x52]]
          %v1413 = vstv %s1411
          %v1414 = vmul.f32 %v1413, %v1285
          %v1415 = vmul.f32 %v1413, %v1286
          %1418 = vrot.lane.b32.xlu0 %v1414, 123
          %v1419 = vpop.permute.xlu0 %1418
          %1420 = vrot.lane.b32.xlu0 %v1415, 123
          %v1421 = vpop.permute.xlu0 %1420
          %v1424 = vadd.f32 %v1409, %v1419
          %v1425 = vadd.f32 %v1410, %v1421
          %v1426 = vstv %s1412
          %v1427 = vmul.f32 %v1426, %v1292
          %v1428 = vmul.f32 %v1426, %v1293
          %1431 = vrot.lane.b32.xlu0 %v1427, 123
          %v1432 = vpop.permute.xlu0 %1431
          %1433 = vrot.lane.b32.xlu0 %v1428, 123
          %v1434 = vpop.permute.xlu0 %1433
          %v1437 = vadd.f32 %v1424, %v1432
          %v1438 = vadd.f32 %v1425, %v1434
          %s1439 = sld [smem:[#allocation6 + $0x22]]
          %s1440 = sld [smem:[#allocation6 + $0x53]]
          %v1441 = vstv %s1439
          %v1442 = vmul.f32 %v1441, %v1285
          %v1443 = vmul.f32 %v1441, %v1286
          %1446 = vrot.lane.b32.xlu0 %v1442, 122
          %v1447 = vpop.permute.xlu0 %1446
          %1448 = vrot.lane.b32.xlu0 %v1443, 122
          %v1449 = vpop.permute.xlu0 %1448
          %v1452 = vadd.f32 %v1437, %v1447
          %v1453 = vadd.f32 %v1438, %v1449
          %v1454 = vstv %s1440
          %v1455 = vmul.f32 %v1454, %v1292
          %v1456 = vmul.f32 %v1454, %v1293
          %1459 = vrot.lane.b32.xlu0 %v1455, 122
          %v1460 = vpop.permute.xlu0 %1459
          %1461 = vrot.lane.b32.xlu0 %v1456, 122
          %v1462 = vpop.permute.xlu0 %1461
          %v1465 = vadd.f32 %v1452, %v1460
          %v1466 = vadd.f32 %v1453, %v1462
          %s1467 = sld [smem:[#allocation6 + $0x23]]
          %s1468 = sld [smem:[#allocation6 + $0x54]]
          %v1469 = vld [vmem:[#allocation4 + $0x5] sm:$0xff]
          %v1470 = vld [vmem:[#allocation4 + $0xd] sm:$0xff]
          %v1471 = vstv %s1467
          %v1472 = vmul.f32 %v1471, %v1469
          %v1473 = vmul.f32 %v1471, %v1470
          %v1474 = vadd.f32 %v1465, %v1472
          %v1475 = vadd.f32 %v1466, %v1473
          %v1476 = vld [vmem:[#allocation5 + $0x5] sm:$0xff]
          %v1477 = vld [vmem:[#allocation5 + $0xd] sm:$0xff]
          %v1478 = vstv %s1468
          %v1479 = vmul.f32 %v1478, %v1476
          %v1480 = vmul.f32 %v1478, %v1477
          %v1481 = vadd.f32 %v1474, %v1479
          %v1482 = vadd.f32 %v1475, %v1480
          %s1483 = sld [smem:[#allocation6 + $0x24]]
          %s1484 = sld [smem:[#allocation6 + $0x55]]
          %v1485 = vstv %s1483
          %v1486 = vmul.f32 %v1485, %v1469
          %v1487 = vmul.f32 %v1485, %v1470
          %1490 = vrot.lane.b32.xlu0 %v1486, 127
          %v1491 = vpop.permute.xlu0 %1490
          %1492 = vrot.lane.b32.xlu0 %v1487, 127
          %v1493 = vpop.permute.xlu0 %1492
          %v1496 = vadd.f32 %v1481, %v1491
          %v1497 = vadd.f32 %v1482, %v1493
          %v1498 = vstv %s1484
          %v1499 = vmul.f32 %v1498, %v1476
          %v1500 = vmul.f32 %v1498, %v1477
          %1503 = vrot.lane.b32.xlu0 %v1499, 127
          %v1504 = vpop.permute.xlu0 %1503
          %1505 = vrot.lane.b32.xlu0 %v1500, 127
          %v1506 = vpop.permute.xlu0 %1505
          %v1509 = vadd.f32 %v1496, %v1504
          %v1510 = vadd.f32 %v1497, %v1506
          %s1511 = sld [smem:[#allocation6 + $0x25]]
          %s1512 = sld [smem:[#allocation6 + $0x56]]
          %v1513 = vstv %s1511
          %v1514 = vmul.f32 %v1513, %v1469
          %v1515 = vmul.f32 %v1513, %v1470
          %1518 = vrot.lane.b32.xlu0 %v1514, 126
          %v1519 = vpop.permute.xlu0 %1518
          %1520 = vrot.lane.b32.xlu0 %v1515, 126
          %v1521 = vpop.permute.xlu0 %1520
          %v1524 = vadd.f32 %v1509, %v1519
          %v1525 = vadd.f32 %v1510, %v1521
          %v1526 = vstv %s1512
          %v1527 = vmul.f32 %v1526, %v1476
          %v1528 = vmul.f32 %v1526, %v1477
          %1531 = vrot.lane.b32.xlu0 %v1527, 126
          %v1532 = vpop.permute.xlu0 %1531
          %1533 = vrot.lane.b32.xlu0 %v1528, 126
          %v1534 = vpop.permute.xlu0 %1533
          %v1537 = vadd.f32 %v1524, %v1532
          %v1538 = vadd.f32 %v1525, %v1534
          %s1539 = sld [smem:[#allocation6 + $0x26]]
          %s1540 = sld [smem:[#allocation6 + $0x57]]
          %v1541 = vstv %s1539
          %v1542 = vmul.f32 %v1541, %v1469
          %v1543 = vmul.f32 %v1541, %v1470
          %1546 = vrot.lane.b32.xlu0 %v1542, 125
          %v1547 = vpop.permute.xlu0 %1546
          %1548 = vrot.lane.b32.xlu0 %v1543, 125
          %v1549 = vpop.permute.xlu0 %1548
          %v1552 = vadd.f32 %v1537, %v1547
          %v1553 = vadd.f32 %v1538, %v1549
          %v1554 = vstv %s1540
          %v1555 = vmul.f32 %v1554, %v1476
          %v1556 = vmul.f32 %v1554, %v1477
          %1559 = vrot.lane.b32.xlu0 %v1555, 125
          %v1560 = vpop.permute.xlu0 %1559
          %1561 = vrot.lane.b32.xlu0 %v1556, 125
          %v1562 = vpop.permute.xlu0 %1561
          %v1565 = vadd.f32 %v1552, %v1560
          %v1566 = vadd.f32 %v1553, %v1562
          %s1567 = sld [smem:[#allocation6 + $0x27]]
          %s1568 = sld [smem:[#allocation6 + $0x58]]
          %v1569 = vstv %s1567
          %v1570 = vmul.f32 %v1569, %v1469
          %v1571 = vmul.f32 %v1569, %v1470
          %1574 = vrot.lane.b32.xlu0 %v1570, 124
          %v1575 = vpop.permute.xlu0 %1574
          %1576 = vrot.lane.b32.xlu0 %v1571, 124
          %v1577 = vpop.permute.xlu0 %1576
          %v1580 = vadd.f32 %v1565, %v1575
          %v1581 = vadd.f32 %v1566, %v1577
          %v1582 = vstv %s1568
          %v1583 = vmul.f32 %v1582, %v1476
          %v1584 = vmul.f32 %v1582, %v1477
          %1587 = vrot.lane.b32.xlu0 %v1583, 124
          %v1588 = vpop.permute.xlu0 %1587
          %1589 = vrot.lane.b32.xlu0 %v1584, 124
          %v1590 = vpop.permute.xlu0 %1589
          %v1593 = vadd.f32 %v1580, %v1588
          %v1594 = vadd.f32 %v1581, %v1590
          %s1595 = sld [smem:[#allocation6 + $0x28]]
          %s1596 = sld [smem:[#allocation6 + $0x59]]
          %v1597 = vstv %s1595
          %v1598 = vmul.f32 %v1597, %v1469
          %v1599 = vmul.f32 %v1597, %v1470
          %1602 = vrot.lane.b32.xlu0 %v1598, 123
          %v1603 = vpop.permute.xlu0 %1602
          %1604 = vrot.lane.b32.xlu0 %v1599, 123
          %v1605 = vpop.permute.xlu0 %1604
          %v1608 = vadd.f32 %v1593, %v1603
          %v1609 = vadd.f32 %v1594, %v1605
          %v1610 = vstv %s1596
          %v1611 = vmul.f32 %v1610, %v1476
          %v1612 = vmul.f32 %v1610, %v1477
          %1615 = vrot.lane.b32.xlu0 %v1611, 123
          %v1616 = vpop.permute.xlu0 %1615
          %1617 = vrot.lane.b32.xlu0 %v1612, 123
          %v1618 = vpop.permute.xlu0 %1617
          %v1621 = vadd.f32 %v1608, %v1616
          %v1622 = vadd.f32 %v1609, %v1618
          %s1623 = sld [smem:[#allocation6 + $0x29]]
          %s1624 = sld [smem:[#allocation6 + $0x5a]]
          %v1625 = vstv %s1623
          %v1626 = vmul.f32 %v1625, %v1469
          %v1627 = vmul.f32 %v1625, %v1470
          %1630 = vrot.lane.b32.xlu0 %v1626, 122
          %v1631 = vpop.permute.xlu0 %1630
          %1632 = vrot.lane.b32.xlu0 %v1627, 122
          %v1633 = vpop.permute.xlu0 %1632
          %v1636 = vadd.f32 %v1621, %v1631
          %v1637 = vadd.f32 %v1622, %v1633
          %v1638 = vstv %s1624
          %v1639 = vmul.f32 %v1638, %v1476
          %v1640 = vmul.f32 %v1638, %v1477
          %1643 = vrot.lane.b32.xlu0 %v1639, 122
          %v1644 = vpop.permute.xlu0 %1643
          %1645 = vrot.lane.b32.xlu0 %v1640, 122
          %v1646 = vpop.permute.xlu0 %1645
          %v1649 = vadd.f32 %v1636, %v1644
          %v1650 = vadd.f32 %v1637, %v1646
          %s1651 = sld [smem:[#allocation6 + $0x2a]]
          %s1652 = sld [smem:[#allocation6 + $0x5b]]
          %v1653 = vld [vmem:[#allocation4 + $0x6] sm:$0xff]
          %v1654 = vld [vmem:[#allocation4 + $0xe] sm:$0xff]
          %v1655 = vstv %s1651
          %v1656 = vmul.f32 %v1655, %v1653
          %v1657 = vmul.f32 %v1655, %v1654
          %v1658 = vadd.f32 %v1649, %v1656
          %v1659 = vadd.f32 %v1650, %v1657
          %v1660 = vld [vmem:[#allocation5 + $0x6] sm:$0xff]
          %v1661 = vld [vmem:[#allocation5 + $0xe] sm:$0xff]
          %v1662 = vstv %s1652
          %v1663 = vmul.f32 %v1662, %v1660
          %v1664 = vmul.f32 %v1662, %v1661
          %v1665 = vadd.f32 %v1658, %v1663
          %v1666 = vadd.f32 %v1659, %v1664
          %s1667 = sld [smem:[#allocation6 + $0x2b]]
          %s1668 = sld [smem:[#allocation6 + $0x5c]]
          %v1669 = vstv %s1667
          %v1670 = vmul.f32 %v1669, %v1653
          %v1671 = vmul.f32 %v1669, %v1654
          %1674 = vrot.lane.b32.xlu0 %v1670, 127
          %v1675 = vpop.permute.xlu0 %1674
          %1676 = vrot.lane.b32.xlu0 %v1671, 127
          %v1677 = vpop.permute.xlu0 %1676
          %v1680 = vadd.f32 %v1665, %v1675
          %v1681 = vadd.f32 %v1666, %v1677
          %v1682 = vstv %s1668
          %v1683 = vmul.f32 %v1682, %v1660
          %v1684 = vmul.f32 %v1682, %v1661
          %1687 = vrot.lane.b32.xlu0 %v1683, 127
          %v1688 = vpop.permute.xlu0 %1687
          %1689 = vrot.lane.b32.xlu0 %v1684, 127
          %v1690 = vpop.permute.xlu0 %1689
          %v1693 = vadd.f32 %v1680, %v1688
          %v1694 = vadd.f32 %v1681, %v1690
          %s1695 = sld [smem:[#allocation6 + $0x2c]]
          %s1696 = sld [smem:[#allocation6 + $0x5d]]
          %v1697 = vstv %s1695
          %v1698 = vmul.f32 %v1697, %v1653
          %v1699 = vmul.f32 %v1697, %v1654
          %1702 = vrot.lane.b32.xlu0 %v1698, 126
          %v1703 = vpop.permute.xlu0 %1702
          %1704 = vrot.lane.b32.xlu0 %v1699, 126
          %v1705 = vpop.permute.xlu0 %1704
          %v1708 = vadd.f32 %v1693, %v1703
          %v1709 = vadd.f32 %v1694, %v1705
          %v1710 = vstv %s1696
          %v1711 = vmul.f32 %v1710, %v1660
          %v1712 = vmul.f32 %v1710, %v1661
          %1715 = vrot.lane.b32.xlu0 %v1711, 126
          %v1716 = vpop.permute.xlu0 %1715
          %1717 = vrot.lane.b32.xlu0 %v1712, 126
          %v1718 = vpop.permute.xlu0 %1717
          %v1721 = vadd.f32 %v1708, %v1716
          %v1722 = vadd.f32 %v1709, %v1718
          %s1723 = sld [smem:[#allocation6 + $0x2d]]
          %s1724 = sld [smem:[#allocation6 + $0x5e]]
          %v1725 = vstv %s1723
          %v1726 = vmul.f32 %v1725, %v1653
          %v1727 = vmul.f32 %v1725, %v1654
          %1730 = vrot.lane.b32.xlu0 %v1726, 125
          %v1731 = vpop.permute.xlu0 %1730
          %1732 = vrot.lane.b32.xlu0 %v1727, 125
          %v1733 = vpop.permute.xlu0 %1732
          %v1736 = vadd.f32 %v1721, %v1731
          %v1737 = vadd.f32 %v1722, %v1733
          %v1738 = vstv %s1724
          %v1739 = vmul.f32 %v1738, %v1660
          %v1740 = vmul.f32 %v1738, %v1661
          %1743 = vrot.lane.b32.xlu0 %v1739, 125
          %v1744 = vpop.permute.xlu0 %1743
          %1745 = vrot.lane.b32.xlu0 %v1740, 125
          %v1746 = vpop.permute.xlu0 %1745
          %v1749 = vadd.f32 %v1736, %v1744
          %v1750 = vadd.f32 %v1737, %v1746
          %s1751 = sld [smem:[#allocation6 + $0x2e]]
          %s1752 = sld [smem:[#allocation6 + $0x5f]]
          %v1753 = vstv %s1751
          %v1754 = vmul.f32 %v1753, %v1653
          %v1755 = vmul.f32 %v1753, %v1654
          %1758 = vrot.lane.b32.xlu0 %v1754, 124
          %v1759 = vpop.permute.xlu0 %1758
          %1760 = vrot.lane.b32.xlu0 %v1755, 124
          %v1761 = vpop.permute.xlu0 %1760
          %v1764 = vadd.f32 %v1749, %v1759
          %v1765 = vadd.f32 %v1750, %v1761
          %v1766 = vstv %s1752
          %v1767 = vmul.f32 %v1766, %v1660
          %v1768 = vmul.f32 %v1766, %v1661
          %1771 = vrot.lane.b32.xlu0 %v1767, 124
          %v1772 = vpop.permute.xlu0 %1771
          %1773 = vrot.lane.b32.xlu0 %v1768, 124
          %v1774 = vpop.permute.xlu0 %1773
          %v1777 = vadd.f32 %v1764, %v1772
          %v1778 = vadd.f32 %v1765, %v1774
          %s1779 = sld [smem:[#allocation6 + $0x2f]]
          %s1780 = sld [smem:[#allocation6 + $0x60]]
          %v1781 = vstv %s1779
          %v1782 = vmul.f32 %v1781, %v1653
          %v1783 = vmul.f32 %v1781, %v1654
          %1786 = vrot.lane.b32.xlu0 %v1782, 123
          %v1787 = vpop.permute.xlu0 %1786
          %1788 = vrot.lane.b32.xlu0 %v1783, 123
          %v1789 = vpop.permute.xlu0 %1788
          %v1792 = vadd.f32 %v1777, %v1787
          %v1793 = vadd.f32 %v1778, %v1789
          %v1794 = vstv %s1780
          %v1795 = vmul.f32 %v1794, %v1660
          %v1796 = vmul.f32 %v1794, %v1661
          %1799 = vrot.lane.b32.xlu0 %v1795, 123
          %v1800 = vpop.permute.xlu0 %1799
          %1801 = vrot.lane.b32.xlu0 %v1796, 123
          %v1802 = vpop.permute.xlu0 %1801
          %v1805 = vadd.f32 %v1792, %v1800
          %v1806 = vadd.f32 %v1793, %v1802
          %s1807 = sld [smem:[#allocation6 + $0x30]]
          %s1808 = sld [smem:[#allocation6 + $0x61]]
          %v1809 = vstv %s1807
          %v1810 = vmul.f32 %v1809, %v1653
          %v1811 = vmul.f32 %v1809, %v1654
          %1814 = vrot.lane.b32.xlu0 %v1810, 122
          %v1815 = vpop.permute.xlu0 %1814
          %1816 = vrot.lane.b32.xlu0 %v1811, 122
          %v1817 = vpop.permute.xlu0 %1816
          %v1820 = vadd.f32 %v1805, %v1815
          %v1821 = vadd.f32 %v1806, %v1817
          %v1822 = vstv %s1808
          %v1823 = vmul.f32 %v1822, %v1660
          %v1824 = vmul.f32 %v1822, %v1661
          %1827 = vrot.lane.b32.xlu0 %v1823, 122
          %v1828 = vpop.permute.xlu0 %1827
          %1829 = vrot.lane.b32.xlu0 %v1824, 122
          %v1830 = vpop.permute.xlu0 %1829
          %v1833 = vadd.f32 %v1820, %v1828
          %v1834 = vadd.f32 %v1821, %v1830
          %v1835 = vxor.u32 %v1833, 2147483648
          %v1836 = vxor.u32 %v1834, 2147483648
          %v1837 = vmul.f32 %v1835, 1.442695
          %v1838 = vpow.pop %v1837
          %v1839 = vmul.f32 %v1836, 1.442695
          %v1840 = vpow.pop %v1839
          %v1841 = vadd.f32 %v1838, 1.0
          %v1842 = vadd.f32 %v1840, 1.0
          %v1843 = vrcp.pop %v1841
          %v1844 = vmul.f32 1.0, %v1843
          %v1845 = vrcp.pop %v1842
          %v1846 = vmul.f32 1.0, %v1845
          %v1847 = vlaneseq
          %vm1848 = vcmp.ge.s32.totalorder %v1847, 0
          %vm1849 = vcmp.lt.s32.totalorder %v1847, 16
          %vm1850 = vmand %vm1848, %vm1849
          %1851 = vst.msk [vmem:[%s187] sm:$0x1] %vm1850, %v1844
          %v1854 = vunpack.c.l.s4 1966171168
          %v1855 = vunpack.c.0.s8 %v1854
          %v1856 = vlaneseq
          %v1857 = vshrl.u32 %v1856, 7
          %v1858 = vsub.s32 %v1855, %v1857
          %v1859 = vrot.slane %v1844, %v1858
          %v1860 = vcombine.high %v1859, %v1859
          %v1862 = vunpack.c.l.s4 1966171168
          %v1863 = vunpack.c.0.s8 %v1862
          %v1864 = vlaneseq
          %v1865 = vshrl.u32 %v1864, 7
          %v1866 = vsub.s32 %v1863, %v1865
          %v1867 = vrot.slane %v1859, %v1866
          %v1869 = vunpack.c.l.s4 1966171168
          %v1870 = vunpack.c.0.s8 %v1869
          %v1871 = vlaneseq
          %v1872 = vshrl.u32 %v1871, 7
          %v1873 = vsub.s32 %v1870, %v1872
          %v1874 = vrot.slane %v1860, %v1873
          %1875 = vrot.lane.b32.xlu0 %v1874, 16
          %v1876 = vpop.permute.xlu0 %1875
          %vm1878 = vcmp.ge.s32.totalorder %v1847, 16
          %vm1879 = vcmp.lt.s32.totalorder %v1847, 32
          %vm1880 = vmand %vm1878, %vm1879
          %1881 = vst.msk [vmem:[%s187] sm:$0x1] %vm1880, %v1876
          %v1882 = vcombine.high %v1867, %v1867
          %1883 = vrot.lane.b32.xlu0 %v1882, 32
          %v1884 = vpop.permute.xlu0 %1883
          %vm1886 = vcmp.ge.s32.totalorder %v1847, 32
          %vm1887 = vcmp.lt.s32.totalorder %v1847, 48
          %vm1888 = vmand %vm1886, %vm1887
          %1889 = vst.msk [vmem:[%s187] sm:$0x1] %vm1888, %v1884
          %v1890 = vcombine.high %v1874, %v1874
          %1891 = vrot.lane.b32.xlu0 %v1890, 48
          %v1892 = vpop.permute.xlu0 %1891
          %vm1894 = vcmp.ge.s32.totalorder %v1847, 48
          %vm1895 = vcmp.lt.s32.totalorder %v1847, 64
          %vm1896 = vmand %vm1894, %vm1895
          %1897 = vst.msk [vmem:[%s187] sm:$0x1] %vm1896, %v1892
          %v1898 = vcombine.high %v1844, %v1844
          %v1900 = vunpack.c.l.s4 1966171168
          %v1901 = vunpack.c.0.s8 %v1900
          %v1902 = vlaneseq
          %v1903 = vshrl.u32 %v1902, 7
          %v1904 = vsub.s32 %v1901, %v1903
          %v1905 = vrot.slane %v1898, %v1904
          %v1907 = vunpack.c.l.s4 1966171168
          %v1908 = vunpack.c.0.s8 %v1907
          %v1909 = vlaneseq
          %v1910 = vshrl.u32 %v1909, 7
          %v1911 = vsub.s32 %v1908, %v1910
          %v1912 = vrot.slane %v1905, %v1911
          %1913 = vrot.lane.b32.xlu0 %v1912, 64
          %v1914 = vpop.permute.xlu0 %1913
          %vm1916 = vcmp.ge.s32.totalorder %v1847, 64
          %vm1917 = vcmp.lt.s32.totalorder %v1847, 80
          %vm1918 = vmand %vm1916, %vm1917
          %1919 = vst.msk [vmem:[%s187] sm:$0x1] %vm1918, %v1914
          %v1920 = vcombine.high %v1905, %v1905
          %v1922 = vunpack.c.l.s4 1966171168
          %v1923 = vunpack.c.0.s8 %v1922
          %v1924 = vlaneseq
          %v1925 = vshrl.u32 %v1924, 7
          %v1926 = vsub.s32 %v1923, %v1925
          %v1927 = vrot.slane %v1920, %v1926
          %1928 = vrot.lane.b32.xlu0 %v1927, 80
          %v1929 = vpop.permute.xlu0 %1928
          %vm1931 = vcmp.ge.s32.totalorder %v1847, 80
          %vm1932 = vcmp.lt.s32.totalorder %v1847, 96
          %vm1933 = vmand %vm1931, %vm1932
          %1934 = vst.msk [vmem:[%s187] sm:$0x1] %vm1933, %v1929
          %v1935 = vcombine.high %v1912, %v1912
          %1936 = vrot.lane.b32.xlu0 %v1935, 96
          %v1937 = vpop.permute.xlu0 %1936
          %vm1939 = vcmp.ge.s32.totalorder %v1847, 96
          %vm1940 = vcmp.lt.s32.totalorder %v1847, 112
          %vm1941 = vmand %vm1939, %vm1940
          %1942 = vst.msk [vmem:[%s187] sm:$0x1] %vm1941, %v1937
          %v1943 = vcombine.high %v1927, %v1927
          %1944 = vrot.lane.b32.xlu0 %v1943, 112
          %v1945 = vpop.permute.xlu0 %1944
          %vm1947 = vcmp.ge.s32.totalorder %v1847, 112
          %vm1948 = vcmp.lt.s32.totalorder %v1847, 128
          %vm1949 = vmand %vm1947, %vm1948
          %1950 = vst.msk [vmem:[%s187] sm:$0x1] %vm1949, %v1945
          %1951 = vst.msk [vmem:[%s187 + $0x1] sm:$0x1] %vm1850, %v1846
          %v1954 = vunpack.c.l.s4 1966171168
          %v1955 = vunpack.c.0.s8 %v1954
          %v1956 = vlaneseq
          %v1957 = vshrl.u32 %v1956, 7
          %v1958 = vsub.s32 %v1955, %v1957
          %v1959 = vrot.slane %v1846, %v1958
          %v1960 = vcombine.high %v1959, %v1959
          %v1962 = vunpack.c.l.s4 1966171168
          %v1963 = vunpack.c.0.s8 %v1962
          %v1964 = vlaneseq
          %v1965 = vshrl.u32 %v1964, 7
          %v1966 = vsub.s32 %v1963, %v1965
          %v1967 = vrot.slane %v1959, %v1966
          %v1969 = vunpack.c.l.s4 1966171168
          %v1970 = vunpack.c.0.s8 %v1969
          %v1971 = vlaneseq
          %v1972 = vshrl.u32 %v1971, 7
          %v1973 = vsub.s32 %v1970, %v1972
          %v1974 = vrot.slane %v1960, %v1973
          %1975 = vrot.lane.b32.xlu0 %v1974, 16
          %v1976 = vpop.permute.xlu0 %1975
          %1978 = vst.msk [vmem:[%s187 + $0x1] sm:$0x1] %vm1880, %v1976
          %v1979 = vcombine.high %v1967, %v1967
          %1980 = vrot.lane.b32.xlu0 %v1979, 32
          %v1981 = vpop.permute.xlu0 %1980
          %1983 = vst.msk [vmem:[%s187 + $0x1] sm:$0x1] %vm1888, %v1981
          %v1984 = vcombine.high %v1974, %v1974
          %1985 = vrot.lane.b32.xlu0 %v1984, 48
          %v1986 = vpop.permute.xlu0 %1985
          %1988 = vst.msk [vmem:[%s187 + $0x1] sm:$0x1] %vm1896, %v1986
          %v1989 = vcombine.high %v1846, %v1846
          %v1991 = vunpack.c.l.s4 1966171168
          %v1992 = vunpack.c.0.s8 %v1991
          %v1993 = vlaneseq
          %v1994 = vshrl.u32 %v1993, 7
          %v1995 = vsub.s32 %v1992, %v1994
          %v1996 = vrot.slane %v1989, %v1995
          %v1998 = vunpack.c.l.s4 1966171168
          %v1999 = vunpack.c.0.s8 %v1998
          %v2000 = vlaneseq
          %v2001 = vshrl.u32 %v2000, 7
          %v2002 = vsub.s32 %v1999, %v2001
          %v2003 = vrot.slane %v1996, %v2002
          %2004 = vrot.lane.b32.xlu0 %v2003, 64
          %v2005 = vpop.permute.xlu0 %2004
          %2007 = vst.msk [vmem:[%s187 + $0x1] sm:$0x1] %vm1918, %v2005
          %v2008 = vcombine.high %v1996, %v1996
          %v2010 = vunpack.c.l.s4 1966171168
          %v2011 = vunpack.c.0.s8 %v2010
          %v2012 = vlaneseq
          %v2013 = vshrl.u32 %v2012, 7
          %v2014 = vsub.s32 %v2011, %v2013
          %v2015 = vrot.slane %v2008, %v2014
          %2016 = vrot.lane.b32.xlu0 %v2015, 80
          %v2017 = vpop.permute.xlu0 %2016
          %2019 = vst.msk [vmem:[%s187 + $0x1] sm:$0x1] %vm1933, %v2017
          %v2020 = vcombine.high %v2003, %v2003
          %2021 = vrot.lane.b32.xlu0 %v2020, 96
          %v2022 = vpop.permute.xlu0 %2021
          %2024 = vst.msk [vmem:[%s187 + $0x1] sm:$0x1] %vm1941, %v2022
          %v2025 = vcombine.high %v2015, %v2015
          %2026 = vrot.lane.b32.xlu0 %v2025, 112
          %v2027 = vpop.permute.xlu0 %2026
          %2029 = vst.msk [vmem:[%s187 + $0x1] sm:$0x1] %vm1949, %v2027
        $region48: #{tpu_custom_call.1} parent=27 // pred_fallthru
          _
        %s2030 = sand.u32 %s89, 1
        %s2031 = scalar_lea.sflag [#allocation8], %s2030
        %s2032 = sand.u32 %s89, 1
        %s2033 = smul.addr %s2032, 2
        %s2034 = scalar_lea.vmem [#allocation11], %s2033
        // Predicated region
        $region49: #{tpu_custom_call.1} parent=27 // pred_check
          %p2035 = pneg %p99
        $region50: #{tpu_custom_call.1} parent=27 // pred_check_branch
          %2037 = sbr.rel (%p2035) target = $region52
        $region51: #{tpu_custom_call.1} parent=27 // pred_region
          %s2039 = ssub.s32 32, 32
          %2040 = vsyncadd %s2031, %s2039
          %s2041 = smul.addr %s24, 2
          %s2042 = smul.addr %s2041, 16
          %s2043 = scalar_lea.hbm %s2, %s2042
          %s2045 = sshll.u32 %s2034, 4
          %s2046 = int_to_ptr.vmem [resolvable:$true] %s2045
          %2048 = dma.vmem_to_hbm [thread:$0]  %s2046, 32, %s2043, %s2031
        $region52: #{tpu_custom_call.1} parent=27 // pred_fallthru
          _
      $region28: #{tpu_custom_call.1} parent=5 // pred_fallthru
        _
      %p2049 = scmp.le.s32.totalorder 2, %s15
      // Predicated region
      $region53: #{tpu_custom_call.1} parent=5 // pred_check
        %p2050 = pneg %p2049
      $region54: #{tpu_custom_call.1} parent=5 // pred_check_branch
        %2052 = sbr.rel (%p2050) target = $region56
      $region55: #{tpu_custom_call.1} parent=5 // pred_region
        %s2053 = ssub.s32 %s15, 2
        // Predicated region
        $region57: #{tpu_custom_call.1} parent=55 // pred_check
          %p2054 = pneg %p105
        $region58: #{tpu_custom_call.1} parent=55 // pred_check_branch
          %2056 = sbr.rel (%p2054) target = $region60
        $region59: #{tpu_custom_call.1} parent=55 // pred_region
          %s2057 = sand.u32 %s90, 1
          %s2058 = scalar_lea.sflag [#allocation8], %s2057
          %s2059 = sand.u32 %s90, 1
          %s2060 = smul.addr %s2059, 2
          %s2061 = scalar_lea.vmem [#allocation11], %s2060
          %2062 = dma.done %s2058, 32
        $region60: #{tpu_custom_call.1} parent=55 // pred_fallthru
          _
      $region56: #{tpu_custom_call.1} parent=5 // pred_fallthru
        _
    $region6: #{tpu_custom_call.1} parent=1 // loop_footer
      %s19 = sadd.s32 1, %s15
    $region7: #{tpu_custom_call.1} parent=1 // loop_footer_branch
      %14 = sbr.rel target = $region3
    $region8: #{tpu_custom_call.1} parent=1 // loop_exit
      _
    %2063 = vsyncpa [#allocation7], 1
    %s2064 = scalar_lea.sflag [#allocation7], 1
    %2065 = vsyncpa %s2064, 1
    %2066 = vsyncpa [#allocation8], 1
    %s2067 = scalar_lea.sflag [#allocation8], 1
    %2068 = vsyncpa %s2067, 1
    %2069 = vsyncpa [#allocation9], 1
    %s2070 = scalar_lea.sflag [#allocation9], 1
    %2071 = vsyncpa %s2070, 1

</llo_original>
